<compile_context>
chip_gen: v7x
topology: tpu7x:2x2x1
jax: 0.10.0
libtpu: 0.0.40
codegen_flags: <defaults>
</compile_context>

<pallas_src>
import functools

import jax
import jax.numpy as jnp
import numpy as np
from jax.experimental import pallas as pl
from jax.experimental.pallas import tpu as pltpu


def _multibox_loss3_kernel(conf_ref, labels_ref, labels_mid_ref, labels_low_ref,
                           pred_ref, gt_ref,
                           sl1_ref, cls_ref, pos_ref, cnt_ref,
                           *, neg_pos_ratio_mid, neg_pos_ratio_low, tj):
    """One batch row per grid step.

    Layouts (priors lane-dense):
      conf_ref : (1, C, P)   classes on sublanes, priors on lanes
      labels_* : (1, 1, P)   int32
      pred/gt  : (1, 4, P)   box coords on sublanes, priors on lanes
      outputs  : (1, 1, 128) f32 per-batch-row partial sums (scalar splat over lanes)
    """
    conf = conf_ref[0].astype(jnp.float32)        # (C, P)
    labels = labels_ref[0]                        # (1, P) int32
    labels_mid = labels_mid_ref[0]                # (1, P) int32
    labels_low = labels_low_ref[0]                # (1, P) int32
    pred = pred_ref[0].astype(jnp.float32)        # (4, P)
    gt = gt_ref[0].astype(jnp.float32)            # (4, P)

    C, P = conf.shape

    # ---- log-softmax over classes (sublane axis); background loss = -log_softmax[..., 0] ----
    m = jnp.max(conf, axis=0, keepdims=True)                                   # (1, P)
    lse = m + jnp.log(jnp.sum(jnp.exp(conf - m), axis=0, keepdims=True))       # (1, P)
    bg_loss = lse - conf[0:1, :]                                               # (1, P)

    pos_mask = labels > 0                                                      # (1, P)
    n_mid = jnp.sum((labels_mid > 0).astype(jnp.float32))
    n_low = jnp.sum((labels_low > 0).astype(jnp.float32))
    num_neg = n_mid * neg_pos_ratio_mid + n_low * neg_pos_ratio_low            # scalar (exact int)

    neg_loss = jnp.where(pos_mask, -jnp.inf, bg_loss)                          # (1, P)

    # ---- hard-negative-mining rank, tiled over j-blocks of size `tj` ----
    # rank[i] = #{ j : nl[j] > nl[i]  or  (nl[j] == nl[i] and j < i) }
    #         = position of prior i in a stable descending sort of neg_loss.
    # Only (tj, P) intermediates are live at a time; rank accumulates as (1, P) f32.
    n_blocks = -(-P // tj)

    lane_i = jax.lax.broadcasted_iota(jnp.int32, (tj, P), 1)   # i (lane index), hoisted
    sub_t = jax.lax.broadcasted_iota(jnp.int32, (tj, P), 0)    # t (sublane index), hoisted
    d = lane_i - sub_t                                         # d[t, i] = i - t, hoisted

    def rank_block(jb, rank):
        joff = jb * tj                                         # global j of sublane row 0
        # Extract this block's j-values as a column (tj, 1) without a transpose:
        # one-hot select (d == joff  <=>  i == joff + t) then a lane reduce.
        # TODO(synk): an MXU one-hot dot (or an in-kernel (1,P)->(P,1) transpose) would make
        #             this extraction ~free; kept as select+reduce for guaranteed lowering.
        lj = jnp.sum(jnp.where(d == joff, neg_loss, 0.0), axis=1, keepdims=True)   # (tj, 1)
        # greater(j, i) with stable index tie-break (j < i  <=>  d > joff)
        g = (lj > neg_loss) | ((lj == neg_loss) & (d > joff))                      # (tj, P)
        if P % tj != 0:                                        # ragged tail block: mask j >= P
            g = g & (sub_t < P - joff)
        return rank + jnp.sum(g.astype(jnp.float32), axis=0, keepdims=True)        # (1, P)

    rank = jax.lax.fori_loop(0, n_blocks, rank_block,
                             jnp.zeros((1, P), jnp.float32),
                             unroll=bool(n_blocks <= 8))

    neg_mask = rank < num_neg
    mask = pos_mask | neg_mask                                                 # (1, P)

    # ---- classification loss: sum of cross-entropy over masked priors ----
    cls_iota = jax.lax.broadcasted_iota(jnp.int32, (C, P), 0)
    conf_true = jnp.sum(jnp.where(cls_iota == labels, conf, 0.0),
                        axis=0, keepdims=True)                                 # (1, P)
    ce = lse - conf_true                                                       # -log_softmax[true]
    cls_sum = jnp.sum(jnp.where(mask, ce, 0.0))

    # ---- smooth L1 loss over positive priors ----
    diff = pred - gt                                                           # (4, P)
    ad = jnp.abs(diff)
    sl1 = jnp.where(ad < 1.0, 0.5 * diff * diff, ad - 0.5)
    sl1_prior = jnp.sum(sl1, axis=0, keepdims=True)                            # (1, P)
    sl1_sum = jnp.sum(jnp.where(pos_mask, sl1_prior, 0.0))

    num_pos = jnp.sum(pos_mask.astype(jnp.float32))
    mask_cnt = jnp.sum(mask.astype(jnp.float32))

    # per-row partials, splatted across one lane-vector each (lane-dense full-tile stores)
    sl1_ref[...] = jnp.full(sl1_ref.shape, sl1_sum, jnp.float32)
    cls_ref[...] = jnp.full(cls_ref.shape, cls_sum, jnp.float32)
    pos_ref[...] = jnp.full(pos_ref.shape, num_pos, jnp.float32)
    cnt_ref[...] = jnp.full(cnt_ref.shape, mask_cnt, jnp.float32)


def multibox_loss3(confidence, predicted_locations, labels, labels_mid, labels_low,
                   gt_locations, *, neg_pos_ratio_mid, neg_pos_ratio_low, tj=256):
    """Forward pass of MultiboxLoss3. Returns (smooth_l1_loss, classification_loss)."""
    B, P, C = confidence.shape
    tj = int(min(tj, P))

    # Lane-dense layout plumbing (pure XLA transposes/reshapes, no compute moved out).
    conf_t = jnp.transpose(confidence, (0, 2, 1))                 # (B, C, P)
    pred_t = jnp.transpose(predicted_locations, (0, 2, 1))        # (B, 4, P)
    gt_t = jnp.transpose(gt_locations, (0, 2, 1))                 # (B, 4, P)
    lab = labels.astype(jnp.int32).reshape(B, 1, P)
    lab_mid = labels_mid.astype(jnp.int32).reshape(B, 1, P)
    lab_low = labels_low.astype(jnp.int32).reshape(B, 1, P)

    kernel = functools.partial(
        _multibox_loss3_kernel,
        neg_pos_ratio_mid=float(neg_pos_ratio_mid),
        neg_pos_ratio_low=float(neg_pos_ratio_low),
        tj=tj)

    def row3(s1, s2):
        return pl.BlockSpec((1, s1, s2), lambda b: (b, 0, 0))

    out_spec = pl.BlockSpec((1, 1, 128), lambda b: (b, 0, 0))
    out_shape = jax.ShapeDtypeStruct((B, 1, 128), jnp.float32)

    # VMEM budget: double-buffered per-row inputs + ~8 live (tj, P) f32 tiles in the rank loop.
    bytes_inputs = 2 * 4 * P * (C + 4 + 4 + 3)
    bytes_rank = 8 * 4 * tj * P
    vmem_limit = int(min(64 * 1024 * 1024,
                         max(16 * 1024 * 1024, 2 * (bytes_inputs + bytes_rank))))

    sl1_p, cls_p, pos_p, cnt_p = pl.pallas_call(
        kernel,
        out_shape=(out_shape, out_shape, out_shape, out_shape),
        grid=(B,),
        in_specs=[row3(C, P), row3(1, P), row3(1, P), row3(1, P), row3(4, P), row3(4, P)],
        out_specs=(out_spec, out_spec, out_spec, out_spec),
        compiler_params=pltpu.CompilerParams(
            dimension_semantics=("parallel",),
            vmem_limit_bytes=vmem_limit),
    )(conf_t, lab, lab_mid, lab_low, pred_t, gt_t)

    sl1_sum = jnp.sum(sl1_p[:, 0, 0])
    cls_sum = jnp.sum(cls_p[:, 0, 0])
    num_pos = jnp.sum(pos_p[:, 0, 0]) + 1e-6
    nonempty = (jnp.sum(cnt_p[:, 0, 0]) > 0).astype(jnp.float32)
    # empty-mask path of the torch code returns both losses * 0
    return sl1_sum / num_pos * nonempty, cls_sum / num_pos * nonempty


def _reference(confidence, predicted_locations, labels, labels_mid, labels_low,
               gt_locations, r_mid, r_low):
    """Pure-JAX reference of the same semantics for validation."""
    logp = jax.nn.log_softmax(confidence, axis=2)
    bg_loss = -logp[:, :, 0]
    pos_mask = labels > 0
    num_neg = (jnp.sum(labels_mid > 0, axis=1, keepdims=True) * r_mid +
               jnp.sum(labels_low > 0, axis=1, keepdims=True) * r_low)
    neg_loss = jnp.where(pos_mask, -jnp.inf, bg_loss)
    order = jnp.argsort(jnp.argsort(-neg_loss, axis=1, stable=True), axis=1, stable=True)
    neg_mask = order < num_neg
    mask = pos_mask | neg_mask

    lse = jax.scipy.special.logsumexp(confidence, axis=2)
    conf_true = jnp.take_along_axis(confidence, labels[:, :, None], axis=2)[:, :, 0]
    ce = lse - conf_true
    cls_sum = jnp.sum(jnp.where(mask, ce, 0.0))

    diff = predicted_locations - gt_locations
    ad = jnp.abs(diff)
    sl1 = jnp.where(ad < 1.0, 0.5 * diff * diff, ad - 0.5)
    sl1_sum = jnp.sum(jnp.where(pos_mask, jnp.sum(sl1, axis=-1), 0.0))

    num_pos = jnp.sum(pos_mask.astype(jnp.float32)) + 1e-6
    nonempty = (jnp.sum(mask) > 0).astype(jnp.float32)
    return sl1_sum / num_pos * nonempty, cls_sum / num_pos * nonempty


if __name__ == "__main__":
    B, P, C = 2, 384, 8
    neg_pos_ratio_mid, neg_pos_ratio_low = 3, 2
    # (center_variance, size_variance, priors are unused in the forward pass)

    key = jax.random.PRNGKey(0)
    k1, k2, k3, k4, k5, k6, k7 = jax.random.split(key, 7)

    confidence = jax.random.normal(k1, (B, P, C), dtype=jnp.float32)
    predicted_locations = jax.random.normal(k2, (B, P, 4), dtype=jnp.float32)
    gt_locations = jax.random.normal(k3, (B, P, 4), dtype=jnp.float32)

    def make_labels(kp, kc, p_pos):
        is_pos = jax.random.bernoulli(kp, p_pos, (B, P))
        cls = jax.random.randint(kc, (B, P), 1, C)
        return jnp.where(is_pos, cls, 0).astype(jnp.int32)

    labels = make_labels(k4, k5, 0.05)
    labels_mid = make_labels(k6, k5, 0.08)
    labels_low = make_labels(k7, k5, 0.12)

    # P=384 with tj=256 -> 2 j-blocks (one ragged) so the tiled rank loop is exercised.
    sl1_loss, cls_loss = multibox_loss3(
        confidence, predicted_locations, labels, labels_mid, labels_low, gt_locations,
        neg_pos_ratio_mid=neg_pos_ratio_mid, neg_pos_ratio_low=neg_pos_ratio_low, tj=256)
    jax.block_until_ready((sl1_loss, cls_loss))

    ref_sl1, ref_cls = _reference(confidence, predicted_locations, labels, labels_mid,
                                  labels_low, gt_locations, neg_pos_ratio_mid, neg_pos_ratio_low)
    np.testing.assert_allclose(np.asarray(sl1_loss), np.asarray(ref_sl1), rtol=1e-5, atol=1e-5)
    np.testing.assert_allclose(np.asarray(cls_loss), np.asarray(ref_cls), rtol=1e-5, atol=1e-5)

    print("KERNEL_OK")
</pallas_src>

<mosaic_0001>
module attributes {stable_mosaic.version = 11 : i64} {
  func.func @_multibox_loss3_kernel(%arg0: i32, %arg1: memref<1x8x384xf32, #tpu.memory_space<vmem>>, %arg2: memref<1x1x384xi32, #tpu.memory_space<vmem>>, %arg3: memref<1x1x384xi32, #tpu.memory_space<vmem>>, %arg4: memref<1x1x384xi32, #tpu.memory_space<vmem>>, %arg5: memref<1x4x384xf32, #tpu.memory_space<vmem>>, %arg6: memref<1x4x384xf32, #tpu.memory_space<vmem>>, %arg7: memref<1x1x128xf32, #tpu.memory_space<vmem>>, %arg8: memref<1x1x128xf32, #tpu.memory_space<vmem>>, %arg9: memref<1x1x128xf32, #tpu.memory_space<vmem>>, %arg10: memref<1x1x128xf32, #tpu.memory_space<vmem>>) attributes {dimension_semantics = [#tpu.dimension_semantics<parallel>], iteration_bounds = array<i64: 2>, scalar_prefetch = 0 : i64, scratch_operands = 0 : i64, tpu.core_type = #tpu.core_type<tc>, window_params = [{transform_indices = @transform_0, window_bounds = array<i64: 1, 8, 384>}, {transform_indices = @transform_1, window_bounds = array<i64: 1, 1, 384>}, {transform_indices = @transform_2, window_bounds = array<i64: 1, 1, 384>}, {transform_indices = @transform_3, window_bounds = array<i64: 1, 1, 384>}, {transform_indices = @transform_4, window_bounds = array<i64: 1, 4, 384>}, {transform_indices = @transform_5, window_bounds = array<i64: 1, 4, 384>}, {transform_indices = @transform_6, window_bounds = array<i64: 1, 1, 128>}, {transform_indices = @transform_7, window_bounds = array<i64: 1, 1, 128>}, {transform_indices = @transform_8, window_bounds = array<i64: 1, 1, 128>}, {transform_indices = @transform_9, window_bounds = array<i64: 1, 1, 128>}]} {
    %c0 = arith.constant 0 : index
    %c0_0 = arith.constant 0 : index
    %c0_1 = arith.constant 0 : index
    %0 = vector.load %arg1[%c0, %c0_0, %c0_1] : memref<1x8x384xf32, #tpu.memory_space<vmem>>, vector<1x8x384xf32>
    %1 = vector.shape_cast %0 : vector<1x8x384xf32> to vector<8x384xf32>
    %c0_2 = arith.constant 0 : index
    %c0_3 = arith.constant 0 : index
    %c0_4 = arith.constant 0 : index
    %2 = vector.load %arg2[%c0_2, %c0_3, %c0_4] : memref<1x1x384xi32, #tpu.memory_space<vmem>>, vector<1x1x384xi32>
    %3 = vector.shape_cast %2 : vector<1x1x384xi32> to vector<1x384xi32>
    %c0_5 = arith.constant 0 : index
    %c0_6 = arith.constant 0 : index
    %c0_7 = arith.constant 0 : index
    %4 = vector.load %arg3[%c0_5, %c0_6, %c0_7] : memref<1x1x384xi32, #tpu.memory_space<vmem>>, vector<1x1x384xi32>
    %5 = vector.shape_cast %4 : vector<1x1x384xi32> to vector<1x384xi32>
    %c0_8 = arith.constant 0 : index
    %c0_9 = arith.constant 0 : index
    %c0_10 = arith.constant 0 : index
    %6 = vector.load %arg4[%c0_8, %c0_9, %c0_10] : memref<1x1x384xi32, #tpu.memory_space<vmem>>, vector<1x1x384xi32>
    %7 = vector.shape_cast %6 : vector<1x1x384xi32> to vector<1x384xi32>
    %c0_11 = arith.constant 0 : index
    %c0_12 = arith.constant 0 : index
    %c0_13 = arith.constant 0 : index
    %8 = vector.load %arg5[%c0_11, %c0_12, %c0_13] : memref<1x4x384xf32, #tpu.memory_space<vmem>>, vector<1x4x384xf32>
    %9 = vector.shape_cast %8 : vector<1x4x384xf32> to vector<4x384xf32>
    %c0_14 = arith.constant 0 : index
    %c0_15 = arith.constant 0 : index
    %c0_16 = arith.constant 0 : index
    %10 = vector.load %arg6[%c0_14, %c0_15, %c0_16] : memref<1x4x384xf32, #tpu.memory_space<vmem>>, vector<1x4x384xf32>
    %11 = vector.shape_cast %10 : vector<1x4x384xf32> to vector<4x384xf32>
    %cst = arith.constant dense<0xFF800000> : vector<384xf32>
    %12 = vector.multi_reduction <maximumf>, %1, %cst [0] : vector<8x384xf32> to vector<384xf32>
    %13 = vector.shape_cast %12 : vector<384xf32> to vector<1x384xf32>
    %14 = vector.broadcast %13 : vector<1x384xf32> to vector<8x384xf32>
    %15 = arith.subf %1, %14 : vector<8x384xf32>
    %16 = math.exp %15 : vector<8x384xf32>
    %cst_17 = arith.constant dense<0.000000e+00> : vector<384xf32>
    %17 = vector.multi_reduction <add>, %16, %cst_17 [0] : vector<8x384xf32> to vector<384xf32>
    %18 = vector.shape_cast %17 : vector<384xf32> to vector<1x384xf32>
    %19 = math.log %18 : vector<1x384xf32>
    %20 = arith.addf %13, %19 : vector<1x384xf32>
    %21 = vector.extract_strided_slice %1 {offsets = [0, 0], sizes = [1, 384], strides = [1, 1]} : vector<8x384xf32> to vector<1x384xf32>
    %22 = arith.subf %20, %21 : vector<1x384xf32>
    %c0_i32 = arith.constant 0 : i32
    %23 = vector.broadcast %c0_i32 : i32 to vector<1x384xi32>
    %24 = arith.cmpi sgt, %3, %23 : vector<1x384xi32>
    %c0_i32_18 = arith.constant 0 : i32
    %25 = vector.broadcast %c0_i32_18 : i32 to vector<1x384xi32>
    %26 = arith.cmpi sgt, %5, %25 : vector<1x384xi32>
    %27 = arith.extui %26 : vector<1x384xi1> to vector<1x384xi32>
    %28 = arith.sitofp %27 : vector<1x384xi32> to vector<1x384xf32>
    %29 = vector.shape_cast %28 : vector<1x384xf32> to vector<1x1x384xf32>
    %cst_19 = arith.constant dense<0.000000e+00> : vector<1xf32>
    %30 = vector.multi_reduction <add>, %29, %cst_19 [1, 2] : vector<1x1x384xf32> to vector<1xf32>
    %31 = vector.shape_cast %30 : vector<1xf32> to vector<1x1x1xf32>
    %32 = vector.extract %31[0, 0, 0] : f32 from vector<1x1x1xf32>
    %c0_i32_20 = arith.constant 0 : i32
    %33 = vector.broadcast %c0_i32_20 : i32 to vector<1x384xi32>
    %34 = arith.cmpi sgt, %7, %33 : vector<1x384xi32>
    %35 = arith.extui %34 : vector<1x384xi1> to vector<1x384xi32>
    %36 = arith.sitofp %35 : vector<1x384xi32> to vector<1x384xf32>
    %37 = vector.shape_cast %36 : vector<1x384xf32> to vector<1x1x384xf32>
    %cst_21 = arith.constant dense<0.000000e+00> : vector<1xf32>
    %38 = vector.multi_reduction <add>, %37, %cst_21 [1, 2] : vector<1x1x384xf32> to vector<1xf32>
    %39 = vector.shape_cast %38 : vector<1xf32> to vector<1x1x1xf32>
    %40 = vector.extract %39[0, 0, 0] : f32 from vector<1x1x1xf32>
    %cst_22 = arith.constant 3.000000e+00 : f32
    %41 = arith.mulf %32, %cst_22 : f32
    %cst_23 = arith.constant 2.000000e+00 : f32
    %42 = arith.mulf %40, %cst_23 : f32
    %43 = arith.addf %41, %42 : f32
    %cst_24 = arith.constant 0xFF800000 : f32
    %44 = vector.broadcast %cst_24 : f32 to vector<1x384xf32>
    %45 = arith.select %24, %44, %22 : vector<1x384xi1>, vector<1x384xf32>
    %46 = tpu.iota {dimensions = array<i32: 1>} : vector<256x384xi32>
    %47 = tpu.iota {dimensions = array<i32: 0>} : vector<256x384xi32>
    %48 = arith.subi %46, %47 : vector<256x384xi32>
    %cst_25 = arith.constant 0.000000e+00 : f32
    %49 = vector.broadcast %cst_25 : f32 to vector<1x384xf32>
    %c0_i32_26 = arith.constant 0 : i32
    %c256_i32 = arith.constant 256 : i32
    %50 = arith.muli %c0_i32_26, %c256_i32 : i32
    %51 = vector.broadcast %50 : i32 to vector<256x384xi32>
    %52 = arith.cmpi eq, %48, %51 : vector<256x384xi32>
    %cst_27 = arith.constant 0.000000e+00 : f32
    %53 = vector.shape_cast %45 : vector<1x384xf32> to vector<1x384xf32>
    %54 = vector.broadcast %53 : vector<1x384xf32> to vector<256x384xf32>
    %55 = vector.broadcast %cst_27 : f32 to vector<256x384xf32>
    %56 = arith.select %52, %54, %55 : vector<256x384xi1>, vector<256x384xf32>
    %cst_28 = arith.constant dense<0.000000e+00> : vector<256xf32>
    %57 = vector.multi_reduction <add>, %56, %cst_28 [1] : vector<256x384xf32> to vector<256xf32>
    %58 = vector.shape_cast %57 : vector<256xf32> to vector<256x1xf32>
    %59 = vector.broadcast %58 : vector<256x1xf32> to vector<256x384xf32>
    %60 = vector.broadcast %45 : vector<1x384xf32> to vector<256x384xf32>
    %61 = arith.cmpf ogt, %59, %60 : vector<256x384xf32>
    %62 = vector.broadcast %58 : vector<256x1xf32> to vector<256x384xf32>
    %63 = vector.broadcast %45 : vector<1x384xf32> to vector<256x384xf32>
    %64 = arith.cmpf oeq, %62, %63 : vector<256x384xf32>
    %65 = vector.broadcast %50 : i32 to vector<256x384xi32>
    %66 = arith.cmpi sgt, %48, %65 : vector<256x384xi32>
    %67 = arith.andi %64, %66 : vector<256x384xi1>
    %68 = arith.ori %61, %67 : vector<256x384xi1>
    %c384_i32 = arith.constant 384 : i32
    %69 = arith.subi %c384_i32, %50 : i32
    %70 = vector.broadcast %69 : i32 to vector<256x384xi32>
    %71 = arith.cmpi slt, %47, %70 : vector<256x384xi32>
    %72 = arith.andi %68, %71 : vector<256x384xi1>
    %73 = arith.extui %72 : vector<256x384xi1> to vector<256x384xi32>
    %74 = arith.sitofp %73 : vector<256x384xi32> to vector<256x384xf32>
    %cst_29 = arith.constant dense<0.000000e+00> : vector<384xf32>
    %75 = vector.multi_reduction <add>, %74, %cst_29 [0] : vector<256x384xf32> to vector<384xf32>
    %76 = vector.shape_cast %75 : vector<384xf32> to vector<1x384xf32>
    %77 = arith.addf %49, %76 : vector<1x384xf32>
    %c1_i32 = arith.constant 1 : i32
    %c256_i32_30 = arith.constant 256 : i32
    %78 = arith.muli %c1_i32, %c256_i32_30 : i32
    %79 = vector.broadcast %78 : i32 to vector<256x384xi32>
    %80 = arith.cmpi eq, %48, %79 : vector<256x384xi32>
    %cst_31 = arith.constant 0.000000e+00 : f32
    %81 = vector.shape_cast %45 : vector<1x384xf32> to vector<1x384xf32>
    %82 = vector.broadcast %81 : vector<1x384xf32> to vector<256x384xf32>
    %83 = vector.broadcast %cst_31 : f32 to vector<256x384xf32>
    %84 = arith.select %80, %82, %83 : vector<256x384xi1>, vector<256x384xf32>
    %cst_32 = arith.constant dense<0.000000e+00> : vector<256xf32>
    %85 = vector.multi_reduction <add>, %84, %cst_32 [1] : vector<256x384xf32> to vector<256xf32>
    %86 = vector.shape_cast %85 : vector<256xf32> to vector<256x1xf32>
    %87 = vector.broadcast %86 : vector<256x1xf32> to vector<256x384xf32>
    %88 = vector.broadcast %45 : vector<1x384xf32> to vector<256x384xf32>
    %89 = arith.cmpf ogt, %87, %88 : vector<256x384xf32>
    %90 = vector.broadcast %86 : vector<256x1xf32> to vector<256x384xf32>
    %91 = vector.broadcast %45 : vector<1x384xf32> to vector<256x384xf32>
    %92 = arith.cmpf oeq, %90, %91 : vector<256x384xf32>
    %93 = vector.broadcast %78 : i32 to vector<256x384xi32>
    %94 = arith.cmpi sgt, %48, %93 : vector<256x384xi32>
    %95 = arith.andi %92, %94 : vector<256x384xi1>
    %96 = arith.ori %89, %95 : vector<256x384xi1>
    %c384_i32_33 = arith.constant 384 : i32
    %97 = arith.subi %c384_i32_33, %78 : i32
    %98 = vector.broadcast %97 : i32 to vector<256x384xi32>
    %99 = arith.cmpi slt, %47, %98 : vector<256x384xi32>
    %100 = arith.andi %96, %99 : vector<256x384xi1>
    %101 = arith.extui %100 : vector<256x384xi1> to vector<256x384xi32>
    %102 = arith.sitofp %101 : vector<256x384xi32> to vector<256x384xf32>
    %cst_34 = arith.constant dense<0.000000e+00> : vector<384xf32>
    %103 = vector.multi_reduction <add>, %102, %cst_34 [0] : vector<256x384xf32> to vector<384xf32>
    %104 = vector.shape_cast %103 : vector<384xf32> to vector<1x384xf32>
    %105 = arith.addf %77, %104 : vector<1x384xf32>
    %c2_i32 = arith.constant 2 : i32
    %106 = vector.broadcast %43 : f32 to vector<1x384xf32>
    %107 = arith.cmpf olt, %105, %106 : vector<1x384xf32>
    %108 = arith.ori %24, %107 : vector<1x384xi1>
    %109 = tpu.iota {dimensions = array<i32: 0>} : vector<8x384xi32>
    %110 = vector.broadcast %3 : vector<1x384xi32> to vector<8x384xi32>
    %111 = arith.cmpi eq, %109, %110 : vector<8x384xi32>
    %cst_35 = arith.constant 0.000000e+00 : f32
    %112 = vector.broadcast %cst_35 : f32 to vector<8x384xf32>
    %113 = arith.select %111, %1, %112 : vector<8x384xi1>, vector<8x384xf32>
    %cst_36 = arith.constant dense<0.000000e+00> : vector<384xf32>
    %114 = vector.multi_reduction <add>, %113, %cst_36 [0] : vector<8x384xf32> to vector<384xf32>
    %115 = vector.shape_cast %114 : vector<384xf32> to vector<1x384xf32>
    %116 = arith.subf %20, %115 : vector<1x384xf32>
    %cst_37 = arith.constant 0.000000e+00 : f32
    %117 = vector.broadcast %cst_37 : f32 to vector<1x384xf32>
    %118 = arith.select %108, %116, %117 : vector<1x384xi1>, vector<1x384xf32>
    %119 = vector.shape_cast %118 : vector<1x384xf32> to vector<1x1x384xf32>
    %cst_38 = arith.constant dense<0.000000e+00> : vector<1xf32>
    %120 = vector.multi_reduction <add>, %119, %cst_38 [1, 2] : vector<1x1x384xf32> to vector<1xf32>
    %121 = vector.shape_cast %120 : vector<1xf32> to vector<1x1x1xf32>
    %122 = vector.extract %121[0, 0, 0] : f32 from vector<1x1x1xf32>
    %123 = arith.subf %9, %11 : vector<4x384xf32>
    %124 = math.absf %123 : vector<4x384xf32>
    %cst_39 = arith.constant 1.000000e+00 : f32
    %125 = vector.broadcast %cst_39 : f32 to vector<4x384xf32>
    %126 = arith.cmpf olt, %124, %125 : vector<4x384xf32>
    %cst_40 = arith.constant 5.000000e-01 : f32
    %127 = vector.broadcast %cst_40 : f32 to vector<4x384xf32>
    %128 = arith.mulf %127, %123 : vector<4x384xf32>
    %129 = arith.mulf %128, %123 : vector<4x384xf32>
    %cst_41 = arith.constant 5.000000e-01 : f32
    %130 = vector.broadcast %cst_41 : f32 to vector<4x384xf32>
    %131 = arith.subf %124, %130 : vector<4x384xf32>
    %132 = arith.select %126, %129, %131 : vector<4x384xi1>, vector<4x384xf32>
    %cst_42 = arith.constant dense<0.000000e+00> : vector<384xf32>
    %133 = vector.multi_reduction <add>, %132, %cst_42 [0] : vector<4x384xf32> to vector<384xf32>
    %134 = vector.shape_cast %133 : vector<384xf32> to vector<1x384xf32>
    %cst_43 = arith.constant 0.000000e+00 : f32
    %135 = vector.broadcast %cst_43 : f32 to vector<1x384xf32>
    %136 = arith.select %24, %134, %135 : vector<1x384xi1>, vector<1x384xf32>
    %137 = vector.shape_cast %136 : vector<1x384xf32> to vector<1x1x384xf32>
    %cst_44 = arith.constant dense<0.000000e+00> : vector<1xf32>
    %138 = vector.multi_reduction <add>, %137, %cst_44 [1, 2] : vector<1x1x384xf32> to vector<1xf32>
    %139 = vector.shape_cast %138 : vector<1xf32> to vector<1x1x1xf32>
    %140 = vector.extract %139[0, 0, 0] : f32 from vector<1x1x1xf32>
    %141 = arith.extui %24 : vector<1x384xi1> to vector<1x384xi32>
    %142 = arith.sitofp %141 : vector<1x384xi32> to vector<1x384xf32>
    %143 = vector.shape_cast %142 : vector<1x384xf32> to vector<1x1x384xf32>
    %cst_45 = arith.constant dense<0.000000e+00> : vector<1xf32>
    %144 = vector.multi_reduction <add>, %143, %cst_45 [1, 2] : vector<1x1x384xf32> to vector<1xf32>
    %145 = vector.shape_cast %144 : vector<1xf32> to vector<1x1x1xf32>
    %146 = vector.extract %145[0, 0, 0] : f32 from vector<1x1x1xf32>
    %147 = arith.extui %108 : vector<1x384xi1> to vector<1x384xi32>
    %148 = arith.sitofp %147 : vector<1x384xi32> to vector<1x384xf32>
    %149 = vector.shape_cast %148 : vector<1x384xf32> to vector<1x1x384xf32>
    %cst_46 = arith.constant dense<0.000000e+00> : vector<1xf32>
    %150 = vector.multi_reduction <add>, %149, %cst_46 [1, 2] : vector<1x1x384xf32> to vector<1xf32>
    %151 = vector.shape_cast %150 : vector<1xf32> to vector<1x1x1xf32>
    %152 = vector.extract %151[0, 0, 0] : f32 from vector<1x1x1xf32>
    %153 = vector.broadcast %140 : f32 to vector<1x1x128xf32>
    %c0_47 = arith.constant 0 : index
    %c0_48 = arith.constant 0 : index
    %c0_49 = arith.constant 0 : index
    %154 = vector.load %arg7[%c0_47, %c0_48, %c0_49] : memref<1x1x128xf32, #tpu.memory_space<vmem>>, vector<1x1x128xf32>
    tpu.vector_store %arg7[%c0_47, %c0_48, %c0_49], %153 {strides = array<i32>} : memref<1x1x128xf32, #tpu.memory_space<vmem>>, vector<1x1x128xf32>,
    %155 = vector.broadcast %122 : f32 to vector<1x1x128xf32>
    %c0_50 = arith.constant 0 : index
    %c0_51 = arith.constant 0 : index
    %c0_52 = arith.constant 0 : index
    %156 = vector.load %arg8[%c0_50, %c0_51, %c0_52] : memref<1x1x128xf32, #tpu.memory_space<vmem>>, vector<1x1x128xf32>
    tpu.vector_store %arg8[%c0_50, %c0_51, %c0_52], %155 {strides = array<i32>} : memref<1x1x128xf32, #tpu.memory_space<vmem>>, vector<1x1x128xf32>,
    %157 = vector.broadcast %146 : f32 to vector<1x1x128xf32>
    %c0_53 = arith.constant 0 : index
    %c0_54 = arith.constant 0 : index
    %c0_55 = arith.constant 0 : index
    %158 = vector.load %arg9[%c0_53, %c0_54, %c0_55] : memref<1x1x128xf32, #tpu.memory_space<vmem>>, vector<1x1x128xf32>
    tpu.vector_store %arg9[%c0_53, %c0_54, %c0_55], %157 {strides = array<i32>} : memref<1x1x128xf32, #tpu.memory_space<vmem>>, vector<1x1x128xf32>,
    %159 = vector.broadcast %152 : f32 to vector<1x1x128xf32>
    %c0_56 = arith.constant 0 : index
    %c0_57 = arith.constant 0 : index
    %c0_58 = arith.constant 0 : index
    %160 = vector.load %arg10[%c0_56, %c0_57, %c0_58] : memref<1x1x128xf32, #tpu.memory_space<vmem>>, vector<1x1x128xf32>
    tpu.vector_store %arg10[%c0_56, %c0_57, %c0_58], %159 {strides = array<i32>} : memref<1x1x128xf32, #tpu.memory_space<vmem>>, vector<1x1x128xf32>,
    return
  }
  func.func @transform_0(%arg0: i32) -> (i32, i32, i32) {
    %c0_i32 = arith.constant 0 : i32
    %c0_i32_0 = arith.constant 0 : i32
    %c0_i32_1 = arith.constant 0 : i32
    return %arg0, %c0_i32, %c0_i32_0 : i32, i32, i32
  }
  func.func @transform_1(%arg0: i32) -> (i32, i32, i32) {
    %c0_i32 = arith.constant 0 : i32
    %c0_i32_0 = arith.constant 0 : i32
    %c0_i32_1 = arith.constant 0 : i32
    return %arg0, %c0_i32, %c0_i32_0 : i32, i32, i32
  }
  func.func @transform_2(%arg0: i32) -> (i32, i32, i32) {
    %c0_i32 = arith.constant 0 : i32
    %c0_i32_0 = arith.constant 0 : i32
    %c0_i32_1 = arith.constant 0 : i32
    return %arg0, %c0_i32, %c0_i32_0 : i32, i32, i32
  }
  func.func @transform_3(%arg0: i32) -> (i32, i32, i32) {
    %c0_i32 = arith.constant 0 : i32
    %c0_i32_0 = arith.constant 0 : i32
    %c0_i32_1 = arith.constant 0 : i32
    return %arg0, %c0_i32, %c0_i32_0 : i32, i32, i32
  }
  func.func @transform_4(%arg0: i32) -> (i32, i32, i32) {
    %c0_i32 = arith.constant 0 : i32
    %c0_i32_0 = arith.constant 0 : i32
    %c0_i32_1 = arith.constant 0 : i32
    return %arg0, %c0_i32, %c0_i32_0 : i32, i32, i32
  }
  func.func @transform_5(%arg0: i32) -> (i32, i32, i32) {
    %c0_i32 = arith.constant 0 : i32
    %c0_i32_0 = arith.constant 0 : i32
    %c0_i32_1 = arith.constant 0 : i32
    return %arg0, %c0_i32, %c0_i32_0 : i32, i32, i32
  }
  func.func @transform_6(%arg0: i32) -> (i32, i32, i32) {
    %c0_i32 = arith.constant 0 : i32
    %c0_i32_0 = arith.constant 0 : i32
    %c0_i32_1 = arith.constant 0 : i32
    return %arg0, %c0_i32, %c0_i32_0 : i32, i32, i32
  }
  func.func @transform_7(%arg0: i32) -> (i32, i32, i32) {
    %c0_i32 = arith.constant 0 : i32
    %c0_i32_0 = arith.constant 0 : i32
    %c0_i32_1 = arith.constant 0 : i32
    return %arg0, %c0_i32, %c0_i32_0 : i32, i32, i32
  }
  func.func @transform_8(%arg0: i32) -> (i32, i32, i32) {
    %c0_i32 = arith.constant 0 : i32
    %c0_i32_0 = arith.constant 0 : i32
    %c0_i32_1 = arith.constant 0 : i32
    return %arg0, %c0_i32, %c0_i32_0 : i32, i32, i32
  }
  func.func @transform_9(%arg0: i32) -> (i32, i32, i32) {
    %c0_i32 = arith.constant 0 : i32
    %c0_i32_0 = arith.constant 0 : i32
    %c0_i32_1 = arith.constant 0 : i32
    return %arg0, %c0_i32, %c0_i32_0 : i32, i32, i32
  }
}

</mosaic_0001>

<llo_original>
// kernel: tpu_custom_call.1
$region0: #{tpu_custom_call.1}
  #allocation0 [shape = 'u32[]', space=smem, size = 0x4, offset = 0x4, fixed_abs, tag = 'smem constant byte address 0x4 - core index']
  #allocation1 [shape = 'u32[144,128]{1,0:T(1,128)}', space=vmem, size = 0x12000, scoped, tag = 'internal scratch']
  %s0 = inlined_call_operand.hbm [shape: f32[2,8,384], index: 0, kind: input, shape index: {}]
  %s1 = inlined_call_operand.hbm [shape: s32[2,1,384], index: 1, kind: input, shape index: {}]
  %s2 = inlined_call_operand.vmem [shape: s32[2,1,384], index: 2, kind: input, shape index: {}]
  %s3 = inlined_call_operand.hbm [shape: s32[2,1,384], index: 3, kind: input, shape index: {}]
  %s4 = inlined_call_operand.hbm [shape: f32[2,4,384], index: 4, kind: input, shape index: {}]
  %s5 = inlined_call_operand.hbm [shape: f32[2,4,384], index: 5, kind: input, shape index: {}]
  %s6 = inlined_call_operand.hbm [shape: f32[2,1,128], index: 6, kind: output, shape index: {0}]
  %s7 = inlined_call_operand.hbm [shape: f32[2,1,128], index: 7, kind: output, shape index: {1}]
  %s8 = inlined_call_operand.hbm [shape: f32[2,1,128], index: 8, kind: output, shape index: {2}]
  %s9 = inlined_call_operand.hbm [shape: f32[2,1,128], index: 9, kind: output, shape index: {3}]
  %10 = xla_tuple %s6, %s7, %s8, %s9
  %s11 = sld [smem:[#allocation0]]
  $region101: #{tpu_custom_call.1} parent=0
    _
  %s13 = ssub.s32 1, %s11
  %s14 = scalar_select 0, %s13, %s11
  $region1: #{tpu_custom_call.1} parent=0
    #allocation2 [shape = 'u8[24576]{0}', space=vmem, size = 0x6000, scoped, tag = 'input window, operand 0']
    #allocation3 [shape = 's32[2]{0}', space=sflag, size = 0x8, scoped, tag = 'scoped memory for tpu_custom_call.1']
    #allocation4 [shape = 's32[2]{0}', space=sflag, size = 0x8, scoped, tag = 'scoped memory for tpu_custom_call.1']
    #allocation5 [shape = 'u8[3072]{0}', space=vmem, size = 0xc00, scoped, tag = 'input window, operand 1']
    #allocation6 [shape = 's32[2]{0}', space=sflag, size = 0x8, scoped, tag = 'scoped memory for tpu_custom_call.1']
    #allocation7 [shape = 'u8[3072]{0}', space=vmem, size = 0xc00, scoped, tag = 'input window, operand 3']
    #allocation8 [shape = 'u8[12288]{0}', space=vmem, size = 0x3000, scoped, tag = 'input window, operand 4']
    #allocation9 [shape = 's32[2]{0}', space=sflag, size = 0x8, scoped, tag = 'scoped memory for tpu_custom_call.1']
    #allocation10 [shape = 'u8[12288]{0}', space=vmem, size = 0x3000, scoped, tag = 'input window, operand 5']
    #allocation11 [shape = 'u8[1024]{0}', space=vmem, size = 0x400, scoped, tag = 'output window, operand 0']
    #allocation12 [shape = 'u8[1024]{0}', space=vmem, size = 0x400, scoped, tag = 'output window, operand 1']
    #allocation13 [shape = 's32[2]{0}', space=sflag, size = 0x8, scoped, tag = 'scoped memory for tpu_custom_call.1']
    #allocation14 [shape = 'u8[1024]{0}', space=vmem, size = 0x400, scoped, tag = 'output window, operand 2']
    #allocation15 [shape = 'u8[1024]{0}', space=vmem, size = 0x400, scoped, tag = 'output window, operand 3']
    #allocation16 [shape = 's32[2]{0}', space=sflag, size = 0x8, scoped, tag = 'scoped memory for tpu_custom_call.1']
    %15 = vsyncpa [#allocation3], 0
    %s16 = scalar_lea.sflag [#allocation3], 1
    %17 = vsyncpa %s16, 0
    %18 = vsyncpa [#allocation6], 0
    %s19 = scalar_lea.sflag [#allocation6], 1
    %20 = vsyncpa %s19, 0
    %21 = vsyncpa [#allocation9], 0
    %s22 = scalar_lea.sflag [#allocation9], 1
    %23 = vsyncpa %s22, 0
    %24 = vsyncpa [#allocation4], 0
    %s25 = scalar_lea.sflag [#allocation4], 1
    %26 = vsyncpa %s25, 0
    %27 = vsyncpa [#allocation13], 0
    %s28 = scalar_lea.sflag [#allocation13], 1
    %29 = vsyncpa %s28, 0
    %30 = vsyncpa [#allocation16], 0
    %s31 = scalar_lea.sflag [#allocation16], 1
    %32 = vsyncpa %s31, 0
    loop: start=0, step=1, limit=4
    $region2: #{tpu_custom_call.1} parent=1 // loop_pre_header
      _
    $region3: #{tpu_custom_call.1} parent=1 // loop_header
      %s34 = sphi 0, %s38
      %p35 = scmp.ge.s32.totalorder %s34, 4
      %s44 = sphi 0, %s46
      %s47 = sphi 0, %s44
      %s48 = sphi 0, %s47
      %s64 = sphi 0, %s48
      %s70 = sphi 0, %s72
      %s73 = sphi 0, %s70
      %s74 = sphi 0, %s73
      %s90 = sphi 0, %s74
      %s96 = sphi 0, %s98
      %s99 = sphi 0, %s96
      %s100 = sphi 0, %s99
      %s116 = sphi 0, %s100
      %s122 = sphi 0, %s124
      %s125 = sphi 0, %s122
      %s126 = sphi 0, %s125
      %s142 = sphi 0, %s126
      %s148 = sphi 0, %s150
      %s151 = sphi 0, %s148
      %s152 = sphi 0, %s151
      %s168 = sphi 0, %s152
      %s174 = sphi 0, %s176
      %s177 = sphi 0, %s174
      %s178 = sphi 0, %s177
      %s194 = sphi 0, %s178
      %s200 = sphi 0, %s202
      %s203 = sphi 0, %s200
      %s204 = sphi 0, %s203
      %s220 = sphi 0, %s204
      %s226 = sphi 0, %s228
      %s229 = sphi 0, %s226
      %s230 = sphi 0, %s229
      %s246 = sphi 0, %s230
      %s252 = sphi 0, %s254
      %s255 = sphi 0, %s252
      %s256 = sphi 0, %s255
      %s272 = sphi 0, %s256
      %s278 = sphi 0, %s280
      %s281 = sphi 0, %s278
      %s282 = sphi 0, %s281
      %s298 = sphi 0, %s282
    $region4: #{tpu_custom_call.1} parent=1 // loop_header_branch
      %37 = sbr.rel (%p35) target = $region8
    $region5: #{tpu_custom_call.1} parent=1 // loop_body
      %s39 = ssub.s32 %s34, 1
      %s40 = ssub.s32 %s34, 2
      %s41 = sadd.s32 %s34, 1
      %s42 = ssub.s32 %s34, %s41
      %p43 = scmp.eq.s32.totalorder %s42, 0
      %s45 = sadd.s32 %s44, 1
      %s46 = scalar_select %p43, %s44, %s45
      %p49 = pneg %p43
      %p50 = scmp.eq.s32.totalorder %s34, 1
      %p51 = por %p49, %p50
      %p52 = scmp.ne.s32.totalorder %s44, %s47
      %p53 = scmp.eq.s32.totalorder %s34, 0
      %p54 = por %p52, %p53
      %p55 = scmp.ne.s32.totalorder %s44, %s47
      %p56 = scmp.eq.s32.totalorder %s39, 1
      %p57 = por %p55, %p56
      %p58 = scmp.ne.s32.totalorder %s47, %s48
      %p59 = scmp.eq.s32.totalorder %s39, 0
      %p60 = por %p58, %p59
      %p61 = scmp.ne.s32.totalorder %s47, %s48
      %p62 = scmp.eq.s32.totalorder %s40, 1
      %p63 = por %p61, %p62
      %p65 = scmp.ne.s32.totalorder %s48, %s64
      %p66 = scmp.eq.s32.totalorder %s40, 0
      %p67 = por %p65, %p66
      %s68 = ssub.s32 %s34, %s41
      %p69 = scmp.eq.s32.totalorder %s68, 0
      %s71 = sadd.s32 %s70, 1
      %s72 = scalar_select %p69, %s70, %s71
      %p75 = pneg %p69
      %p76 = scmp.eq.s32.totalorder %s34, 1
      %p77 = por %p75, %p76
      %p78 = scmp.ne.s32.totalorder %s70, %s73
      %p79 = scmp.eq.s32.totalorder %s34, 0
      %p80 = por %p78, %p79
      %p81 = scmp.ne.s32.totalorder %s70, %s73
      %p82 = scmp.eq.s32.totalorder %s39, 1
      %p83 = por %p81, %p82
      %p84 = scmp.ne.s32.totalorder %s73, %s74
      %p85 = scmp.eq.s32.totalorder %s39, 0
      %p86 = por %p84, %p85
      %p87 = scmp.ne.s32.totalorder %s73, %s74
      %p88 = scmp.eq.s32.totalorder %s40, 1
      %p89 = por %p87, %p88
      %p91 = scmp.ne.s32.totalorder %s74, %s90
      %p92 = scmp.eq.s32.totalorder %s40, 0
      %p93 = por %p91, %p92
      %s94 = ssub.s32 %s34, %s41
      %p95 = scmp.eq.s32.totalorder %s94, 0
      %s97 = sadd.s32 %s96, 1
      %s98 = scalar_select %p95, %s96, %s97
      %p101 = pneg %p95
      %p102 = scmp.eq.s32.totalorder %s34, 1
      %p103 = por %p101, %p102
      %p104 = scmp.ne.s32.totalorder %s96, %s99
      %p105 = scmp.eq.s32.totalorder %s34, 0
      %p106 = por %p104, %p105
      %p107 = scmp.ne.s32.totalorder %s96, %s99
      %p108 = scmp.eq.s32.totalorder %s39, 1
      %p109 = por %p107, %p108
      %p110 = scmp.ne.s32.totalorder %s99, %s100
      %p111 = scmp.eq.s32.totalorder %s39, 0
      %p112 = por %p110, %p111
      %p113 = scmp.ne.s32.totalorder %s99, %s100
      %p114 = scmp.eq.s32.totalorder %s40, 1
      %p115 = por %p113, %p114
      %p117 = scmp.ne.s32.totalorder %s100, %s116
      %p118 = scmp.eq.s32.totalorder %s40, 0
      %p119 = por %p117, %p118
      %s120 = ssub.s32 %s34, %s41
      %p121 = scmp.eq.s32.totalorder %s120, 0
      %s123 = sadd.s32 %s122, 1
      %s124 = scalar_select %p121, %s122, %s123
      %p127 = pneg %p121
      %p128 = scmp.eq.s32.totalorder %s34, 1
      %p129 = por %p127, %p128
      %p130 = scmp.ne.s32.totalorder %s122, %s125
      %p131 = scmp.eq.s32.totalorder %s34, 0
      %p132 = por %p130, %p131
      %p133 = scmp.ne.s32.totalorder %s122, %s125
      %p134 = scmp.eq.s32.totalorder %s39, 1
      %p135 = por %p133, %p134
      %p136 = scmp.ne.s32.totalorder %s125, %s126
      %p137 = scmp.eq.s32.totalorder %s39, 0
      %p138 = por %p136, %p137
      %p139 = scmp.ne.s32.totalorder %s125, %s126
      %p140 = scmp.eq.s32.totalorder %s40, 1
      %p141 = por %p139, %p140
      %p143 = scmp.ne.s32.totalorder %s126, %s142
      %p144 = scmp.eq.s32.totalorder %s40, 0
      %p145 = por %p143, %p144
      %s146 = ssub.s32 %s34, %s41
      %p147 = scmp.eq.s32.totalorder %s146, 0
      %s149 = sadd.s32 %s148, 1
      %s150 = scalar_select %p147, %s148, %s149
      %p153 = pneg %p147
      %p154 = scmp.eq.s32.totalorder %s34, 1
      %p155 = por %p153, %p154
      %p156 = scmp.ne.s32.totalorder %s148, %s151
      %p157 = scmp.eq.s32.totalorder %s34, 0
      %p158 = por %p156, %p157
      %p159 = scmp.ne.s32.totalorder %s148, %s151
      %p160 = scmp.eq.s32.totalorder %s39, 1
      %p161 = por %p159, %p160
      %p162 = scmp.ne.s32.totalorder %s151, %s152
      %p163 = scmp.eq.s32.totalorder %s39, 0
      %p164 = por %p162, %p163
      %p165 = scmp.ne.s32.totalorder %s151, %s152
      %p166 = scmp.eq.s32.totalorder %s40, 1
      %p167 = por %p165, %p166
      %p169 = scmp.ne.s32.totalorder %s152, %s168
      %p170 = scmp.eq.s32.totalorder %s40, 0
      %p171 = por %p169, %p170
      %s172 = ssub.s32 %s34, %s41
      %p173 = scmp.eq.s32.totalorder %s172, 0
      %s175 = sadd.s32 %s174, 1
      %s176 = scalar_select %p173, %s174, %s175
      %p179 = pneg %p173
      %p180 = scmp.eq.s32.totalorder %s34, 1
      %p181 = por %p179, %p180
      %p182 = scmp.ne.s32.totalorder %s174, %s177
      %p183 = scmp.eq.s32.totalorder %s34, 0
      %p184 = por %p182, %p183
      %p185 = scmp.ne.s32.totalorder %s174, %s177
      %p186 = scmp.eq.s32.totalorder %s39, 1
      %p187 = por %p185, %p186
      %p188 = scmp.ne.s32.totalorder %s177, %s178
      %p189 = scmp.eq.s32.totalorder %s39, 0
      %p190 = por %p188, %p189
      %p191 = scmp.ne.s32.totalorder %s177, %s178
      %p192 = scmp.eq.s32.totalorder %s40, 1
      %p193 = por %p191, %p192
      %p195 = scmp.ne.s32.totalorder %s178, %s194
      %p196 = scmp.eq.s32.totalorder %s40, 0
      %p197 = por %p195, %p196
      %s198 = ssub.s32 %s34, %s41
      %p199 = scmp.eq.s32.totalorder %s198, 0
      %s201 = sadd.s32 %s200, 1
      %s202 = scalar_select %p199, %s200, %s201
      %p205 = pneg %p199
      %p206 = scmp.eq.s32.totalorder %s34, 1
      %p207 = por %p205, %p206
      %p208 = scmp.ne.s32.totalorder %s200, %s203
      %p209 = scmp.eq.s32.totalorder %s34, 0
      %p210 = por %p208, %p209
      %p211 = scmp.ne.s32.totalorder %s200, %s203
      %p212 = scmp.eq.s32.totalorder %s39, 1
      %p213 = por %p211, %p212
      %p214 = scmp.ne.s32.totalorder %s203, %s204
      %p215 = scmp.eq.s32.totalorder %s39, 0
      %p216 = por %p214, %p215
      %p217 = scmp.ne.s32.totalorder %s203, %s204
      %p218 = scmp.eq.s32.totalorder %s40, 1
      %p219 = por %p217, %p218
      %p221 = scmp.ne.s32.totalorder %s204, %s220
      %p222 = scmp.eq.s32.totalorder %s40, 0
      %p223 = por %p221, %p222
      %s224 = ssub.s32 %s34, %s41
      %p225 = scmp.eq.s32.totalorder %s224, 0
      %s227 = sadd.s32 %s226, 1
      %s228 = scalar_select %p225, %s226, %s227
      %p231 = pneg %p225
      %p232 = scmp.eq.s32.totalorder %s34, 1
      %p233 = por %p231, %p232
      %p234 = scmp.ne.s32.totalorder %s226, %s229
      %p235 = scmp.eq.s32.totalorder %s34, 0
      %p236 = por %p234, %p235
      %p237 = scmp.ne.s32.totalorder %s226, %s229
      %p238 = scmp.eq.s32.totalorder %s39, 1
      %p239 = por %p237, %p238
      %p240 = scmp.ne.s32.totalorder %s229, %s230
      %p241 = scmp.eq.s32.totalorder %s39, 0
      %p242 = por %p240, %p241
      %p243 = scmp.ne.s32.totalorder %s229, %s230
      %p244 = scmp.eq.s32.totalorder %s40, 1
      %p245 = por %p243, %p244
      %p247 = scmp.ne.s32.totalorder %s230, %s246
      %p248 = scmp.eq.s32.totalorder %s40, 0
      %p249 = por %p247, %p248
      %s250 = ssub.s32 %s34, %s41
      %p251 = scmp.eq.s32.totalorder %s250, 0
      %s253 = sadd.s32 %s252, 1
      %s254 = scalar_select %p251, %s252, %s253
      %p257 = pneg %p251
      %p258 = scmp.eq.s32.totalorder %s34, 1
      %p259 = por %p257, %p258
      %p260 = scmp.ne.s32.totalorder %s252, %s255
      %p261 = scmp.eq.s32.totalorder %s34, 0
      %p262 = por %p260, %p261
      %p263 = scmp.ne.s32.totalorder %s252, %s255
      %p264 = scmp.eq.s32.totalorder %s39, 1
      %p265 = por %p263, %p264
      %p266 = scmp.ne.s32.totalorder %s255, %s256
      %p267 = scmp.eq.s32.totalorder %s39, 0
      %p268 = por %p266, %p267
      %p269 = scmp.ne.s32.totalorder %s255, %s256
      %p270 = scmp.eq.s32.totalorder %s40, 1
      %p271 = por %p269, %p270
      %p273 = scmp.ne.s32.totalorder %s256, %s272
      %p274 = scmp.eq.s32.totalorder %s40, 0
      %p275 = por %p273, %p274
      %s276 = ssub.s32 %s34, %s41
      %p277 = scmp.eq.s32.totalorder %s276, 0
      %s279 = sadd.s32 %s278, 1
      %s280 = scalar_select %p277, %s278, %s279
      %p283 = pneg %p277
      %p284 = scmp.eq.s32.totalorder %s34, 1
      %p285 = por %p283, %p284
      %p286 = scmp.ne.s32.totalorder %s278, %s281
      %p287 = scmp.eq.s32.totalorder %s34, 0
      %p288 = por %p286, %p287
      %p289 = scmp.ne.s32.totalorder %s278, %s281
      %p290 = scmp.eq.s32.totalorder %s39, 1
      %p291 = por %p289, %p290
      %p292 = scmp.ne.s32.totalorder %s281, %s282
      %p293 = scmp.eq.s32.totalorder %s39, 0
      %p294 = por %p292, %p293
      %p295 = scmp.ne.s32.totalorder %s281, %s282
      %p296 = scmp.eq.s32.totalorder %s40, 1
      %p297 = por %p295, %p296
      %p299 = scmp.ne.s32.totalorder %s282, %s298
      %p300 = scmp.eq.s32.totalorder %s40, 0
      %p301 = por %p299, %p300
      %p302 = scmp.le.s32.totalorder 1, %s34
      %p303 = scmp.lt.s32.totalorder %s34, 3
      %p304 = pnand %p302, %p303
      %p305 = pneg %p304
      // Predicated region
      $region9: #{tpu_custom_call.1} parent=5 // pred_check
        _
      $region10: #{tpu_custom_call.1} parent=5 // pred_check_branch
        %307 = sbr.rel (%p304) target = $region12
      $region11: #{tpu_custom_call.1} parent=5 // pred_region
        %s308 = ssub.s32 %s34, 1
      $region12: #{tpu_custom_call.1} parent=5 // pred_fallthru
        _
      %p309 = scmp.lt.s32.totalorder %s34, 2
      // Predicated region
      $region13: #{tpu_custom_call.1} parent=5 // pred_check
        %p310 = pneg %p309
      $region14: #{tpu_custom_call.1} parent=5 // pred_check_branch
        %312 = sbr.rel (%p310) target = $region16
      $region15: #{tpu_custom_call.1} parent=5 // pred_region
        // Predicated region
        $region17: #{tpu_custom_call.1} parent=15 // pred_check
          %p313 = pneg %p54
        $region18: #{tpu_custom_call.1} parent=15 // pred_check_branch
          %315 = sbr.rel (%p313) target = $region20
        $region19: #{tpu_custom_call.1} parent=15 // pred_region
          %s316 = sand.u32 %s44, 1
          %s317 = scalar_lea.sflag [#allocation3], %s316
          %s318 = sand.u32 %s44, 1
          %s319 = smul.addr %s318, 24
          %s320 = scalar_lea.vmem [#allocation2], %s319
          %s322 = ssub.s32 384, 384
          %323 = vsyncadd %s317, %s322
          %s324 = smul.addr %s34, 3
          %s325 = smul.addr %s324, 128
          %s326 = scalar_lea.hbm %s0, %s325
          %s328 = sshll.u32 %s320, 4
          %s329 = int_to_ptr.vmem [resolvable:$true] %s328
          %331 = dma.hbm_to_vmem [thread:$0]  %s326, 384, %s329, %s317
        $region20: #{tpu_custom_call.1} parent=15 // pred_fallthru
          _
        // Predicated region
        $region21: #{tpu_custom_call.1} parent=15 // pred_check
          %p332 = pneg %p80
        $region22: #{tpu_custom_call.1} parent=15 // pred_check_branch
          %334 = sbr.rel (%p332) target = $region24
        $region23: #{tpu_custom_call.1} parent=15 // pred_region
          %s335 = sand.u32 %s34, 1
          %s336 = scalar_lea.sflag [#allocation6], %s335
          %s337 = sand.u32 %s70, 1
          %s338 = smul.addr %s337, 3
          %s339 = scalar_lea.vmem [#allocation5], %s338
          %s341 = ssub.s32 48, 48
          %342 = vsyncadd %s336, %s341
          %s343 = smul.addr %s34, 3
          %s344 = smul.addr %s343, 16
          %s345 = scalar_lea.hbm %s1, %s344
          %s347 = sshll.u32 %s339, 4
          %s348 = int_to_ptr.vmem [resolvable:$true] %s347
          %350 = dma.hbm_to_vmem [thread:$0]  %s345, 48, %s348, %s336
        $region24: #{tpu_custom_call.1} parent=15 // pred_fallthru
          _
        // Predicated region
        $region25: #{tpu_custom_call.1} parent=15 // pred_check
          %p351 = pneg %p106
        $region26: #{tpu_custom_call.1} parent=15 // pred_check_branch
          %353 = sbr.rel (%p351) target = $region28
        $region27: #{tpu_custom_call.1} parent=15 // pred_region
          %p354 = scmp.lt.s32.totalorder %s34, 1
          %s355 = scalar_select %p354, %s34, 1
          %s356 = smul.addr %s355, 3
          %s357 = scalar_lea.vmem %s2, %s356
        $region28: #{tpu_custom_call.1} parent=15 // pred_fallthru
          _
        // Predicated region
        $region29: #{tpu_custom_call.1} parent=15 // pred_check
          %p358 = pneg %p132
        $region30: #{tpu_custom_call.1} parent=15 // pred_check_branch
          %360 = sbr.rel (%p358) target = $region32
        $region31: #{tpu_custom_call.1} parent=15 // pred_region
          %s361 = sand.u32 %s34, 1
          %s362 = scalar_lea.sflag [#allocation6], %s361
          %s363 = sand.u32 %s122, 1
          %s364 = smul.addr %s363, 3
          %s365 = scalar_lea.vmem [#allocation7], %s364
          %s367 = ssub.s32 48, 48
          %368 = vsyncadd %s362, %s367
          %s369 = smul.addr %s34, 3
          %s370 = smul.addr %s369, 16
          %s371 = scalar_lea.hbm %s3, %s370
          %s373 = sshll.u32 %s365, 4
          %s374 = int_to_ptr.vmem [resolvable:$true] %s373
          %376 = dma.hbm_to_vmem [thread:$0]  %s371, 48, %s374, %s362
        $region32: #{tpu_custom_call.1} parent=15 // pred_fallthru
          _
        // Predicated region
        $region33: #{tpu_custom_call.1} parent=15 // pred_check
          %p377 = pneg %p158
        $region34: #{tpu_custom_call.1} parent=15 // pred_check_branch
          %379 = sbr.rel (%p377) target = $region36
        $region35: #{tpu_custom_call.1} parent=15 // pred_region
          %s380 = sand.u32 %s34, 1
          %s381 = scalar_lea.sflag [#allocation9], %s380
          %s382 = sand.u32 %s148, 1
          %s383 = smul.addr %s382, 12
          %s384 = scalar_lea.vmem [#allocation8], %s383
          %s386 = ssub.s32 192, 192
          %387 = vsyncadd %s381, %s386
          %s388 = smul.addr %s34, 3
          %s389 = smul.addr %s388, 64
          %s390 = scalar_lea.hbm %s4, %s389
          %s392 = sshll.u32 %s384, 4
          %s393 = int_to_ptr.vmem [resolvable:$true] %s392
          %395 = dma.hbm_to_vmem [thread:$0]  %s390, 192, %s393, %s381
        $region36: #{tpu_custom_call.1} parent=15 // pred_fallthru
          _
        // Predicated region
        $region37: #{tpu_custom_call.1} parent=15 // pred_check
          %p396 = pneg %p184
        $region38: #{tpu_custom_call.1} parent=15 // pred_check_branch
          %398 = sbr.rel (%p396) target = $region40
        $region39: #{tpu_custom_call.1} parent=15 // pred_region
          %s399 = sand.u32 %s34, 1
          %s400 = scalar_lea.sflag [#allocation9], %s399
          %s401 = sand.u32 %s174, 1
          %s402 = smul.addr %s401, 12
          %s403 = scalar_lea.vmem [#allocation10], %s402
          %s405 = ssub.s32 192, 192
          %406 = vsyncadd %s400, %s405
          %s407 = smul.addr %s34, 3
          %s408 = smul.addr %s407, 64
          %s409 = scalar_lea.hbm %s5, %s408
          %s411 = sshll.u32 %s403, 4
          %s412 = int_to_ptr.vmem [resolvable:$true] %s411
          %414 = dma.hbm_to_vmem [thread:$0]  %s409, 192, %s412, %s400
        $region40: #{tpu_custom_call.1} parent=15 // pred_fallthru
          _
      $region16: #{tpu_custom_call.1} parent=5 // pred_fallthru
        _
      %p415 = scmp.le.s32.totalorder 1, %s34
      %p416 = scmp.lt.s32.totalorder %s34, 3
      %p417 = pnand %p415, %p416
      %p418 = pneg %p417
      // Predicated region
      $region41: #{tpu_custom_call.1} parent=5 // pred_check
        _
      $region42: #{tpu_custom_call.1} parent=5 // pred_check_branch
        %420 = sbr.rel (%p417) target = $region44
      $region43: #{tpu_custom_call.1} parent=5 // pred_region
        %s421 = ssub.s32 %s34, 1
        %s422 = sand.u32 %s47, 1
        %s423 = scalar_lea.sflag [#allocation3], %s422
        %s424 = sand.u32 %s47, 1
        %s425 = smul.addr %s424, 24
        %s426 = scalar_lea.vmem [#allocation2], %s425
        // Predicated region
        $region45: #{tpu_custom_call.1} parent=43 // pred_check
          %p427 = pneg %p60
        $region46: #{tpu_custom_call.1} parent=43 // pred_check_branch
          %429 = sbr.rel (%p427) target = $region48
        $region47: #{tpu_custom_call.1} parent=43 // pred_region
          %430 = dma.done %s423, 384
        $region48: #{tpu_custom_call.1} parent=43 // pred_fallthru
          _
        %s431 = sand.u32 %s39, 1
        %s432 = scalar_lea.sflag [#allocation6], %s431
        %s433 = sand.u32 %s73, 1
        %s434 = smul.addr %s433, 3
        %s435 = scalar_lea.vmem [#allocation5], %s434
        // Predicated region
        $region49: #{tpu_custom_call.1} parent=43 // pred_check
          %p436 = pneg %p86
        $region50: #{tpu_custom_call.1} parent=43 // pred_check_branch
          %438 = sbr.rel (%p436) target = $region52
        $region51: #{tpu_custom_call.1} parent=43 // pred_region
          %439 = dma.done %s432, 48
        $region52: #{tpu_custom_call.1} parent=43 // pred_fallthru
          _
        %s440 = sand.u32 %s39, 1
        %s441 = scalar_lea.sflag [#allocation6], %s440
        %s442 = sand.u32 %s125, 1
        %s443 = smul.addr %s442, 3
        %s444 = scalar_lea.vmem [#allocation7], %s443
        // Predicated region
        $region53: #{tpu_custom_call.1} parent=43 // pred_check
          %p445 = pneg %p138
        $region54: #{tpu_custom_call.1} parent=43 // pred_check_branch
          %447 = sbr.rel (%p445) target = $region56
        $region55: #{tpu_custom_call.1} parent=43 // pred_region
          %448 = dma.done %s441, 48
        $region56: #{tpu_custom_call.1} parent=43 // pred_fallthru
          _
        %s449 = sand.u32 %s39, 1
        %s450 = scalar_lea.sflag [#allocation9], %s449
        %s451 = sand.u32 %s151, 1
        %s452 = smul.addr %s451, 12
        %s453 = scalar_lea.vmem [#allocation8], %s452
        // Predicated region
        $region57: #{tpu_custom_call.1} parent=43 // pred_check
          %p454 = pneg %p164
        $region58: #{tpu_custom_call.1} parent=43 // pred_check_branch
          %456 = sbr.rel (%p454) target = $region60
        $region59: #{tpu_custom_call.1} parent=43 // pred_region
          %457 = dma.done %s450, 192
        $region60: #{tpu_custom_call.1} parent=43 // pred_fallthru
          _
        %s458 = sand.u32 %s39, 1
        %s459 = scalar_lea.sflag [#allocation9], %s458
        %s460 = sand.u32 %s177, 1
        %s461 = smul.addr %s460, 12
        %s462 = scalar_lea.vmem [#allocation10], %s461
        // Predicated region
        $region61: #{tpu_custom_call.1} parent=43 // pred_check
          %p463 = pneg %p190
        $region62: #{tpu_custom_call.1} parent=43 // pred_check_branch
          %465 = sbr.rel (%p463) target = $region64
        $region63: #{tpu_custom_call.1} parent=43 // pred_region
          %466 = dma.done %s459, 192
        $region64: #{tpu_custom_call.1} parent=43 // pred_fallthru
          _
        %s467 = sand.u32 %s47, 1
        %s468 = scalar_lea.sflag [#allocation3], %s467
        %s469 = sand.u32 %s47, 1
        %s470 = smul.addr %s469, 24
        %s471 = scalar_lea.vmem [#allocation2], %s470
        %p472 = pneg %p60
        %p473 = pneg %p57
        %s474 = sand.u32 %s39, 1
        %s475 = scalar_lea.sflag [#allocation6], %s474
        %s476 = sand.u32 %s73, 1
        %s477 = smul.addr %s476, 3
        %s478 = scalar_lea.vmem [#allocation5], %s477
        %p479 = pneg %p86
        %p480 = pneg %p83
        %p481 = scmp.lt.s32.totalorder %s39, 1
        %s482 = scalar_select %p481, %s39, 1
        %s483 = smul.addr %s482, 3
        %s484 = scalar_lea.vmem %s2, %s483
        %p485 = pneg %p112
        %p486 = pneg %p109
        %s487 = sand.u32 %s39, 1
        %s488 = scalar_lea.sflag [#allocation6], %s487
        %s489 = sand.u32 %s125, 1
        %s490 = smul.addr %s489, 3
        %s491 = scalar_lea.vmem [#allocation7], %s490
        %p492 = pneg %p138
        %p493 = pneg %p135
        %s494 = sand.u32 %s39, 1
        %s495 = scalar_lea.sflag [#allocation9], %s494
        %s496 = sand.u32 %s151, 1
        %s497 = smul.addr %s496, 12
        %s498 = scalar_lea.vmem [#allocation8], %s497
        %p499 = pneg %p164
        %p500 = pneg %p161
        %s501 = sand.u32 %s39, 1
        %s502 = scalar_lea.sflag [#allocation9], %s501
        %s503 = sand.u32 %s177, 1
        %s504 = smul.addr %s503, 12
        %s505 = scalar_lea.vmem [#allocation10], %s504
        %p506 = pneg %p190
        %p507 = pneg %p187
        %p508 = pneg %p216
        %p509 = pneg %p213
        %s510 = sand.u32 %s203, 1
        %s511 = scalar_lea.sflag [#allocation4], %s510
        %s512 = sand.u32 %s203, 1
        %s513 = scalar_lea.vmem [#allocation11], %s512
        %p514 = pneg %p242
        %p515 = pneg %p239
        %s516 = sand.u32 %s39, 1
        %s517 = scalar_lea.sflag [#allocation13], %s516
        %s518 = sand.u32 %s229, 1
        %s519 = scalar_lea.vmem [#allocation12], %s518
        %p520 = pneg %p268
        %p521 = pneg %p265
        %s522 = sand.u32 %s39, 1
        %s523 = scalar_lea.sflag [#allocation13], %s522
        %s524 = sand.u32 %s255, 1
        %s525 = scalar_lea.vmem [#allocation14], %s524
        %p526 = pneg %p294
        %p527 = pneg %p291
        %s528 = sand.u32 %s281, 1
        %s529 = scalar_lea.sflag [#allocation16], %s528
        %s530 = sand.u32 %s281, 1
        %s531 = scalar_lea.vmem [#allocation15], %s530
        %p532 = scmp.lt.s32.totalorder %s39, 1
        %s533 = scalar_select %p532, %s39, 1
        %s534 = smul.addr %s533, 3
        %s535 = scalar_lea.vmem %s2, %s534
        %v536 = vld [vmem:[%s426] sm:$0xff]
        %v537 = vld [vmem:[%s426 + $0x8] sm:$0xff]
        %v538 = vld [vmem:[%s426 + $0x10] sm:$0xff]
        %v539 = vld [vmem:[%s435] sm:$0x7]
        %v540 = vld [vmem:[%s535] sm:$0x7]
        %v541 = vld [vmem:[%s444] sm:$0x7]
        %v542 = vld [vmem:[%s453] sm:$0xff]
        %v543 = vld [vmem:[%s453 + $0x8] sm:$0xf]
        %v544 = vld [vmem:[%s462] sm:$0xff]
        %v545 = vld [vmem:[%s462 + $0x8] sm:$0xf]
        %v546 = vrot.slane %v536, 4
        %v547 = vmax.f32 %v536, %v546
        %v548 = vrot.slane %v547, 2
        %v549 = vmax.f32 %v547, %v548
        %v550 = vrot.slane %v549, 1
        %v551 = vmax.f32 %v549, %v550
        %v552 = vrot.slane %v537, 4
        %v553 = vmax.f32 %v537, %v552
        %v554 = vrot.slane %v553, 2
        %v555 = vmax.f32 %v553, %v554
        %v556 = vrot.slane %v555, 1
        %v557 = vmax.f32 %v555, %v556
        %v558 = vrot.slane %v538, 4
        %v559 = vmax.f32 %v538, %v558
        %v560 = vrot.slane %v559, 2
        %v561 = vmax.f32 %v559, %v560
        %v562 = vrot.slane %v561, 1
        %v563 = vmax.f32 %v561, %v562
        %v564 = vsub.f32 %v536, %v551
        %v565 = vsub.f32 %v537, %v557
        %v566 = vsub.f32 %v538, %v563
        %v567 = vmul.f32 %v564, 1.442695
        %v568 = vpow.pop %v567
        %v569 = vmul.f32 %v565, 1.442695
        %v570 = vpow.pop %v569
        %v571 = vmul.f32 %v566, 1.442695
        %v572 = vpow.pop %v571
        %v573 = vrot.slane %v568, 4
        %v574 = vadd.f32 %v568, %v573
        %v575 = vrot.slane %v574, 2
        %v576 = vadd.f32 %v574, %v575
        %v577 = vrot.slane %v576, 1
        %v578 = vadd.f32 %v576, %v577
        %v579 = vrot.slane %v570, 4
        %v580 = vadd.f32 %v570, %v579
        %v581 = vrot.slane %v580, 2
        %v582 = vadd.f32 %v580, %v581
        %v583 = vrot.slane %v582, 1
        %v584 = vadd.f32 %v582, %v583
        %v585 = vrot.slane %v572, 4
        %v586 = vadd.f32 %v572, %v585
        %v587 = vrot.slane %v586, 2
        %v588 = vadd.f32 %v586, %v587
        %v589 = vrot.slane %v588, 1
        %v590 = vadd.f32 %v588, %v589
        %v591 = vlog2.pop %v578
        %v592 = vmul.f32 %v591, 0.6931472
        %v593 = vlog2.pop %v584
        %v594 = vmul.f32 %v593, 0.6931472
        %v595 = vlog2.pop %v590
        %v596 = vmul.f32 %v595, 0.6931472
        %v597 = vadd.f32 %v551, %v592
        %v598 = vadd.f32 %v557, %v594
        %v599 = vadd.f32 %v563, %v596
        %v600 = vsub.f32 %v597, %v536
        %v601 = vsub.f32 %v598, %v537
        %v602 = vsub.f32 %v599, %v538
        %vm603 = vcmp.gt.s32.totalorder %v539, 0
        %vm604 = vcmp.gt.s32.totalorder %v540, 0
        %v605 = vsel %vm604, 1, 0
        %v606 = vcvt.s32.f32 %v605
        %v608 = vlaneseq
        %v609 = vshrl.u32 %v608, 7
        %v610 = vsub.s32 0, %v609
        %v611 = vrot.slane %v606, %v610
        %v612 = vlaneseq
        %v613 = vshrl.u32 %v612, 7
        %v614 = vsub.s32 1, %v613
        %v615 = vrot.slane %v606, %v614
        %v616 = vlaneseq
        %v617 = vshrl.u32 %v616, 7
        %v618 = vsub.s32 2, %v617
        %v619 = vrot.slane %v606, %v618
        %vm623 = vcmask 1040384
        %v624 = vsel %vm623, %v611, 0.0
        %v625 = vsel %vm623, %v615, 0.0
        %v626 = vadd.f32 %v624, %v625
        %v627 = vsel %vm623, %v619, 0.0
        %v628 = vadd.f32 %v626, %v627
        %629 = vadd.xlane.f32.xlu0 %v628
        %v630 = vpop.xlane.xlu0 %629
        %v631 = vrot.slane %v630, 4
        %v632 = vadd.f32 %v630, %v631
        %v633 = vrot.slane %v632, 2
        %v634 = vadd.f32 %v632, %v633
        %v635 = vrot.slane %v634, 1
        %v636 = vadd.f32 %v634, %v635
        %s637 = vtos %v636
        %vm638 = vcmp.gt.s32.totalorder %v541, 0
        %v639 = vsel %vm638, 1, 0
        %v640 = vcvt.s32.f32 %v639
        %v642 = vlaneseq
        %v643 = vshrl.u32 %v642, 7
        %v644 = vsub.s32 0, %v643
        %v645 = vrot.slane %v640, %v644
        %v646 = vlaneseq
        %v647 = vshrl.u32 %v646, 7
        %v648 = vsub.s32 1, %v647
        %v649 = vrot.slane %v640, %v648
        %v650 = vlaneseq
        %v651 = vshrl.u32 %v650, 7
        %v652 = vsub.s32 2, %v651
        %v653 = vrot.slane %v640, %v652
        %v657 = vsel %vm623, %v645, 0.0
        %v658 = vsel %vm623, %v649, 0.0
        %v659 = vadd.f32 %v657, %v658
        %v660 = vsel %vm623, %v653, 0.0
        %v661 = vadd.f32 %v659, %v660
        %662 = vadd.xlane.f32.xlu0 %v661
        %v663 = vpop.xlane.xlu0 %662
        %v664 = vrot.slane %v663, 4
        %v665 = vadd.f32 %v663, %v664
        %v666 = vrot.slane %v665, 2
        %v667 = vadd.f32 %v665, %v666
        %v668 = vrot.slane %v667, 1
        %v669 = vadd.f32 %v667, %v668
        %s670 = vtos %v669
        %s671 = smul.f32 %s637, 3.0
        %s672 = smul.f32 %s670, 2.0
        %s673 = sadd.f32 %s671, %s672
        %v677 = vcombine.low %v600, %v601
        %v679 = vunpack.c.l.s4 1966171168
        %v680 = vunpack.c.0.s8 %v679
        %v681 = vlaneseq
        %v682 = vshrl.u32 %v681, 7
        %v683 = vsub.s32 %v680, %v682
        %v684 = vrot.slane %v677, %v683
        %v686 = vunpack.c.l.s4 1966171168
        %v687 = vunpack.c.0.s8 %v686
        %v688 = vlaneseq
        %v689 = vshrl.u32 %v688, 7
        %v690 = vsub.s32 %v687, %v689
        %v691 = vrot.slane %v602, %v690
        %v692 = vcombine.low %v684, %v691
        %v694 = vunpack.c.l.s4 1966171168
        %v695 = vunpack.c.0.s8 %v694
        %v696 = vlaneseq
        %v697 = vshrl.u32 %v696, 7
        %v698 = vsub.s32 %v695, %v697
        %v699 = vrot.slane %v692, %v698
        %v701 = vsel %vm603, -inf, %v699
        %v702 = vlaneseq
        %v703 = vand.u32 %v702, 127
        %v704 = vadd.s32 %v703, 128
        %v705 = vadd.s32 %v703, 256
        %v706 = vlaneseq
        %v707 = vshrl.u32 %v706, 7
        %v708 = vadd.s32 %v707, 8
        %v709 = vadd.s32 %v707, 16
        %v710 = vadd.s32 %v707, 24
        %v711 = vadd.s32 %v707, 32
        %v712 = vadd.s32 %v707, 40
        %v713 = vadd.s32 %v707, 48
        %v714 = vadd.s32 %v707, 56
        %v715 = vadd.s32 %v707, 64
        %v716 = vadd.s32 %v707, 72
        %v717 = vadd.s32 %v707, 80
        %v718 = vadd.s32 %v707, 88
        %v719 = vadd.s32 %v707, 96
        %v720 = vadd.s32 %v707, 104
        %v721 = vadd.s32 %v707, 112
        %v722 = vadd.s32 %v707, 120
        %v723 = vadd.s32 %v707, 128
        %v724 = vadd.s32 %v707, 136
        %v725 = vadd.s32 %v707, 144
        %v726 = vadd.s32 %v707, 152
        %v727 = vadd.s32 %v707, 160
        %v728 = vadd.s32 %v707, 168
        %v729 = vadd.s32 %v707, 176
        %v730 = vadd.s32 %v707, 184
        %v731 = vadd.s32 %v707, 192
        %v732 = vadd.s32 %v707, 200
        %v733 = vadd.s32 %v707, 208
        %v734 = vadd.s32 %v707, 216
        %v735 = vadd.s32 %v707, 224
        %v736 = vadd.s32 %v707, 232
        %v737 = vadd.s32 %v707, 240
        %v738 = vadd.s32 %v707, 248
        %v739 = vsub.s32 %v703, %v707
        %v740 = vsub.s32 %v704, %v707
        %v741 = vsub.s32 %v705, %v707
        %v742 = vsub.s32 %v703, %v708
        %v743 = vsub.s32 %v704, %v708
        %v744 = vsub.s32 %v705, %v708
        %v745 = vsub.s32 %v703, %v709
        %v746 = vsub.s32 %v704, %v709
        %v747 = vsub.s32 %v705, %v709
        %v748 = vsub.s32 %v703, %v710
        %v749 = vsub.s32 %v704, %v710
        %v750 = vsub.s32 %v705, %v710
        %v751 = vsub.s32 %v703, %v711
        %v752 = vsub.s32 %v704, %v711
        %v753 = vsub.s32 %v705, %v711
        %v754 = vsub.s32 %v703, %v712
        %v755 = vsub.s32 %v704, %v712
        %v756 = vsub.s32 %v705, %v712
        %v757 = vsub.s32 %v703, %v713
        %v758 = vsub.s32 %v704, %v713
        %v759 = vsub.s32 %v705, %v713
        %v760 = vsub.s32 %v703, %v714
        %v761 = vsub.s32 %v704, %v714
        %v762 = vsub.s32 %v705, %v714
        %v763 = vsub.s32 %v703, %v715
        %v764 = vsub.s32 %v704, %v715
        %v765 = vsub.s32 %v705, %v715
        %v766 = vsub.s32 %v703, %v716
        %v767 = vsub.s32 %v704, %v716
        %v768 = vsub.s32 %v705, %v716
        %v769 = vsub.s32 %v703, %v717
        %v770 = vsub.s32 %v704, %v717
        %v771 = vsub.s32 %v705, %v717
        %v772 = vsub.s32 %v703, %v718
        %v773 = vsub.s32 %v704, %v718
        %v774 = vsub.s32 %v705, %v718
        %v775 = vsub.s32 %v703, %v719
        %v776 = vsub.s32 %v704, %v719
        %v777 = vsub.s32 %v705, %v719
        %v778 = vsub.s32 %v703, %v720
        %v779 = vsub.s32 %v704, %v720
        %v780 = vsub.s32 %v705, %v720
        %v781 = vsub.s32 %v703, %v721
        %v782 = vsub.s32 %v704, %v721
        %v783 = vsub.s32 %v705, %v721
        %v784 = vsub.s32 %v703, %v722
        %v785 = vsub.s32 %v704, %v722
        %v786 = vsub.s32 %v705, %v722
        %v787 = vsub.s32 %v703, %v723
        %v788 = vsub.s32 %v704, %v723
        %v789 = vsub.s32 %v705, %v723
        %v790 = vsub.s32 %v703, %v724
        %v791 = vsub.s32 %v704, %v724
        %v792 = vsub.s32 %v705, %v724
        %v793 = vsub.s32 %v703, %v725
        %v794 = vsub.s32 %v704, %v725
        %v795 = vsub.s32 %v705, %v725
        %v796 = vsub.s32 %v703, %v726
        %v797 = vsub.s32 %v704, %v726
        %v798 = vsub.s32 %v705, %v726
        %v799 = vsub.s32 %v703, %v727
        %v800 = vsub.s32 %v704, %v727
        %v801 = vsub.s32 %v705, %v727
        %v802 = vsub.s32 %v703, %v728
        %v803 = vsub.s32 %v704, %v728
        %v804 = vsub.s32 %v705, %v728
        %v805 = vsub.s32 %v703, %v729
        %v806 = vsub.s32 %v704, %v729
        %v807 = vsub.s32 %v705, %v729
        %v808 = vsub.s32 %v703, %v730
        %v809 = vsub.s32 %v704, %v730
        %v810 = vsub.s32 %v705, %v730
        %v811 = vsub.s32 %v703, %v731
        %v812 = vsub.s32 %v704, %v731
        %v813 = vsub.s32 %v705, %v731
        %v814 = vsub.s32 %v703, %v732
        %v815 = vsub.s32 %v704, %v732
        %v816 = vsub.s32 %v705, %v732
        %v817 = vsub.s32 %v703, %v733
        %v818 = vsub.s32 %v704, %v733
        %v819 = vsub.s32 %v705, %v733
        %v820 = vsub.s32 %v703, %v734
        %v821 = vsub.s32 %v704, %v734
        %v822 = vsub.s32 %v705, %v734
        %v823 = vsub.s32 %v703, %v735
        %v824 = vsub.s32 %v704, %v735
        %v825 = vsub.s32 %v705, %v735
        %v826 = vsub.s32 %v703, %v736
        %v827 = vsub.s32 %v704, %v736
        %v828 = vsub.s32 %v705, %v736
        %v829 = vsub.s32 %v703, %v737
        %v830 = vsub.s32 %v704, %v737
        %v831 = vsub.s32 %v705, %v737
        %v832 = vsub.s32 %v703, %v738
        %v833 = vsub.s32 %v704, %v738
        %v834 = vsub.s32 %v705, %v738
        %vm835 = vcmp.eq.s32.totalorder %v739, 0
        %vm836 = vcmp.eq.s32.totalorder %v740, 0
        %vm837 = vcmp.eq.s32.totalorder %v741, 0
        %vm838 = vcmp.eq.s32.totalorder %v742, 0
        %vm839 = vcmp.eq.s32.totalorder %v743, 0
        %vm840 = vcmp.eq.s32.totalorder %v744, 0
        %vm841 = vcmp.eq.s32.totalorder %v745, 0
        %vm842 = vcmp.eq.s32.totalorder %v746, 0
        %vm843 = vcmp.eq.s32.totalorder %v747, 0
        %vm844 = vcmp.eq.s32.totalorder %v748, 0
        %vm845 = vcmp.eq.s32.totalorder %v749, 0
        %vm846 = vcmp.eq.s32.totalorder %v750, 0
        %vm847 = vcmp.eq.s32.totalorder %v751, 0
        %vm848 = vcmp.eq.s32.totalorder %v752, 0
        %vm849 = vcmp.eq.s32.totalorder %v753, 0
        %vm850 = vcmp.eq.s32.totalorder %v754, 0
        %vm851 = vcmp.eq.s32.totalorder %v755, 0
        %vm852 = vcmp.eq.s32.totalorder %v756, 0
        %vm853 = vcmp.eq.s32.totalorder %v757, 0
        %vm854 = vcmp.eq.s32.totalorder %v758, 0
        %vm855 = vcmp.eq.s32.totalorder %v759, 0
        %vm856 = vcmp.eq.s32.totalorder %v760, 0
        %vm857 = vcmp.eq.s32.totalorder %v761, 0
        %vm858 = vcmp.eq.s32.totalorder %v762, 0
        %vm859 = vcmp.eq.s32.totalorder %v763, 0
        %vm860 = vcmp.eq.s32.totalorder %v764, 0
        %vm861 = vcmp.eq.s32.totalorder %v765, 0
        %vm862 = vcmp.eq.s32.totalorder %v766, 0
        %vm863 = vcmp.eq.s32.totalorder %v767, 0
        %vm864 = vcmp.eq.s32.totalorder %v768, 0
        %vm865 = vcmp.eq.s32.totalorder %v769, 0
        %vm866 = vcmp.eq.s32.totalorder %v770, 0
        %vm867 = vcmp.eq.s32.totalorder %v771, 0
        %vm868 = vcmp.eq.s32.totalorder %v772, 0
        %vm869 = vcmp.eq.s32.totalorder %v773, 0
        %vm870 = vcmp.eq.s32.totalorder %v774, 0
        %vm871 = vcmp.eq.s32.totalorder %v775, 0
        %vm872 = vcmp.eq.s32.totalorder %v776, 0
        %vm873 = vcmp.eq.s32.totalorder %v777, 0
        %vm874 = vcmp.eq.s32.totalorder %v778, 0
        %vm875 = vcmp.eq.s32.totalorder %v779, 0
        %vm876 = vcmp.eq.s32.totalorder %v780, 0
        %vm877 = vcmp.eq.s32.totalorder %v781, 0
        %vm878 = vcmp.eq.s32.totalorder %v782, 0
        %vm879 = vcmp.eq.s32.totalorder %v783, 0
        %vm880 = vcmp.eq.s32.totalorder %v784, 0
        %vm881 = vcmp.eq.s32.totalorder %v785, 0
        %vm882 = vcmp.eq.s32.totalorder %v786, 0
        %vm883 = vcmp.eq.s32.totalorder %v787, 0
        %vm884 = vcmp.eq.s32.totalorder %v788, 0
        %vm885 = vcmp.eq.s32.totalorder %v789, 0
        %vm886 = vcmp.eq.s32.totalorder %v790, 0
        %vm887 = vcmp.eq.s32.totalorder %v791, 0
        %vm888 = vcmp.eq.s32.totalorder %v792, 0
        %vm889 = vcmp.eq.s32.totalorder %v793, 0
        %vm890 = vcmp.eq.s32.totalorder %v794, 0
        %vm891 = vcmp.eq.s32.totalorder %v795, 0
        %vm892 = vcmp.eq.s32.totalorder %v796, 0
        %vm893 = vcmp.eq.s32.totalorder %v797, 0
        %vm894 = vcmp.eq.s32.totalorder %v798, 0
        %vm895 = vcmp.eq.s32.totalorder %v799, 0
        %vm896 = vcmp.eq.s32.totalorder %v800, 0
        %vm897 = vcmp.eq.s32.totalorder %v801, 0
        %vm898 = vcmp.eq.s32.totalorder %v802, 0
        %vm899 = vcmp.eq.s32.totalorder %v803, 0
        %vm900 = vcmp.eq.s32.totalorder %v804, 0
        %vm901 = vcmp.eq.s32.totalorder %v805, 0
        %vm902 = vcmp.eq.s32.totalorder %v806, 0
        %vm903 = vcmp.eq.s32.totalorder %v807, 0
        %vm904 = vcmp.eq.s32.totalorder %v808, 0
        %vm905 = vcmp.eq.s32.totalorder %v809, 0
        %vm906 = vcmp.eq.s32.totalorder %v810, 0
        %vm907 = vcmp.eq.s32.totalorder %v811, 0
        %vm908 = vcmp.eq.s32.totalorder %v812, 0
        %vm909 = vcmp.eq.s32.totalorder %v813, 0
        %vm910 = vcmp.eq.s32.totalorder %v814, 0
        %vm911 = vcmp.eq.s32.totalorder %v815, 0
        %vm912 = vcmp.eq.s32.totalorder %v816, 0
        %vm913 = vcmp.eq.s32.totalorder %v817, 0
        %vm914 = vcmp.eq.s32.totalorder %v818, 0
        %vm915 = vcmp.eq.s32.totalorder %v819, 0
        %vm916 = vcmp.eq.s32.totalorder %v820, 0
        %vm917 = vcmp.eq.s32.totalorder %v821, 0
        %vm918 = vcmp.eq.s32.totalorder %v822, 0
        %vm919 = vcmp.eq.s32.totalorder %v823, 0
        %vm920 = vcmp.eq.s32.totalorder %v824, 0
        %vm921 = vcmp.eq.s32.totalorder %v825, 0
        %vm922 = vcmp.eq.s32.totalorder %v826, 0
        %vm923 = vcmp.eq.s32.totalorder %v827, 0
        %vm924 = vcmp.eq.s32.totalorder %v828, 0
        %vm925 = vcmp.eq.s32.totalorder %v829, 0
        %vm926 = vcmp.eq.s32.totalorder %v830, 0
        %vm927 = vcmp.eq.s32.totalorder %v831, 0
        %vm928 = vcmp.eq.s32.totalorder %v832, 0
        %vm929 = vcmp.eq.s32.totalorder %v833, 0
        %vm930 = vcmp.eq.s32.totalorder %v834, 0
        %v932 = vlaneseq
        %v933 = vshrl.u32 %v932, 7
        %v934 = vsub.s32 0, %v933
        %v935 = vrot.slane %v701, %v934
        %v936 = vlaneseq
        %v937 = vshrl.u32 %v936, 7
        %v938 = vsub.s32 1, %v937
        %v939 = vrot.slane %v701, %v938
        %v940 = vlaneseq
        %v941 = vshrl.u32 %v940, 7
        %v942 = vsub.s32 2, %v941
        %v943 = vrot.slane %v701, %v942
        %v947 = vsel %vm835, %v935, 0.0
        %v948 = vsel %vm836, %v939, 0.0
        %v949 = vsel %vm837, %v943, 0.0
        %v950 = vsel %vm838, %v935, 0.0
        %v951 = vsel %vm839, %v939, 0.0
        %v952 = vsel %vm840, %v943, 0.0
        %v953 = vsel %vm841, %v935, 0.0
        %v954 = vsel %vm842, %v939, 0.0
        %v955 = vsel %vm843, %v943, 0.0
        %v956 = vsel %vm844, %v935, 0.0
        %v957 = vsel %vm845, %v939, 0.0
        %v958 = vsel %vm846, %v943, 0.0
        %v959 = vsel %vm847, %v935, 0.0
        %v960 = vsel %vm848, %v939, 0.0
        %v961 = vsel %vm849, %v943, 0.0
        %v962 = vsel %vm850, %v935, 0.0
        %v963 = vsel %vm851, %v939, 0.0
        %v964 = vsel %vm852, %v943, 0.0
        %v965 = vsel %vm853, %v935, 0.0
        %v966 = vsel %vm854, %v939, 0.0
        %v967 = vsel %vm855, %v943, 0.0
        %v968 = vsel %vm856, %v935, 0.0
        %v969 = vsel %vm857, %v939, 0.0
        %v970 = vsel %vm858, %v943, 0.0
        %v971 = vsel %vm859, %v935, 0.0
        %v972 = vsel %vm860, %v939, 0.0
        %v973 = vsel %vm861, %v943, 0.0
        %v974 = vsel %vm862, %v935, 0.0
        %v975 = vsel %vm863, %v939, 0.0
        %v976 = vsel %vm864, %v943, 0.0
        %v977 = vsel %vm865, %v935, 0.0
        %v978 = vsel %vm866, %v939, 0.0
        %v979 = vsel %vm867, %v943, 0.0
        %v980 = vsel %vm868, %v935, 0.0
        %v981 = vsel %vm869, %v939, 0.0
        %v982 = vsel %vm870, %v943, 0.0
        %v983 = vsel %vm871, %v935, 0.0
        %v984 = vsel %vm872, %v939, 0.0
        %v985 = vsel %vm873, %v943, 0.0
        %v986 = vsel %vm874, %v935, 0.0
        %v987 = vsel %vm875, %v939, 0.0
        %v988 = vsel %vm876, %v943, 0.0
        %v989 = vsel %vm877, %v935, 0.0
        %v990 = vsel %vm878, %v939, 0.0
        %v991 = vsel %vm879, %v943, 0.0
        %v992 = vsel %vm880, %v935, 0.0
        %v993 = vsel %vm881, %v939, 0.0
        %v994 = vsel %vm882, %v943, 0.0
        %v995 = vsel %vm883, %v935, 0.0
        %v996 = vsel %vm884, %v939, 0.0
        %v997 = vsel %vm885, %v943, 0.0
        %v998 = vsel %vm886, %v935, 0.0
        %v999 = vsel %vm887, %v939, 0.0
        %v1000 = vsel %vm888, %v943, 0.0
        %v1001 = vsel %vm889, %v935, 0.0
        %v1002 = vsel %vm890, %v939, 0.0
        %v1003 = vsel %vm891, %v943, 0.0
        %v1004 = vsel %vm892, %v935, 0.0
        %v1005 = vsel %vm893, %v939, 0.0
        %v1006 = vsel %vm894, %v943, 0.0
        %v1007 = vsel %vm895, %v935, 0.0
        %v1008 = vsel %vm896, %v939, 0.0
        %v1009 = vsel %vm897, %v943, 0.0
        %v1010 = vsel %vm898, %v935, 0.0
        %v1011 = vsel %vm899, %v939, 0.0
        %v1012 = vsel %vm900, %v943, 0.0
        %v1013 = vsel %vm901, %v935, 0.0
        %v1014 = vsel %vm902, %v939, 0.0
        %v1015 = vsel %vm903, %v943, 0.0
        %v1016 = vsel %vm904, %v935, 0.0
        %v1017 = vsel %vm905, %v939, 0.0
        %v1018 = vsel %vm906, %v943, 0.0
        %v1019 = vsel %vm907, %v935, 0.0
        %v1020 = vsel %vm908, %v939, 0.0
        %v1021 = vsel %vm909, %v943, 0.0
        %v1022 = vsel %vm910, %v935, 0.0
        %v1023 = vsel %vm911, %v939, 0.0
        %v1024 = vsel %vm912, %v943, 0.0
        %v1025 = vsel %vm913, %v935, 0.0
        %v1026 = vsel %vm914, %v939, 0.0
        %v1027 = vsel %vm915, %v943, 0.0
        %v1028 = vsel %vm916, %v935, 0.0
        %v1029 = vsel %vm917, %v939, 0.0
        %v1030 = vsel %vm918, %v943, 0.0
        %v1031 = vsel %vm919, %v935, 0.0
        %v1032 = vsel %vm920, %v939, 0.0
        %v1033 = vsel %vm921, %v943, 0.0
        %v1034 = vsel %vm922, %v935, 0.0
        %v1035 = vsel %vm923, %v939, 0.0
        %v1036 = vsel %vm924, %v943, 0.0
        %v1037 = vsel %vm925, %v935, 0.0
        %v1038 = vsel %vm926, %v939, 0.0
        %v1039 = vsel %vm927, %v943, 0.0
        %v1040 = vsel %vm928, %v935, 0.0
        %v1041 = vsel %vm929, %v939, 0.0
        %v1042 = vsel %vm930, %v943, 0.0
        %v1043 = vadd.f32 %v947, %v948
        %v1044 = vadd.f32 %v1043, %v949
        %1045 = vadd.xlane.f32.xlu0 %v1044
        %v1046 = vpop.xlane.xlu0 %1045
        %v1047 = vadd.f32 %v950, %v951
        %v1048 = vadd.f32 %v1047, %v952
        %1049 = vadd.xlane.f32.xlu0 %v1048
        %v1050 = vpop.xlane.xlu0 %1049
        %v1051 = vadd.f32 %v953, %v954
        %v1052 = vadd.f32 %v1051, %v955
        %1053 = vadd.xlane.f32.xlu0 %v1052
        %v1054 = vpop.xlane.xlu0 %1053
        %v1055 = vadd.f32 %v956, %v957
        %v1056 = vadd.f32 %v1055, %v958
        %1057 = vadd.xlane.f32.xlu0 %v1056
        %v1058 = vpop.xlane.xlu0 %1057
        %v1059 = vadd.f32 %v959, %v960
        %v1060 = vadd.f32 %v1059, %v961
        %1061 = vadd.xlane.f32.xlu0 %v1060
        %v1062 = vpop.xlane.xlu0 %1061
        %v1063 = vadd.f32 %v962, %v963
        %v1064 = vadd.f32 %v1063, %v964
        %1065 = vadd.xlane.f32.xlu0 %v1064
        %v1066 = vpop.xlane.xlu0 %1065
        %v1067 = vadd.f32 %v965, %v966
        %v1068 = vadd.f32 %v1067, %v967
        %1069 = vadd.xlane.f32.xlu0 %v1068
        %v1070 = vpop.xlane.xlu0 %1069
        %v1071 = vadd.f32 %v968, %v969
        %v1072 = vadd.f32 %v1071, %v970
        %1073 = vadd.xlane.f32.xlu0 %v1072
        %v1074 = vpop.xlane.xlu0 %1073
        %v1075 = vadd.f32 %v971, %v972
        %v1076 = vadd.f32 %v1075, %v973
        %1077 = vadd.xlane.f32.xlu0 %v1076
        %v1078 = vpop.xlane.xlu0 %1077
        %v1079 = vadd.f32 %v974, %v975
        %v1080 = vadd.f32 %v1079, %v976
        %1081 = vadd.xlane.f32.xlu0 %v1080
        %v1082 = vpop.xlane.xlu0 %1081
        %v1083 = vadd.f32 %v977, %v978
        %v1084 = vadd.f32 %v1083, %v979
        %1085 = vadd.xlane.f32.xlu0 %v1084
        %v1086 = vpop.xlane.xlu0 %1085
        %v1087 = vadd.f32 %v980, %v981
        %v1088 = vadd.f32 %v1087, %v982
        %1089 = vadd.xlane.f32.xlu0 %v1088
        %v1090 = vpop.xlane.xlu0 %1089
        %v1091 = vadd.f32 %v983, %v984
        %v1092 = vadd.f32 %v1091, %v985
        %1093 = vadd.xlane.f32.xlu0 %v1092
        %v1094 = vpop.xlane.xlu0 %1093
        %v1095 = vadd.f32 %v986, %v987
        %v1096 = vadd.f32 %v1095, %v988
        %1097 = vadd.xlane.f32.xlu0 %v1096
        %v1098 = vpop.xlane.xlu0 %1097
        %v1099 = vadd.f32 %v989, %v990
        %v1100 = vadd.f32 %v1099, %v991
        %1101 = vadd.xlane.f32.xlu0 %v1100
        %v1102 = vpop.xlane.xlu0 %1101
        %v1103 = vadd.f32 %v992, %v993
        %v1104 = vadd.f32 %v1103, %v994
        %1105 = vadd.xlane.f32.xlu0 %v1104
        %v1106 = vpop.xlane.xlu0 %1105
        %v1107 = vadd.f32 %v995, %v996
        %v1108 = vadd.f32 %v1107, %v997
        %1109 = vadd.xlane.f32.xlu0 %v1108
        %v1110 = vpop.xlane.xlu0 %1109
        %v1111 = vadd.f32 %v998, %v999
        %v1112 = vadd.f32 %v1111, %v1000
        %1113 = vadd.xlane.f32.xlu0 %v1112
        %v1114 = vpop.xlane.xlu0 %1113
        %v1115 = vadd.f32 %v1001, %v1002
        %v1116 = vadd.f32 %v1115, %v1003
        %1117 = vadd.xlane.f32.xlu0 %v1116
        %v1118 = vpop.xlane.xlu0 %1117
        %v1119 = vadd.f32 %v1004, %v1005
        %v1120 = vadd.f32 %v1119, %v1006
        %1121 = vadd.xlane.f32.xlu0 %v1120
        %v1122 = vpop.xlane.xlu0 %1121
        %v1123 = vadd.f32 %v1007, %v1008
        %v1124 = vadd.f32 %v1123, %v1009
        %1125 = vadd.xlane.f32.xlu0 %v1124
        %v1126 = vpop.xlane.xlu0 %1125
        %v1127 = vadd.f32 %v1010, %v1011
        %v1128 = vadd.f32 %v1127, %v1012
        %1129 = vadd.xlane.f32.xlu0 %v1128
        %v1130 = vpop.xlane.xlu0 %1129
        %v1131 = vadd.f32 %v1013, %v1014
        %v1132 = vadd.f32 %v1131, %v1015
        %1133 = vadd.xlane.f32.xlu0 %v1132
        %v1134 = vpop.xlane.xlu0 %1133
        %v1135 = vadd.f32 %v1016, %v1017
        %v1136 = vadd.f32 %v1135, %v1018
        %1137 = vadd.xlane.f32.xlu0 %v1136
        %v1138 = vpop.xlane.xlu0 %1137
        %v1139 = vadd.f32 %v1019, %v1020
        %v1140 = vadd.f32 %v1139, %v1021
        %1141 = vadd.xlane.f32.xlu0 %v1140
        %v1142 = vpop.xlane.xlu0 %1141
        %v1143 = vadd.f32 %v1022, %v1023
        %v1144 = vadd.f32 %v1143, %v1024
        %1145 = vadd.xlane.f32.xlu0 %v1144
        %v1146 = vpop.xlane.xlu0 %1145
        %v1147 = vadd.f32 %v1025, %v1026
        %v1148 = vadd.f32 %v1147, %v1027
        %1149 = vadd.xlane.f32.xlu0 %v1148
        %v1150 = vpop.xlane.xlu0 %1149
        %v1151 = vadd.f32 %v1028, %v1029
        %v1152 = vadd.f32 %v1151, %v1030
        %1153 = vadd.xlane.f32.xlu0 %v1152
        %v1154 = vpop.xlane.xlu0 %1153
        %v1155 = vadd.f32 %v1031, %v1032
        %v1156 = vadd.f32 %v1155, %v1033
        %1157 = vadd.xlane.f32.xlu0 %v1156
        %v1158 = vpop.xlane.xlu0 %1157
        %v1159 = vadd.f32 %v1034, %v1035
        %v1160 = vadd.f32 %v1159, %v1036
        %1161 = vadd.xlane.f32.xlu0 %v1160
        %v1162 = vpop.xlane.xlu0 %1161
        %v1163 = vadd.f32 %v1037, %v1038
        %v1164 = vadd.f32 %v1163, %v1039
        %1165 = vadd.xlane.f32.xlu0 %v1164
        %v1166 = vpop.xlane.xlu0 %1165
        %v1167 = vadd.f32 %v1040, %v1041
        %v1168 = vadd.f32 %v1167, %v1042
        %1169 = vadd.xlane.f32.xlu0 %v1168
        %v1170 = vpop.xlane.xlu0 %1169
        %vm1171 = vcmp.gt.f32.partialorder %v1046, %v935
        %vm1172 = vcmp.gt.f32.partialorder %v1046, %v939
        %vm1173 = vcmp.gt.f32.partialorder %v1046, %v943
        %vm1174 = vcmp.gt.f32.partialorder %v1050, %v935
        %vm1175 = vcmp.gt.f32.partialorder %v1050, %v939
        %vm1176 = vcmp.gt.f32.partialorder %v1050, %v943
        %vm1177 = vcmp.gt.f32.partialorder %v1054, %v935
        %vm1178 = vcmp.gt.f32.partialorder %v1054, %v939
        %vm1179 = vcmp.gt.f32.partialorder %v1054, %v943
        %vm1180 = vcmp.gt.f32.partialorder %v1058, %v935
        %vm1181 = vcmp.gt.f32.partialorder %v1058, %v939
        %vm1182 = vcmp.gt.f32.partialorder %v1058, %v943
        %vm1183 = vcmp.gt.f32.partialorder %v1062, %v935
        %vm1184 = vcmp.gt.f32.partialorder %v1062, %v939
        %vm1185 = vcmp.gt.f32.partialorder %v1062, %v943
        %vm1186 = vcmp.gt.f32.partialorder %v1066, %v935
        %vm1187 = vcmp.gt.f32.partialorder %v1066, %v939
        %vm1188 = vcmp.gt.f32.partialorder %v1066, %v943
        %vm1189 = vcmp.gt.f32.partialorder %v1070, %v935
        %vm1190 = vcmp.gt.f32.partialorder %v1070, %v939
        %vm1191 = vcmp.gt.f32.partialorder %v1070, %v943
        %vm1192 = vcmp.gt.f32.partialorder %v1074, %v935
        %vm1193 = vcmp.gt.f32.partialorder %v1074, %v939
        %vm1194 = vcmp.gt.f32.partialorder %v1074, %v943
        %vm1195 = vcmp.gt.f32.partialorder %v1078, %v935
        %vm1196 = vcmp.gt.f32.partialorder %v1078, %v939
        %vm1197 = vcmp.gt.f32.partialorder %v1078, %v943
        %vm1198 = vcmp.gt.f32.partialorder %v1082, %v935
        %vm1199 = vcmp.gt.f32.partialorder %v1082, %v939
        %vm1200 = vcmp.gt.f32.partialorder %v1082, %v943
        %vm1201 = vcmp.gt.f32.partialorder %v1086, %v935
        %vm1202 = vcmp.gt.f32.partialorder %v1086, %v939
        %vm1203 = vcmp.gt.f32.partialorder %v1086, %v943
        %vm1204 = vcmp.gt.f32.partialorder %v1090, %v935
        %vm1205 = vcmp.gt.f32.partialorder %v1090, %v939
        %vm1206 = vcmp.gt.f32.partialorder %v1090, %v943
        %vm1207 = vcmp.gt.f32.partialorder %v1094, %v935
        %vm1208 = vcmp.gt.f32.partialorder %v1094, %v939
        %vm1209 = vcmp.gt.f32.partialorder %v1094, %v943
        %vm1210 = vcmp.gt.f32.partialorder %v1098, %v935
        %vm1211 = vcmp.gt.f32.partialorder %v1098, %v939
        %vm1212 = vcmp.gt.f32.partialorder %v1098, %v943
        %vm1213 = vcmp.gt.f32.partialorder %v1102, %v935
        %vm1214 = vcmp.gt.f32.partialorder %v1102, %v939
        %vm1215 = vcmp.gt.f32.partialorder %v1102, %v943
        %vm1216 = vcmp.gt.f32.partialorder %v1106, %v935
        %vm1217 = vcmp.gt.f32.partialorder %v1106, %v939
        %vm1218 = vcmp.gt.f32.partialorder %v1106, %v943
        %vm1219 = vcmp.gt.f32.partialorder %v1110, %v935
        %vm1220 = vcmp.gt.f32.partialorder %v1110, %v939
        %vm1221 = vcmp.gt.f32.partialorder %v1110, %v943
        %vm1222 = vcmp.gt.f32.partialorder %v1114, %v935
        %vm1223 = vcmp.gt.f32.partialorder %v1114, %v939
        %vm1224 = vcmp.gt.f32.partialorder %v1114, %v943
        %vm1225 = vcmp.gt.f32.partialorder %v1118, %v935
        %vm1226 = vcmp.gt.f32.partialorder %v1118, %v939
        %vm1227 = vcmp.gt.f32.partialorder %v1118, %v943
        %vm1228 = vcmp.gt.f32.partialorder %v1122, %v935
        %vm1229 = vcmp.gt.f32.partialorder %v1122, %v939
        %vm1230 = vcmp.gt.f32.partialorder %v1122, %v943
        %vm1231 = vcmp.gt.f32.partialorder %v1126, %v935
        %vm1232 = vcmp.gt.f32.partialorder %v1126, %v939
        %vm1233 = vcmp.gt.f32.partialorder %v1126, %v943
        %vm1234 = vcmp.gt.f32.partialorder %v1130, %v935
        %vm1235 = vcmp.gt.f32.partialorder %v1130, %v939
        %vm1236 = vcmp.gt.f32.partialorder %v1130, %v943
        %vm1237 = vcmp.gt.f32.partialorder %v1134, %v935
        %vm1238 = vcmp.gt.f32.partialorder %v1134, %v939
        %vm1239 = vcmp.gt.f32.partialorder %v1134, %v943
        %vm1240 = vcmp.gt.f32.partialorder %v1138, %v935
        %vm1241 = vcmp.gt.f32.partialorder %v1138, %v939
        %vm1242 = vcmp.gt.f32.partialorder %v1138, %v943
        %vm1243 = vcmp.gt.f32.partialorder %v1142, %v935
        %vm1244 = vcmp.gt.f32.partialorder %v1142, %v939
        %vm1245 = vcmp.gt.f32.partialorder %v1142, %v943
        %vm1246 = vcmp.gt.f32.partialorder %v1146, %v935
        %vm1247 = vcmp.gt.f32.partialorder %v1146, %v939
        %vm1248 = vcmp.gt.f32.partialorder %v1146, %v943
        %vm1249 = vcmp.gt.f32.partialorder %v1150, %v935
        %vm1250 = vcmp.gt.f32.partialorder %v1150, %v939
        %vm1251 = vcmp.gt.f32.partialorder %v1150, %v943
        %vm1252 = vcmp.gt.f32.partialorder %v1154, %v935
        %vm1253 = vcmp.gt.f32.partialorder %v1154, %v939
        %vm1254 = vcmp.gt.f32.partialorder %v1154, %v943
        %vm1255 = vcmp.gt.f32.partialorder %v1158, %v935
        %vm1256 = vcmp.gt.f32.partialorder %v1158, %v939
        %vm1257 = vcmp.gt.f32.partialorder %v1158, %v943
        %vm1258 = vcmp.gt.f32.partialorder %v1162, %v935
        %vm1259 = vcmp.gt.f32.partialorder %v1162, %v939
        %vm1260 = vcmp.gt.f32.partialorder %v1162, %v943
        %vm1261 = vcmp.gt.f32.partialorder %v1166, %v935
        %vm1262 = vcmp.gt.f32.partialorder %v1166, %v939
        %vm1263 = vcmp.gt.f32.partialorder %v1166, %v943
        %vm1264 = vcmp.gt.f32.partialorder %v1170, %v935
        %vm1265 = vcmp.gt.f32.partialorder %v1170, %v939
        %vm1266 = vcmp.gt.f32.partialorder %v1170, %v943
        %vm1267 = vcmp.eq.f32.partialorder %v1046, %v935
        %vm1268 = vcmp.eq.f32.partialorder %v1046, %v939
        %vm1269 = vcmp.eq.f32.partialorder %v1046, %v943
        %vm1270 = vcmp.eq.f32.partialorder %v1050, %v935
        %vm1271 = vcmp.eq.f32.partialorder %v1050, %v939
        %vm1272 = vcmp.eq.f32.partialorder %v1050, %v943
        %vm1273 = vcmp.eq.f32.partialorder %v1054, %v935
        %vm1274 = vcmp.eq.f32.partialorder %v1054, %v939
        %vm1275 = vcmp.eq.f32.partialorder %v1054, %v943
        %vm1276 = vcmp.eq.f32.partialorder %v1058, %v935
        %vm1277 = vcmp.eq.f32.partialorder %v1058, %v939
        %vm1278 = vcmp.eq.f32.partialorder %v1058, %v943
        %vm1279 = vcmp.eq.f32.partialorder %v1062, %v935
        %vm1280 = vcmp.eq.f32.partialorder %v1062, %v939
        %vm1281 = vcmp.eq.f32.partialorder %v1062, %v943
        %vm1282 = vcmp.eq.f32.partialorder %v1066, %v935
        %vm1283 = vcmp.eq.f32.partialorder %v1066, %v939
        %vm1284 = vcmp.eq.f32.partialorder %v1066, %v943
        %vm1285 = vcmp.eq.f32.partialorder %v1070, %v935
        %vm1286 = vcmp.eq.f32.partialorder %v1070, %v939
        %vm1287 = vcmp.eq.f32.partialorder %v1070, %v943
        %vm1288 = vcmp.eq.f32.partialorder %v1074, %v935
        %vm1289 = vcmp.eq.f32.partialorder %v1074, %v939
        %vm1290 = vcmp.eq.f32.partialorder %v1074, %v943
        %vm1291 = vcmp.eq.f32.partialorder %v1078, %v935
        %vm1292 = vcmp.eq.f32.partialorder %v1078, %v939
        %vm1293 = vcmp.eq.f32.partialorder %v1078, %v943
        %vm1294 = vcmp.eq.f32.partialorder %v1082, %v935
        %vm1295 = vcmp.eq.f32.partialorder %v1082, %v939
        %vm1296 = vcmp.eq.f32.partialorder %v1082, %v943
        %vm1297 = vcmp.eq.f32.partialorder %v1086, %v935
        %vm1298 = vcmp.eq.f32.partialorder %v1086, %v939
        %vm1299 = vcmp.eq.f32.partialorder %v1086, %v943
        %vm1300 = vcmp.eq.f32.partialorder %v1090, %v935
        %vm1301 = vcmp.eq.f32.partialorder %v1090, %v939
        %vm1302 = vcmp.eq.f32.partialorder %v1090, %v943
        %vm1303 = vcmp.eq.f32.partialorder %v1094, %v935
        %vm1304 = vcmp.eq.f32.partialorder %v1094, %v939
        %vm1305 = vcmp.eq.f32.partialorder %v1094, %v943
        %vm1306 = vcmp.eq.f32.partialorder %v1098, %v935
        %vm1307 = vcmp.eq.f32.partialorder %v1098, %v939
        %vm1308 = vcmp.eq.f32.partialorder %v1098, %v943
        %vm1309 = vcmp.eq.f32.partialorder %v1102, %v935
        %vm1310 = vcmp.eq.f32.partialorder %v1102, %v939
        %vm1311 = vcmp.eq.f32.partialorder %v1102, %v943
        %vm1312 = vcmp.eq.f32.partialorder %v1106, %v935
        %vm1313 = vcmp.eq.f32.partialorder %v1106, %v939
        %vm1314 = vcmp.eq.f32.partialorder %v1106, %v943
        %vm1315 = vcmp.eq.f32.partialorder %v1110, %v935
        %vm1316 = vcmp.eq.f32.partialorder %v1110, %v939
        %vm1317 = vcmp.eq.f32.partialorder %v1110, %v943
        %vm1318 = vcmp.eq.f32.partialorder %v1114, %v935
        %vm1319 = vcmp.eq.f32.partialorder %v1114, %v939
        %vm1320 = vcmp.eq.f32.partialorder %v1114, %v943
        %vm1321 = vcmp.eq.f32.partialorder %v1118, %v935
        %vm1322 = vcmp.eq.f32.partialorder %v1118, %v939
        %vm1323 = vcmp.eq.f32.partialorder %v1118, %v943
        %vm1324 = vcmp.eq.f32.partialorder %v1122, %v935
        %vm1325 = vcmp.eq.f32.partialorder %v1122, %v939
        %vm1326 = vcmp.eq.f32.partialorder %v1122, %v943
        %vm1327 = vcmp.eq.f32.partialorder %v1126, %v935
        %vm1328 = vcmp.eq.f32.partialorder %v1126, %v939
        %vm1329 = vcmp.eq.f32.partialorder %v1126, %v943
        %vm1330 = vcmp.eq.f32.partialorder %v1130, %v935
        %vm1331 = vcmp.eq.f32.partialorder %v1130, %v939
        %vm1332 = vcmp.eq.f32.partialorder %v1130, %v943
        %vm1333 = vcmp.eq.f32.partialorder %v1134, %v935
        %vm1334 = vcmp.eq.f32.partialorder %v1134, %v939
        %vm1335 = vcmp.eq.f32.partialorder %v1134, %v943
        %vm1336 = vcmp.eq.f32.partialorder %v1138, %v935
        %vm1337 = vcmp.eq.f32.partialorder %v1138, %v939
        %vm1338 = vcmp.eq.f32.partialorder %v1138, %v943
        %vm1339 = vcmp.eq.f32.partialorder %v1142, %v935
        %vm1340 = vcmp.eq.f32.partialorder %v1142, %v939
        %vm1341 = vcmp.eq.f32.partialorder %v1142, %v943
        %vm1342 = vcmp.eq.f32.partialorder %v1146, %v935
        %vm1343 = vcmp.eq.f32.partialorder %v1146, %v939
        %vm1344 = vcmp.eq.f32.partialorder %v1146, %v943
        %vm1345 = vcmp.eq.f32.partialorder %v1150, %v935
        %vm1346 = vcmp.eq.f32.partialorder %v1150, %v939
        %vm1347 = vcmp.eq.f32.partialorder %v1150, %v943
        %vm1348 = vcmp.eq.f32.partialorder %v1154, %v935
        %vm1349 = vcmp.eq.f32.partialorder %v1154, %v939
        %vm1350 = vcmp.eq.f32.partialorder %v1154, %v943
        %vm1351 = vcmp.eq.f32.partialorder %v1158, %v935
        %vm1352 = vcmp.eq.f32.partialorder %v1158, %v939
        %vm1353 = vcmp.eq.f32.partialorder %v1158, %v943
        %vm1354 = vcmp.eq.f32.partialorder %v1162, %v935
        %vm1355 = vcmp.eq.f32.partialorder %v1162, %v939
        %vm1356 = vcmp.eq.f32.partialorder %v1162, %v943
        %vm1357 = vcmp.eq.f32.partialorder %v1166, %v935
        %vm1358 = vcmp.eq.f32.partialorder %v1166, %v939
        %vm1359 = vcmp.eq.f32.partialorder %v1166, %v943
        %vm1360 = vcmp.eq.f32.partialorder %v1170, %v935
        %vm1361 = vcmp.eq.f32.partialorder %v1170, %v939
        %vm1362 = vcmp.eq.f32.partialorder %v1170, %v943
        %vm1363 = vcmp.gt.s32.totalorder %v739, 0
        %vm1364 = vcmp.gt.s32.totalorder %v740, 0
        %vm1365 = vcmp.gt.s32.totalorder %v741, 0
        %vm1366 = vcmp.gt.s32.totalorder %v742, 0
        %vm1367 = vcmp.gt.s32.totalorder %v743, 0
        %vm1368 = vcmp.gt.s32.totalorder %v744, 0
        %vm1369 = vcmp.gt.s32.totalorder %v745, 0
        %vm1370 = vcmp.gt.s32.totalorder %v746, 0
        %vm1371 = vcmp.gt.s32.totalorder %v747, 0
        %vm1372 = vcmp.gt.s32.totalorder %v748, 0
        %vm1373 = vcmp.gt.s32.totalorder %v749, 0
        %vm1374 = vcmp.gt.s32.totalorder %v750, 0
        %vm1375 = vcmp.gt.s32.totalorder %v751, 0
        %vm1376 = vcmp.gt.s32.totalorder %v752, 0
        %vm1377 = vcmp.gt.s32.totalorder %v753, 0
        %vm1378 = vcmp.gt.s32.totalorder %v754, 0
        %vm1379 = vcmp.gt.s32.totalorder %v755, 0
        %vm1380 = vcmp.gt.s32.totalorder %v756, 0
        %vm1381 = vcmp.gt.s32.totalorder %v757, 0
        %vm1382 = vcmp.gt.s32.totalorder %v758, 0
        %vm1383 = vcmp.gt.s32.totalorder %v759, 0
        %vm1384 = vcmp.gt.s32.totalorder %v760, 0
        %vm1385 = vcmp.gt.s32.totalorder %v761, 0
        %vm1386 = vcmp.gt.s32.totalorder %v762, 0
        %vm1387 = vcmp.gt.s32.totalorder %v763, 0
        %vm1388 = vcmp.gt.s32.totalorder %v764, 0
        %vm1389 = vcmp.gt.s32.totalorder %v765, 0
        %vm1390 = vcmp.gt.s32.totalorder %v766, 0
        %vm1391 = vcmp.gt.s32.totalorder %v767, 0
        %vm1392 = vcmp.gt.s32.totalorder %v768, 0
        %vm1393 = vcmp.gt.s32.totalorder %v769, 0
        %vm1394 = vcmp.gt.s32.totalorder %v770, 0
        %vm1395 = vcmp.gt.s32.totalorder %v771, 0
        %vm1396 = vcmp.gt.s32.totalorder %v772, 0
        %vm1397 = vcmp.gt.s32.totalorder %v773, 0
        %vm1398 = vcmp.gt.s32.totalorder %v774, 0
        %vm1399 = vcmp.gt.s32.totalorder %v775, 0
        %vm1400 = vcmp.gt.s32.totalorder %v776, 0
        %vm1401 = vcmp.gt.s32.totalorder %v777, 0
        %vm1402 = vcmp.gt.s32.totalorder %v778, 0
        %vm1403 = vcmp.gt.s32.totalorder %v779, 0
        %vm1404 = vcmp.gt.s32.totalorder %v780, 0
        %vm1405 = vcmp.gt.s32.totalorder %v781, 0
        %vm1406 = vcmp.gt.s32.totalorder %v782, 0
        %vm1407 = vcmp.gt.s32.totalorder %v783, 0
        %vm1408 = vcmp.gt.s32.totalorder %v784, 0
        %vm1409 = vcmp.gt.s32.totalorder %v785, 0
        %vm1410 = vcmp.gt.s32.totalorder %v786, 0
        %vm1411 = vcmp.gt.s32.totalorder %v787, 0
        %vm1412 = vcmp.gt.s32.totalorder %v788, 0
        %vm1413 = vcmp.gt.s32.totalorder %v789, 0
        %vm1414 = vcmp.gt.s32.totalorder %v790, 0
        %vm1415 = vcmp.gt.s32.totalorder %v791, 0
        %vm1416 = vcmp.gt.s32.totalorder %v792, 0
        %vm1417 = vcmp.gt.s32.totalorder %v793, 0
        %vm1418 = vcmp.gt.s32.totalorder %v794, 0
        %vm1419 = vcmp.gt.s32.totalorder %v795, 0
        %vm1420 = vcmp.gt.s32.totalorder %v796, 0
        %vm1421 = vcmp.gt.s32.totalorder %v797, 0
        %vm1422 = vcmp.gt.s32.totalorder %v798, 0
        %vm1423 = vcmp.gt.s32.totalorder %v799, 0
        %vm1424 = vcmp.gt.s32.totalorder %v800, 0
        %vm1425 = vcmp.gt.s32.totalorder %v801, 0
        %vm1426 = vcmp.gt.s32.totalorder %v802, 0
        %vm1427 = vcmp.gt.s32.totalorder %v803, 0
        %vm1428 = vcmp.gt.s32.totalorder %v804, 0
        %vm1429 = vcmp.gt.s32.totalorder %v805, 0
        %vm1430 = vcmp.gt.s32.totalorder %v806, 0
        %vm1431 = vcmp.gt.s32.totalorder %v807, 0
        %vm1432 = vcmp.gt.s32.totalorder %v808, 0
        %vm1433 = vcmp.gt.s32.totalorder %v809, 0
        %vm1434 = vcmp.gt.s32.totalorder %v810, 0
        %vm1435 = vcmp.gt.s32.totalorder %v811, 0
        %vm1436 = vcmp.gt.s32.totalorder %v812, 0
        %vm1437 = vcmp.gt.s32.totalorder %v813, 0
        %vm1438 = vcmp.gt.s32.totalorder %v814, 0
        %vm1439 = vcmp.gt.s32.totalorder %v815, 0
        %vm1440 = vcmp.gt.s32.totalorder %v816, 0
        %vm1441 = vcmp.gt.s32.totalorder %v817, 0
        %vm1442 = vcmp.gt.s32.totalorder %v818, 0
        %vm1443 = vcmp.gt.s32.totalorder %v819, 0
        %vm1444 = vcmp.gt.s32.totalorder %v820, 0
        %vm1445 = vcmp.gt.s32.totalorder %v821, 0
        %vm1446 = vcmp.gt.s32.totalorder %v822, 0
        %vm1447 = vcmp.gt.s32.totalorder %v823, 0
        %vm1448 = vcmp.gt.s32.totalorder %v824, 0
        %vm1449 = vcmp.gt.s32.totalorder %v825, 0
        %vm1450 = vcmp.gt.s32.totalorder %v826, 0
        %vm1451 = vcmp.gt.s32.totalorder %v827, 0
        %vm1452 = vcmp.gt.s32.totalorder %v828, 0
        %vm1453 = vcmp.gt.s32.totalorder %v829, 0
        %vm1454 = vcmp.gt.s32.totalorder %v830, 0
        %vm1455 = vcmp.gt.s32.totalorder %v831, 0
        %vm1456 = vcmp.gt.s32.totalorder %v832, 0
        %vm1457 = vcmp.gt.s32.totalorder %v833, 0
        %vm1458 = vcmp.gt.s32.totalorder %v834, 0
        %vm1459 = vmand %vm1267, %vm1363
        %vm1460 = vmand %vm1268, %vm1364
        %vm1461 = vmand %vm1269, %vm1365
        %vm1462 = vmand %vm1270, %vm1366
        %vm1463 = vmand %vm1271, %vm1367
        %vm1464 = vmand %vm1272, %vm1368
        %vm1465 = vmand %vm1273, %vm1369
        %vm1466 = vmand %vm1274, %vm1370
        %vm1467 = vmand %vm1275, %vm1371
        %vm1468 = vmand %vm1276, %vm1372
        %vm1469 = vmand %vm1277, %vm1373
        %vm1470 = vmand %vm1278, %vm1374
        %vm1471 = vmand %vm1279, %vm1375
        %vm1472 = vmand %vm1280, %vm1376
        %vm1473 = vmand %vm1281, %vm1377
        %vm1474 = vmand %vm1282, %vm1378
        %vm1475 = vmand %vm1283, %vm1379
        %vm1476 = vmand %vm1284, %vm1380
        %vm1477 = vmand %vm1285, %vm1381
        %vm1478 = vmand %vm1286, %vm1382
        %vm1479 = vmand %vm1287, %vm1383
        %vm1480 = vmand %vm1288, %vm1384
        %vm1481 = vmand %vm1289, %vm1385
        %vm1482 = vmand %vm1290, %vm1386
        %vm1483 = vmand %vm1291, %vm1387
        %vm1484 = vmand %vm1292, %vm1388
        %vm1485 = vmand %vm1293, %vm1389
        %vm1486 = vmand %vm1294, %vm1390
        %vm1487 = vmand %vm1295, %vm1391
        %vm1488 = vmand %vm1296, %vm1392
        %vm1489 = vmand %vm1297, %vm1393
        %vm1490 = vmand %vm1298, %vm1394
        %vm1491 = vmand %vm1299, %vm1395
        %vm1492 = vmand %vm1300, %vm1396
        %vm1493 = vmand %vm1301, %vm1397
        %vm1494 = vmand %vm1302, %vm1398
        %vm1495 = vmand %vm1303, %vm1399
        %vm1496 = vmand %vm1304, %vm1400
        %vm1497 = vmand %vm1305, %vm1401
        %vm1498 = vmand %vm1306, %vm1402
        %vm1499 = vmand %vm1307, %vm1403
        %vm1500 = vmand %vm1308, %vm1404
        %vm1501 = vmand %vm1309, %vm1405
        %vm1502 = vmand %vm1310, %vm1406
        %vm1503 = vmand %vm1311, %vm1407
        %vm1504 = vmand %vm1312, %vm1408
        %vm1505 = vmand %vm1313, %vm1409
        %vm1506 = vmand %vm1314, %vm1410
        %vm1507 = vmand %vm1315, %vm1411
        %vm1508 = vmand %vm1316, %vm1412
        %vm1509 = vmand %vm1317, %vm1413
        %vm1510 = vmand %vm1318, %vm1414
        %vm1511 = vmand %vm1319, %vm1415
        %vm1512 = vmand %vm1320, %vm1416
        %vm1513 = vmand %vm1321, %vm1417
        %vm1514 = vmand %vm1322, %vm1418
        %vm1515 = vmand %vm1323, %vm1419
        %vm1516 = vmand %vm1324, %vm1420
        %vm1517 = vmand %vm1325, %vm1421
        %vm1518 = vmand %vm1326, %vm1422
        %vm1519 = vmand %vm1327, %vm1423
        %vm1520 = vmand %vm1328, %vm1424
        %vm1521 = vmand %vm1329, %vm1425
        %vm1522 = vmand %vm1330, %vm1426
        %vm1523 = vmand %vm1331, %vm1427
        %vm1524 = vmand %vm1332, %vm1428
        %vm1525 = vmand %vm1333, %vm1429
        %vm1526 = vmand %vm1334, %vm1430
        %vm1527 = vmand %vm1335, %vm1431
        %vm1528 = vmand %vm1336, %vm1432
        %vm1529 = vmand %vm1337, %vm1433
        %vm1530 = vmand %vm1338, %vm1434
        %vm1531 = vmand %vm1339, %vm1435
        %vm1532 = vmand %vm1340, %vm1436
        %vm1533 = vmand %vm1341, %vm1437
        %vm1534 = vmand %vm1342, %vm1438
        %vm1535 = vmand %vm1343, %vm1439
        %vm1536 = vmand %vm1344, %vm1440
        %vm1537 = vmand %vm1345, %vm1441
        %vm1538 = vmand %vm1346, %vm1442
        %vm1539 = vmand %vm1347, %vm1443
        %vm1540 = vmand %vm1348, %vm1444
        %vm1541 = vmand %vm1349, %vm1445
        %vm1542 = vmand %vm1350, %vm1446
        %vm1543 = vmand %vm1351, %vm1447
        %vm1544 = vmand %vm1352, %vm1448
        %vm1545 = vmand %vm1353, %vm1449
        %vm1546 = vmand %vm1354, %vm1450
        %vm1547 = vmand %vm1355, %vm1451
        %vm1548 = vmand %vm1356, %vm1452
        %vm1549 = vmand %vm1357, %vm1453
        %vm1550 = vmand %vm1358, %vm1454
        %vm1551 = vmand %vm1359, %vm1455
        %vm1552 = vmand %vm1360, %vm1456
        %vm1553 = vmand %vm1361, %vm1457
        %vm1554 = vmand %vm1362, %vm1458
        %vm1555 = vmor %vm1171, %vm1459
        %vm1556 = vmor %vm1172, %vm1460
        %vm1557 = vmor %vm1173, %vm1461
        %vm1558 = vmor %vm1174, %vm1462
        %vm1559 = vmor %vm1175, %vm1463
        %vm1560 = vmor %vm1176, %vm1464
        %vm1561 = vmor %vm1177, %vm1465
        %vm1562 = vmor %vm1178, %vm1466
        %vm1563 = vmor %vm1179, %vm1467
        %vm1564 = vmor %vm1180, %vm1468
        %vm1565 = vmor %vm1181, %vm1469
        %vm1566 = vmor %vm1182, %vm1470
        %vm1567 = vmor %vm1183, %vm1471
        %vm1568 = vmor %vm1184, %vm1472
        %vm1569 = vmor %vm1185, %vm1473
        %vm1570 = vmor %vm1186, %vm1474
        %vm1571 = vmor %vm1187, %vm1475
        %vm1572 = vmor %vm1188, %vm1476
        %vm1573 = vmor %vm1189, %vm1477
        %vm1574 = vmor %vm1190, %vm1478
        %vm1575 = vmor %vm1191, %vm1479
        %vm1576 = vmor %vm1192, %vm1480
        %vm1577 = vmor %vm1193, %vm1481
        %vm1578 = vmor %vm1194, %vm1482
        %vm1579 = vmor %vm1195, %vm1483
        %vm1580 = vmor %vm1196, %vm1484
        %vm1581 = vmor %vm1197, %vm1485
        %vm1582 = vmor %vm1198, %vm1486
        %vm1583 = vmor %vm1199, %vm1487
        %vm1584 = vmor %vm1200, %vm1488
        %vm1585 = vmor %vm1201, %vm1489
        %vm1586 = vmor %vm1202, %vm1490
        %vm1587 = vmor %vm1203, %vm1491
        %vm1588 = vmor %vm1204, %vm1492
        %vm1589 = vmor %vm1205, %vm1493
        %vm1590 = vmor %vm1206, %vm1494
        %vm1591 = vmor %vm1207, %vm1495
        %vm1592 = vmor %vm1208, %vm1496
        %vm1593 = vmor %vm1209, %vm1497
        %vm1594 = vmor %vm1210, %vm1498
        %vm1595 = vmor %vm1211, %vm1499
        %vm1596 = vmor %vm1212, %vm1500
        %vm1597 = vmor %vm1213, %vm1501
        %vm1598 = vmor %vm1214, %vm1502
        %vm1599 = vmor %vm1215, %vm1503
        %vm1600 = vmor %vm1216, %vm1504
        %vm1601 = vmor %vm1217, %vm1505
        %vm1602 = vmor %vm1218, %vm1506
        %vm1603 = vmor %vm1219, %vm1507
        %vm1604 = vmor %vm1220, %vm1508
        %vm1605 = vmor %vm1221, %vm1509
        %vm1606 = vmor %vm1222, %vm1510
        %vm1607 = vmor %vm1223, %vm1511
        %vm1608 = vmor %vm1224, %vm1512
        %vm1609 = vmor %vm1225, %vm1513
        %vm1610 = vmor %vm1226, %vm1514
        %vm1611 = vmor %vm1227, %vm1515
        %vm1612 = vmor %vm1228, %vm1516
        %vm1613 = vmor %vm1229, %vm1517
        %vm1614 = vmor %vm1230, %vm1518
        %vm1615 = vmor %vm1231, %vm1519
        %vm1616 = vmor %vm1232, %vm1520
        %vm1617 = vmor %vm1233, %vm1521
        %vm1618 = vmor %vm1234, %vm1522
        %vm1619 = vmor %vm1235, %vm1523
        %vm1620 = vmor %vm1236, %vm1524
        %vm1621 = vmor %vm1237, %vm1525
        %vm1622 = vmor %vm1238, %vm1526
        %vm1623 = vmor %vm1239, %vm1527
        %vm1624 = vmor %vm1240, %vm1528
        %vm1625 = vmor %vm1241, %vm1529
        %vm1626 = vmor %vm1242, %vm1530
        %vm1627 = vmor %vm1243, %vm1531
        %vm1628 = vmor %vm1244, %vm1532
        %vm1629 = vmor %vm1245, %vm1533
        %vm1630 = vmor %vm1246, %vm1534
        %vm1631 = vmor %vm1247, %vm1535
        %vm1632 = vmor %vm1248, %vm1536
        %vm1633 = vmor %vm1249, %vm1537
        %vm1634 = vmor %vm1250, %vm1538
        %vm1635 = vmor %vm1251, %vm1539
        %vm1636 = vmor %vm1252, %vm1540
        %vm1637 = vmor %vm1253, %vm1541
        %vm1638 = vmor %vm1254, %vm1542
        %vm1639 = vmor %vm1255, %vm1543
        %vm1640 = vmor %vm1256, %vm1544
        %vm1641 = vmor %vm1257, %vm1545
        %vm1642 = vmor %vm1258, %vm1546
        %vm1643 = vmor %vm1259, %vm1547
        %vm1644 = vmor %vm1260, %vm1548
        %vm1645 = vmor %vm1261, %vm1549
        %vm1646 = vmor %vm1262, %vm1550
        %vm1647 = vmor %vm1263, %vm1551
        %vm1648 = vmor %vm1264, %vm1552
        %vm1649 = vmor %vm1265, %vm1553
        %vm1650 = vmor %vm1266, %vm1554
        %vm1651 = vcmp.lt.s32.totalorder %v707, 384
        %vm1652 = vcmp.lt.s32.totalorder %v708, 384
        %vm1653 = vcmp.lt.s32.totalorder %v709, 384
        %vm1654 = vcmp.lt.s32.totalorder %v710, 384
        %vm1655 = vcmp.lt.s32.totalorder %v711, 384
        %vm1656 = vcmp.lt.s32.totalorder %v712, 384
        %vm1657 = vcmp.lt.s32.totalorder %v713, 384
        %vm1658 = vcmp.lt.s32.totalorder %v714, 384
        %vm1659 = vcmp.lt.s32.totalorder %v715, 384
        %vm1660 = vcmp.lt.s32.totalorder %v716, 384
        %vm1661 = vcmp.lt.s32.totalorder %v717, 384
        %vm1662 = vcmp.lt.s32.totalorder %v718, 384
        %vm1663 = vcmp.lt.s32.totalorder %v719, 384
        %vm1664 = vcmp.lt.s32.totalorder %v720, 384
        %vm1665 = vcmp.lt.s32.totalorder %v721, 384
        %vm1666 = vcmp.lt.s32.totalorder %v722, 384
        %vm1667 = vcmp.lt.s32.totalorder %v723, 384
        %vm1668 = vcmp.lt.s32.totalorder %v724, 384
        %vm1669 = vcmp.lt.s32.totalorder %v725, 384
        %vm1670 = vcmp.lt.s32.totalorder %v726, 384
        %vm1671 = vcmp.lt.s32.totalorder %v727, 384
        %vm1672 = vcmp.lt.s32.totalorder %v728, 384
        %vm1673 = vcmp.lt.s32.totalorder %v729, 384
        %vm1674 = vcmp.lt.s32.totalorder %v730, 384
        %vm1675 = vcmp.lt.s32.totalorder %v731, 384
        %vm1676 = vcmp.lt.s32.totalorder %v732, 384
        %vm1677 = vcmp.lt.s32.totalorder %v733, 384
        %vm1678 = vcmp.lt.s32.totalorder %v734, 384
        %vm1679 = vcmp.lt.s32.totalorder %v735, 384
        %vm1680 = vcmp.lt.s32.totalorder %v736, 384
        %vm1681 = vcmp.lt.s32.totalorder %v737, 384
        %vm1682 = vcmp.lt.s32.totalorder %v738, 384
        %vm1683 = vmand %vm1555, %vm1651
        %vm1684 = vmand %vm1556, %vm1651
        %vm1685 = vmand %vm1557, %vm1651
        %vm1686 = vmand %vm1558, %vm1652
        %vm1687 = vmand %vm1559, %vm1652
        %vm1688 = vmand %vm1560, %vm1652
        %vm1689 = vmand %vm1561, %vm1653
        %vm1690 = vmand %vm1562, %vm1653
        %vm1691 = vmand %vm1563, %vm1653
        %vm1692 = vmand %vm1564, %vm1654
        %vm1693 = vmand %vm1565, %vm1654
        %vm1694 = vmand %vm1566, %vm1654
        %vm1695 = vmand %vm1567, %vm1655
        %vm1696 = vmand %vm1568, %vm1655
        %vm1697 = vmand %vm1569, %vm1655
        %vm1698 = vmand %vm1570, %vm1656
        %vm1699 = vmand %vm1571, %vm1656
        %vm1700 = vmand %vm1572, %vm1656
        %vm1701 = vmand %vm1573, %vm1657
        %vm1702 = vmand %vm1574, %vm1657
        %vm1703 = vmand %vm1575, %vm1657
        %vm1704 = vmand %vm1576, %vm1658
        %vm1705 = vmand %vm1577, %vm1658
        %vm1706 = vmand %vm1578, %vm1658
        %vm1707 = vmand %vm1579, %vm1659
        %vm1708 = vmand %vm1580, %vm1659
        %vm1709 = vmand %vm1581, %vm1659
        %vm1710 = vmand %vm1582, %vm1660
        %vm1711 = vmand %vm1583, %vm1660
        %vm1712 = vmand %vm1584, %vm1660
        %vm1713 = vmand %vm1585, %vm1661
        %vm1714 = vmand %vm1586, %vm1661
        %vm1715 = vmand %vm1587, %vm1661
        %vm1716 = vmand %vm1588, %vm1662
        %vm1717 = vmand %vm1589, %vm1662
        %vm1718 = vmand %vm1590, %vm1662
        %vm1719 = vmand %vm1591, %vm1663
        %vm1720 = vmand %vm1592, %vm1663
        %vm1721 = vmand %vm1593, %vm1663
        %vm1722 = vmand %vm1594, %vm1664
        %vm1723 = vmand %vm1595, %vm1664
        %vm1724 = vmand %vm1596, %vm1664
        %vm1725 = vmand %vm1597, %vm1665
        %vm1726 = vmand %vm1598, %vm1665
        %vm1727 = vmand %vm1599, %vm1665
        %vm1728 = vmand %vm1600, %vm1666
        %vm1729 = vmand %vm1601, %vm1666
        %vm1730 = vmand %vm1602, %vm1666
        %vm1731 = vmand %vm1603, %vm1667
        %vm1732 = vmand %vm1604, %vm1667
        %vm1733 = vmand %vm1605, %vm1667
        %vm1734 = vmand %vm1606, %vm1668
        %vm1735 = vmand %vm1607, %vm1668
        %vm1736 = vmand %vm1608, %vm1668
        %vm1737 = vmand %vm1609, %vm1669
        %vm1738 = vmand %vm1610, %vm1669
        %vm1739 = vmand %vm1611, %vm1669
        %vm1740 = vmand %vm1612, %vm1670
        %vm1741 = vmand %vm1613, %vm1670
        %vm1742 = vmand %vm1614, %vm1670
        %vm1743 = vmand %vm1615, %vm1671
        %vm1744 = vmand %vm1616, %vm1671
        %vm1745 = vmand %vm1617, %vm1671
        %vm1746 = vmand %vm1618, %vm1672
        %vm1747 = vmand %vm1619, %vm1672
        %vm1748 = vmand %vm1620, %vm1672
        %vm1749 = vmand %vm1621, %vm1673
        %vm1750 = vmand %vm1622, %vm1673
        %vm1751 = vmand %vm1623, %vm1673
        %vm1752 = vmand %vm1624, %vm1674
        %vm1753 = vmand %vm1625, %vm1674
        %vm1754 = vmand %vm1626, %vm1674
        %vm1755 = vmand %vm1627, %vm1675
        %vm1756 = vmand %vm1628, %vm1675
        %vm1757 = vmand %vm1629, %vm1675
        %vm1758 = vmand %vm1630, %vm1676
        %vm1759 = vmand %vm1631, %vm1676
        %vm1760 = vmand %vm1632, %vm1676
        %vm1761 = vmand %vm1633, %vm1677
        %vm1762 = vmand %vm1634, %vm1677
        %vm1763 = vmand %vm1635, %vm1677
        %vm1764 = vmand %vm1636, %vm1678
        %vm1765 = vmand %vm1637, %vm1678
        %vm1766 = vmand %vm1638, %vm1678
        %vm1767 = vmand %vm1639, %vm1679
        %vm1768 = vmand %vm1640, %vm1679
        %vm1769 = vmand %vm1641, %vm1679
        %vm1770 = vmand %vm1642, %vm1680
        %vm1771 = vmand %vm1643, %vm1680
        %vm1772 = vmand %vm1644, %vm1680
        %vm1773 = vmand %vm1645, %vm1681
        %vm1774 = vmand %vm1646, %vm1681
        %vm1775 = vmand %vm1647, %vm1681
        %vm1776 = vmand %vm1648, %vm1682
        %vm1777 = vmand %vm1649, %vm1682
        %vm1778 = vmand %vm1650, %vm1682
        %v1779 = vsel %vm1683, 1, 0
        %v1780 = vsel %vm1684, 1, 0
        %v1781 = vsel %vm1685, 1, 0
        %v1782 = vsel %vm1686, 1, 0
        %v1783 = vsel %vm1687, 1, 0
        %v1784 = vsel %vm1688, 1, 0
        %v1785 = vsel %vm1689, 1, 0
        %v1786 = vsel %vm1690, 1, 0
        %v1787 = vsel %vm1691, 1, 0
        %v1788 = vsel %vm1692, 1, 0
        %v1789 = vsel %vm1693, 1, 0
        %v1790 = vsel %vm1694, 1, 0
        %v1791 = vsel %vm1695, 1, 0
        %v1792 = vsel %vm1696, 1, 0
        %v1793 = vsel %vm1697, 1, 0
        %v1794 = vsel %vm1698, 1, 0
        %v1795 = vsel %vm1699, 1, 0
        %v1796 = vsel %vm1700, 1, 0
        %v1797 = vsel %vm1701, 1, 0
        %v1798 = vsel %vm1702, 1, 0
        %v1799 = vsel %vm1703, 1, 0
        %v1800 = vsel %vm1704, 1, 0
        %v1801 = vsel %vm1705, 1, 0
        %v1802 = vsel %vm1706, 1, 0
        %v1803 = vsel %vm1707, 1, 0
        %v1804 = vsel %vm1708, 1, 0
        %v1805 = vsel %vm1709, 1, 0
        %v1806 = vsel %vm1710, 1, 0
        %v1807 = vsel %vm1711, 1, 0
        %v1808 = vsel %vm1712, 1, 0
        %v1809 = vsel %vm1713, 1, 0
        %v1810 = vsel %vm1714, 1, 0
        %v1811 = vsel %vm1715, 1, 0
        %v1812 = vsel %vm1716, 1, 0
        %v1813 = vsel %vm1717, 1, 0
        %v1814 = vsel %vm1718, 1, 0
        %v1815 = vsel %vm1719, 1, 0
        %v1816 = vsel %vm1720, 1, 0
        %v1817 = vsel %vm1721, 1, 0
        %v1818 = vsel %vm1722, 1, 0
        %v1819 = vsel %vm1723, 1, 0
        %v1820 = vsel %vm1724, 1, 0
        %v1821 = vsel %vm1725, 1, 0
        %v1822 = vsel %vm1726, 1, 0
        %v1823 = vsel %vm1727, 1, 0
        %v1824 = vsel %vm1728, 1, 0
        %v1825 = vsel %vm1729, 1, 0
        %v1826 = vsel %vm1730, 1, 0
        %v1827 = vsel %vm1731, 1, 0
        %v1828 = vsel %vm1732, 1, 0
        %v1829 = vsel %vm1733, 1, 0
        %v1830 = vsel %vm1734, 1, 0
        %v1831 = vsel %vm1735, 1, 0
        %v1832 = vsel %vm1736, 1, 0
        %v1833 = vsel %vm1737, 1, 0
        %v1834 = vsel %vm1738, 1, 0
        %v1835 = vsel %vm1739, 1, 0
        %v1836 = vsel %vm1740, 1, 0
        %v1837 = vsel %vm1741, 1, 0
        %v1838 = vsel %vm1742, 1, 0
        %v1839 = vsel %vm1743, 1, 0
        %v1840 = vsel %vm1744, 1, 0
        %v1841 = vsel %vm1745, 1, 0
        %v1842 = vsel %vm1746, 1, 0
        %v1843 = vsel %vm1747, 1, 0
        %v1844 = vsel %vm1748, 1, 0
        %v1845 = vsel %vm1749, 1, 0
        %v1846 = vsel %vm1750, 1, 0
        %v1847 = vsel %vm1751, 1, 0
        %v1848 = vsel %vm1752, 1, 0
        %v1849 = vsel %vm1753, 1, 0
        %v1850 = vsel %vm1754, 1, 0
        %v1851 = vsel %vm1755, 1, 0
        %v1852 = vsel %vm1756, 1, 0
        %v1853 = vsel %vm1757, 1, 0
        %v1854 = vsel %vm1758, 1, 0
        %v1855 = vsel %vm1759, 1, 0
        %v1856 = vsel %vm1760, 1, 0
        %v1857 = vsel %vm1761, 1, 0
        %v1858 = vsel %vm1762, 1, 0
        %v1859 = vsel %vm1763, 1, 0
        %v1860 = vsel %vm1764, 1, 0
        %v1861 = vsel %vm1765, 1, 0
        %v1862 = vsel %vm1766, 1, 0
        %v1863 = vsel %vm1767, 1, 0
        %v1864 = vsel %vm1768, 1, 0
        %v1865 = vsel %vm1769, 1, 0
        %v1866 = vsel %vm1770, 1, 0
        %v1867 = vsel %vm1771, 1, 0
        %v1868 = vsel %vm1772, 1, 0
        %v1869 = vsel %vm1773, 1, 0
        %v1870 = vsel %vm1774, 1, 0
        %v1871 = vsel %vm1775, 1, 0
        %v1872 = vsel %vm1776, 1, 0
        %v1873 = vsel %vm1777, 1, 0
        %v1874 = vsel %vm1778, 1, 0
        %v1875 = vcvt.s32.f32 %v1779
        %v1876 = vcvt.s32.f32 %v1780
        %v1877 = vcvt.s32.f32 %v1781
        %v1878 = vcvt.s32.f32 %v1782
        %v1879 = vcvt.s32.f32 %v1783
        %v1880 = vcvt.s32.f32 %v1784
        %v1881 = vcvt.s32.f32 %v1785
        %v1882 = vcvt.s32.f32 %v1786
        %v1883 = vcvt.s32.f32 %v1787
        %v1884 = vcvt.s32.f32 %v1788
        %v1885 = vcvt.s32.f32 %v1789
        %v1886 = vcvt.s32.f32 %v1790
        %v1887 = vcvt.s32.f32 %v1791
        %v1888 = vcvt.s32.f32 %v1792
        %v1889 = vcvt.s32.f32 %v1793
        %v1890 = vcvt.s32.f32 %v1794
        %v1891 = vcvt.s32.f32 %v1795
        %v1892 = vcvt.s32.f32 %v1796
        %v1893 = vcvt.s32.f32 %v1797
        %v1894 = vcvt.s32.f32 %v1798
        %v1895 = vcvt.s32.f32 %v1799
        %v1896 = vcvt.s32.f32 %v1800
        %v1897 = vcvt.s32.f32 %v1801
        %v1898 = vcvt.s32.f32 %v1802
        %v1899 = vcvt.s32.f32 %v1803
        %v1900 = vcvt.s32.f32 %v1804
        %v1901 = vcvt.s32.f32 %v1805
        %v1902 = vcvt.s32.f32 %v1806
        %v1903 = vcvt.s32.f32 %v1807
        %v1904 = vcvt.s32.f32 %v1808
        %v1905 = vcvt.s32.f32 %v1809
        %v1906 = vcvt.s32.f32 %v1810
        %v1907 = vcvt.s32.f32 %v1811
        %v1908 = vcvt.s32.f32 %v1812
        %v1909 = vcvt.s32.f32 %v1813
        %v1910 = vcvt.s32.f32 %v1814
        %v1911 = vcvt.s32.f32 %v1815
        %v1912 = vcvt.s32.f32 %v1816
        %v1913 = vcvt.s32.f32 %v1817
        %v1914 = vcvt.s32.f32 %v1818
        %v1915 = vcvt.s32.f32 %v1819
        %v1916 = vcvt.s32.f32 %v1820
        %v1917 = vcvt.s32.f32 %v1821
        %v1918 = vcvt.s32.f32 %v1822
        %v1919 = vcvt.s32.f32 %v1823
        %v1920 = vcvt.s32.f32 %v1824
        %v1921 = vcvt.s32.f32 %v1825
        %v1922 = vcvt.s32.f32 %v1826
        %v1923 = vcvt.s32.f32 %v1827
        %v1924 = vcvt.s32.f32 %v1828
        %v1925 = vcvt.s32.f32 %v1829
        %v1926 = vcvt.s32.f32 %v1830
        %v1927 = vcvt.s32.f32 %v1831
        %v1928 = vcvt.s32.f32 %v1832
        %v1929 = vcvt.s32.f32 %v1833
        %v1930 = vcvt.s32.f32 %v1834
        %v1931 = vcvt.s32.f32 %v1835
        %v1932 = vcvt.s32.f32 %v1836
        %v1933 = vcvt.s32.f32 %v1837
        %v1934 = vcvt.s32.f32 %v1838
        %v1935 = vcvt.s32.f32 %v1839
        %v1936 = vcvt.s32.f32 %v1840
        %v1937 = vcvt.s32.f32 %v1841
        %v1938 = vcvt.s32.f32 %v1842
        %v1939 = vcvt.s32.f32 %v1843
        %v1940 = vcvt.s32.f32 %v1844
        %v1941 = vcvt.s32.f32 %v1845
        %v1942 = vcvt.s32.f32 %v1846
        %v1943 = vcvt.s32.f32 %v1847
        %v1944 = vcvt.s32.f32 %v1848
        %v1945 = vcvt.s32.f32 %v1849
        %v1946 = vcvt.s32.f32 %v1850
        %v1947 = vcvt.s32.f32 %v1851
        %v1948 = vcvt.s32.f32 %v1852
        %v1949 = vcvt.s32.f32 %v1853
        %v1950 = vcvt.s32.f32 %v1854
        %v1951 = vcvt.s32.f32 %v1855
        %v1952 = vcvt.s32.f32 %v1856
        %v1953 = vcvt.s32.f32 %v1857
        %v1954 = vcvt.s32.f32 %v1858
        %v1955 = vcvt.s32.f32 %v1859
        %v1956 = vcvt.s32.f32 %v1860
        %v1957 = vcvt.s32.f32 %v1861
        %v1958 = vcvt.s32.f32 %v1862
        %v1959 = vcvt.s32.f32 %v1863
        %v1960 = vcvt.s32.f32 %v1864
        %v1961 = vcvt.s32.f32 %v1865
        %v1962 = vcvt.s32.f32 %v1866
        %v1963 = vcvt.s32.f32 %v1867
        %v1964 = vcvt.s32.f32 %v1868
        %v1965 = vcvt.s32.f32 %v1869
        %v1966 = vcvt.s32.f32 %v1870
        %v1967 = vcvt.s32.f32 %v1871
        %v1968 = vcvt.s32.f32 %v1872
        %v1969 = vcvt.s32.f32 %v1873
        %v1970 = vcvt.s32.f32 %v1874
        %v1971 = vadd.f32 %v1875, %v1878
        %v1972 = vadd.f32 %v1971, %v1881
        %v1973 = vadd.f32 %v1972, %v1884
        %v1974 = vadd.f32 %v1973, %v1887
        %v1975 = vadd.f32 %v1974, %v1890
        %v1976 = vadd.f32 %v1975, %v1893
        %v1977 = vadd.f32 %v1976, %v1896
        %v1978 = vadd.f32 %v1977, %v1899
        %v1979 = vadd.f32 %v1978, %v1902
        %v1980 = vadd.f32 %v1979, %v1905
        %v1981 = vadd.f32 %v1980, %v1908
        %v1982 = vadd.f32 %v1981, %v1911
        %v1983 = vadd.f32 %v1982, %v1914
        %v1984 = vadd.f32 %v1983, %v1917
        %v1985 = vadd.f32 %v1984, %v1920
        %v1986 = vadd.f32 %v1985, %v1923
        %v1987 = vadd.f32 %v1986, %v1926
        %v1988 = vadd.f32 %v1987, %v1929
        %v1989 = vadd.f32 %v1988, %v1932
        %v1990 = vadd.f32 %v1989, %v1935
        %v1991 = vadd.f32 %v1990, %v1938
        %v1992 = vadd.f32 %v1991, %v1941
        %v1993 = vadd.f32 %v1992, %v1944
        %v1994 = vadd.f32 %v1993, %v1947
        %v1995 = vadd.f32 %v1994, %v1950
        %v1996 = vadd.f32 %v1995, %v1953
        %v1997 = vadd.f32 %v1996, %v1956
        %v1998 = vadd.f32 %v1997, %v1959
        %v1999 = vadd.f32 %v1998, %v1962
        %v2000 = vadd.f32 %v1999, %v1965
        %v2001 = vadd.f32 %v2000, %v1968
        %v2002 = vrot.slane %v2001, 4
        %v2003 = vadd.f32 %v2001, %v2002
        %v2004 = vrot.slane %v2003, 2
        %v2005 = vadd.f32 %v2003, %v2004
        %v2006 = vrot.slane %v2005, 1
        %v2007 = vadd.f32 %v2005, %v2006
        %v2008 = vadd.f32 %v1876, %v1879
        %v2009 = vadd.f32 %v2008, %v1882
        %v2010 = vadd.f32 %v2009, %v1885
        %v2011 = vadd.f32 %v2010, %v1888
        %v2012 = vadd.f32 %v2011, %v1891
        %v2013 = vadd.f32 %v2012, %v1894
        %v2014 = vadd.f32 %v2013, %v1897
        %v2015 = vadd.f32 %v2014, %v1900
        %v2016 = vadd.f32 %v2015, %v1903
        %v2017 = vadd.f32 %v2016, %v1906
        %v2018 = vadd.f32 %v2017, %v1909
        %v2019 = vadd.f32 %v2018, %v1912
        %v2020 = vadd.f32 %v2019, %v1915
        %v2021 = vadd.f32 %v2020, %v1918
        %v2022 = vadd.f32 %v2021, %v1921
        %v2023 = vadd.f32 %v2022, %v1924
        %v2024 = vadd.f32 %v2023, %v1927
        %v2025 = vadd.f32 %v2024, %v1930
        %v2026 = vadd.f32 %v2025, %v1933
        %v2027 = vadd.f32 %v2026, %v1936
        %v2028 = vadd.f32 %v2027, %v1939
        %v2029 = vadd.f32 %v2028, %v1942
        %v2030 = vadd.f32 %v2029, %v1945
        %v2031 = vadd.f32 %v2030, %v1948
        %v2032 = vadd.f32 %v2031, %v1951
        %v2033 = vadd.f32 %v2032, %v1954
        %v2034 = vadd.f32 %v2033, %v1957
        %v2035 = vadd.f32 %v2034, %v1960
        %v2036 = vadd.f32 %v2035, %v1963
        %v2037 = vadd.f32 %v2036, %v1966
        %v2038 = vadd.f32 %v2037, %v1969
        %v2039 = vrot.slane %v2038, 4
        %v2040 = vadd.f32 %v2038, %v2039
        %v2041 = vrot.slane %v2040, 2
        %v2042 = vadd.f32 %v2040, %v2041
        %v2043 = vrot.slane %v2042, 1
        %v2044 = vadd.f32 %v2042, %v2043
        %v2045 = vadd.f32 %v1877, %v1880
        %v2046 = vadd.f32 %v2045, %v1883
        %v2047 = vadd.f32 %v2046, %v1886
        %v2048 = vadd.f32 %v2047, %v1889
        %v2049 = vadd.f32 %v2048, %v1892
        %v2050 = vadd.f32 %v2049, %v1895
        %v2051 = vadd.f32 %v2050, %v1898
        %v2052 = vadd.f32 %v2051, %v1901
        %v2053 = vadd.f32 %v2052, %v1904
        %v2054 = vadd.f32 %v2053, %v1907
        %v2055 = vadd.f32 %v2054, %v1910
        %v2056 = vadd.f32 %v2055, %v1913
        %v2057 = vadd.f32 %v2056, %v1916
        %v2058 = vadd.f32 %v2057, %v1919
        %v2059 = vadd.f32 %v2058, %v1922
        %v2060 = vadd.f32 %v2059, %v1925
        %v2061 = vadd.f32 %v2060, %v1928
        %v2062 = vadd.f32 %v2061, %v1931
        %v2063 = vadd.f32 %v2062, %v1934
        %v2064 = vadd.f32 %v2063, %v1937
        %v2065 = vadd.f32 %v2064, %v1940
        %v2066 = vadd.f32 %v2065, %v1943
        %v2067 = vadd.f32 %v2066, %v1946
        %v2068 = vadd.f32 %v2067, %v1949
        %v2069 = vadd.f32 %v2068, %v1952
        %v2070 = vadd.f32 %v2069, %v1955
        %v2071 = vadd.f32 %v2070, %v1958
        %v2072 = vadd.f32 %v2071, %v1961
        %v2073 = vadd.f32 %v2072, %v1964
        %v2074 = vadd.f32 %v2073, %v1967
        %v2075 = vadd.f32 %v2074, %v1970
        %v2076 = vrot.slane %v2075, 4
        %v2077 = vadd.f32 %v2075, %v2076
        %v2078 = vrot.slane %v2077, 2
        %v2079 = vadd.f32 %v2077, %v2078
        %v2080 = vrot.slane %v2079, 1
        %v2081 = vadd.f32 %v2079, %v2080
        %v2082 = vadd.f32 %v2007, 0.0
        %v2083 = vadd.f32 %v2044, 0.0
        %v2084 = vadd.f32 %v2081, 0.0
        %vm2085 = vcmp.eq.s32.totalorder %v739, 256
        %vm2086 = vcmp.eq.s32.totalorder %v740, 256
        %vm2087 = vcmp.eq.s32.totalorder %v741, 256
        %vm2088 = vcmp.eq.s32.totalorder %v742, 256
        %vm2089 = vcmp.eq.s32.totalorder %v743, 256
        %vm2090 = vcmp.eq.s32.totalorder %v744, 256
        %vm2091 = vcmp.eq.s32.totalorder %v745, 256
        %vm2092 = vcmp.eq.s32.totalorder %v746, 256
        %vm2093 = vcmp.eq.s32.totalorder %v747, 256
        %vm2094 = vcmp.eq.s32.totalorder %v748, 256
        %vm2095 = vcmp.eq.s32.totalorder %v749, 256
        %vm2096 = vcmp.eq.s32.totalorder %v750, 256
        %vm2097 = vcmp.eq.s32.totalorder %v751, 256
        %vm2098 = vcmp.eq.s32.totalorder %v752, 256
        %vm2099 = vcmp.eq.s32.totalorder %v753, 256
        %vm2100 = vcmp.eq.s32.totalorder %v754, 256
        %vm2101 = vcmp.eq.s32.totalorder %v755, 256
        %vm2102 = vcmp.eq.s32.totalorder %v756, 256
        %vm2103 = vcmp.eq.s32.totalorder %v757, 256
        %vm2104 = vcmp.eq.s32.totalorder %v758, 256
        %vm2105 = vcmp.eq.s32.totalorder %v759, 256
        %vm2106 = vcmp.eq.s32.totalorder %v760, 256
        %vm2107 = vcmp.eq.s32.totalorder %v761, 256
        %vm2108 = vcmp.eq.s32.totalorder %v762, 256
        %vm2109 = vcmp.eq.s32.totalorder %v763, 256
        %vm2110 = vcmp.eq.s32.totalorder %v764, 256
        %vm2111 = vcmp.eq.s32.totalorder %v765, 256
        %vm2112 = vcmp.eq.s32.totalorder %v766, 256
        %vm2113 = vcmp.eq.s32.totalorder %v767, 256
        %vm2114 = vcmp.eq.s32.totalorder %v768, 256
        %vm2115 = vcmp.eq.s32.totalorder %v769, 256
        %vm2116 = vcmp.eq.s32.totalorder %v770, 256
        %vm2117 = vcmp.eq.s32.totalorder %v771, 256
        %vm2118 = vcmp.eq.s32.totalorder %v772, 256
        %vm2119 = vcmp.eq.s32.totalorder %v773, 256
        %vm2120 = vcmp.eq.s32.totalorder %v774, 256
        %vm2121 = vcmp.eq.s32.totalorder %v775, 256
        %vm2122 = vcmp.eq.s32.totalorder %v776, 256
        %vm2123 = vcmp.eq.s32.totalorder %v777, 256
        %vm2124 = vcmp.eq.s32.totalorder %v778, 256
        %vm2125 = vcmp.eq.s32.totalorder %v779, 256
        %vm2126 = vcmp.eq.s32.totalorder %v780, 256
        %vm2127 = vcmp.eq.s32.totalorder %v781, 256
        %vm2128 = vcmp.eq.s32.totalorder %v782, 256
        %vm2129 = vcmp.eq.s32.totalorder %v783, 256
        %vm2130 = vcmp.eq.s32.totalorder %v784, 256
        %vm2131 = vcmp.eq.s32.totalorder %v785, 256
        %vm2132 = vcmp.eq.s32.totalorder %v786, 256
        %vm2133 = vcmp.eq.s32.totalorder %v787, 256
        %vm2134 = vcmp.eq.s32.totalorder %v788, 256
        %vm2135 = vcmp.eq.s32.totalorder %v789, 256
        %vm2136 = vcmp.eq.s32.totalorder %v790, 256
        %vm2137 = vcmp.eq.s32.totalorder %v791, 256
        %vm2138 = vcmp.eq.s32.totalorder %v792, 256
        %vm2139 = vcmp.eq.s32.totalorder %v793, 256
        %vm2140 = vcmp.eq.s32.totalorder %v794, 256
        %vm2141 = vcmp.eq.s32.totalorder %v795, 256
        %vm2142 = vcmp.eq.s32.totalorder %v796, 256
        %vm2143 = vcmp.eq.s32.totalorder %v797, 256
        %vm2144 = vcmp.eq.s32.totalorder %v798, 256
        %vm2145 = vcmp.eq.s32.totalorder %v799, 256
        %vm2146 = vcmp.eq.s32.totalorder %v800, 256
        %vm2147 = vcmp.eq.s32.totalorder %v801, 256
        %vm2148 = vcmp.eq.s32.totalorder %v802, 256
        %vm2149 = vcmp.eq.s32.totalorder %v803, 256
        %vm2150 = vcmp.eq.s32.totalorder %v804, 256
        %vm2151 = vcmp.eq.s32.totalorder %v805, 256
        %vm2152 = vcmp.eq.s32.totalorder %v806, 256
        %vm2153 = vcmp.eq.s32.totalorder %v807, 256
        %vm2154 = vcmp.eq.s32.totalorder %v808, 256
        %vm2155 = vcmp.eq.s32.totalorder %v809, 256
        %vm2156 = vcmp.eq.s32.totalorder %v810, 256
        %vm2157 = vcmp.eq.s32.totalorder %v811, 256
        %vm2158 = vcmp.eq.s32.totalorder %v812, 256
        %vm2159 = vcmp.eq.s32.totalorder %v813, 256
        %vm2160 = vcmp.eq.s32.totalorder %v814, 256
        %vm2161 = vcmp.eq.s32.totalorder %v815, 256
        %vm2162 = vcmp.eq.s32.totalorder %v816, 256
        %vm2163 = vcmp.eq.s32.totalorder %v817, 256
        %vm2164 = vcmp.eq.s32.totalorder %v818, 256
        %vm2165 = vcmp.eq.s32.totalorder %v819, 256
        %vm2166 = vcmp.eq.s32.totalorder %v820, 256
        %vm2167 = vcmp.eq.s32.totalorder %v821, 256
        %vm2168 = vcmp.eq.s32.totalorder %v822, 256
        %vm2169 = vcmp.eq.s32.totalorder %v823, 256
        %vm2170 = vcmp.eq.s32.totalorder %v824, 256
        %vm2171 = vcmp.eq.s32.totalorder %v825, 256
        %vm2172 = vcmp.eq.s32.totalorder %v826, 256
        %vm2173 = vcmp.eq.s32.totalorder %v827, 256
        %vm2174 = vcmp.eq.s32.totalorder %v828, 256
        %vm2175 = vcmp.eq.s32.totalorder %v829, 256
        %vm2176 = vcmp.eq.s32.totalorder %v830, 256
        %vm2177 = vcmp.eq.s32.totalorder %v831, 256
        %vm2178 = vcmp.eq.s32.totalorder %v832, 256
        %vm2179 = vcmp.eq.s32.totalorder %v833, 256
        %vm2180 = vcmp.eq.s32.totalorder %v834, 256
        %v2181 = vsel %vm2085, %v935, 0.0
        %v2182 = vsel %vm2086, %v939, 0.0
        %v2183 = vsel %vm2087, %v943, 0.0
        %v2184 = vsel %vm2088, %v935, 0.0
        %v2185 = vsel %vm2089, %v939, 0.0
        %v2186 = vsel %vm2090, %v943, 0.0
        %v2187 = vsel %vm2091, %v935, 0.0
        %v2188 = vsel %vm2092, %v939, 0.0
        %v2189 = vsel %vm2093, %v943, 0.0
        %v2190 = vsel %vm2094, %v935, 0.0
        %v2191 = vsel %vm2095, %v939, 0.0
        %v2192 = vsel %vm2096, %v943, 0.0
        %v2193 = vsel %vm2097, %v935, 0.0
        %v2194 = vsel %vm2098, %v939, 0.0
        %v2195 = vsel %vm2099, %v943, 0.0
        %v2196 = vsel %vm2100, %v935, 0.0
        %v2197 = vsel %vm2101, %v939, 0.0
        %v2198 = vsel %vm2102, %v943, 0.0
        %v2199 = vsel %vm2103, %v935, 0.0
        %v2200 = vsel %vm2104, %v939, 0.0
        %v2201 = vsel %vm2105, %v943, 0.0
        %v2202 = vsel %vm2106, %v935, 0.0
        %v2203 = vsel %vm2107, %v939, 0.0
        %v2204 = vsel %vm2108, %v943, 0.0
        %v2205 = vsel %vm2109, %v935, 0.0
        %v2206 = vsel %vm2110, %v939, 0.0
        %v2207 = vsel %vm2111, %v943, 0.0
        %v2208 = vsel %vm2112, %v935, 0.0
        %v2209 = vsel %vm2113, %v939, 0.0
        %v2210 = vsel %vm2114, %v943, 0.0
        %v2211 = vsel %vm2115, %v935, 0.0
        %v2212 = vsel %vm2116, %v939, 0.0
        %v2213 = vsel %vm2117, %v943, 0.0
        %v2214 = vsel %vm2118, %v935, 0.0
        %v2215 = vsel %vm2119, %v939, 0.0
        %v2216 = vsel %vm2120, %v943, 0.0
        %v2217 = vsel %vm2121, %v935, 0.0
        %v2218 = vsel %vm2122, %v939, 0.0
        %v2219 = vsel %vm2123, %v943, 0.0
        %v2220 = vsel %vm2124, %v935, 0.0
        %v2221 = vsel %vm2125, %v939, 0.0
        %v2222 = vsel %vm2126, %v943, 0.0
        %v2223 = vsel %vm2127, %v935, 0.0
        %v2224 = vsel %vm2128, %v939, 0.0
        %v2225 = vsel %vm2129, %v943, 0.0
        %v2226 = vsel %vm2130, %v935, 0.0
        %v2227 = vsel %vm2131, %v939, 0.0
        %v2228 = vsel %vm2132, %v943, 0.0
        %v2229 = vsel %vm2133, %v935, 0.0
        %v2230 = vsel %vm2134, %v939, 0.0
        %v2231 = vsel %vm2135, %v943, 0.0
        %v2232 = vsel %vm2136, %v935, 0.0
        %v2233 = vsel %vm2137, %v939, 0.0
        %v2234 = vsel %vm2138, %v943, 0.0
        %v2235 = vsel %vm2139, %v935, 0.0
        %v2236 = vsel %vm2140, %v939, 0.0
        %v2237 = vsel %vm2141, %v943, 0.0
        %v2238 = vsel %vm2142, %v935, 0.0
        %v2239 = vsel %vm2143, %v939, 0.0
        %v2240 = vsel %vm2144, %v943, 0.0
        %v2241 = vsel %vm2145, %v935, 0.0
        %v2242 = vsel %vm2146, %v939, 0.0
        %v2243 = vsel %vm2147, %v943, 0.0
        %v2244 = vsel %vm2148, %v935, 0.0
        %v2245 = vsel %vm2149, %v939, 0.0
        %v2246 = vsel %vm2150, %v943, 0.0
        %v2247 = vsel %vm2151, %v935, 0.0
        %v2248 = vsel %vm2152, %v939, 0.0
        %v2249 = vsel %vm2153, %v943, 0.0
        %v2250 = vsel %vm2154, %v935, 0.0
        %v2251 = vsel %vm2155, %v939, 0.0
        %v2252 = vsel %vm2156, %v943, 0.0
        %v2253 = vsel %vm2157, %v935, 0.0
        %v2254 = vsel %vm2158, %v939, 0.0
        %v2255 = vsel %vm2159, %v943, 0.0
        %v2256 = vsel %vm2160, %v935, 0.0
        %v2257 = vsel %vm2161, %v939, 0.0
        %v2258 = vsel %vm2162, %v943, 0.0
        %v2259 = vsel %vm2163, %v935, 0.0
        %v2260 = vsel %vm2164, %v939, 0.0
        %v2261 = vsel %vm2165, %v943, 0.0
        %v2262 = vsel %vm2166, %v935, 0.0
        %v2263 = vsel %vm2167, %v939, 0.0
        %v2264 = vsel %vm2168, %v943, 0.0
        %v2265 = vsel %vm2169, %v935, 0.0
        %v2266 = vsel %vm2170, %v939, 0.0
        %v2267 = vsel %vm2171, %v943, 0.0
        %v2268 = vsel %vm2172, %v935, 0.0
        %v2269 = vsel %vm2173, %v939, 0.0
        %v2270 = vsel %vm2174, %v943, 0.0
        %v2271 = vsel %vm2175, %v935, 0.0
        %v2272 = vsel %vm2176, %v939, 0.0
        %v2273 = vsel %vm2177, %v943, 0.0
        %v2274 = vsel %vm2178, %v935, 0.0
        %v2275 = vsel %vm2179, %v939, 0.0
        %v2276 = vsel %vm2180, %v943, 0.0
        %v2277 = vadd.f32 %v2181, %v2182
        %v2278 = vadd.f32 %v2277, %v2183
        %2279 = vadd.xlane.f32.xlu0 %v2278
        %v2280 = vpop.xlane.xlu0 %2279
        %v2281 = vadd.f32 %v2184, %v2185
        %v2282 = vadd.f32 %v2281, %v2186
        %2283 = vadd.xlane.f32.xlu0 %v2282
        %v2284 = vpop.xlane.xlu0 %2283
        %v2285 = vadd.f32 %v2187, %v2188
        %v2286 = vadd.f32 %v2285, %v2189
        %2287 = vadd.xlane.f32.xlu0 %v2286
        %v2288 = vpop.xlane.xlu0 %2287
        %v2289 = vadd.f32 %v2190, %v2191
        %v2290 = vadd.f32 %v2289, %v2192
        %2291 = vadd.xlane.f32.xlu0 %v2290
        %v2292 = vpop.xlane.xlu0 %2291
        %v2293 = vadd.f32 %v2193, %v2194
        %v2294 = vadd.f32 %v2293, %v2195
        %2295 = vadd.xlane.f32.xlu0 %v2294
        %v2296 = vpop.xlane.xlu0 %2295
        %v2297 = vadd.f32 %v2196, %v2197
        %v2298 = vadd.f32 %v2297, %v2198
        %2299 = vadd.xlane.f32.xlu0 %v2298
        %v2300 = vpop.xlane.xlu0 %2299
        %v2301 = vadd.f32 %v2199, %v2200
        %v2302 = vadd.f32 %v2301, %v2201
        %2303 = vadd.xlane.f32.xlu0 %v2302
        %v2304 = vpop.xlane.xlu0 %2303
        %v2305 = vadd.f32 %v2202, %v2203
        %v2306 = vadd.f32 %v2305, %v2204
        %2307 = vadd.xlane.f32.xlu0 %v2306
        %v2308 = vpop.xlane.xlu0 %2307
        %v2309 = vadd.f32 %v2205, %v2206
        %v2310 = vadd.f32 %v2309, %v2207
        %2311 = vadd.xlane.f32.xlu0 %v2310
        %v2312 = vpop.xlane.xlu0 %2311
        %v2313 = vadd.f32 %v2208, %v2209
        %v2314 = vadd.f32 %v2313, %v2210
        %2315 = vadd.xlane.f32.xlu0 %v2314
        %v2316 = vpop.xlane.xlu0 %2315
        %v2317 = vadd.f32 %v2211, %v2212
        %v2318 = vadd.f32 %v2317, %v2213
        %2319 = vadd.xlane.f32.xlu0 %v2318
        %v2320 = vpop.xlane.xlu0 %2319
        %v2321 = vadd.f32 %v2214, %v2215
        %v2322 = vadd.f32 %v2321, %v2216
        %2323 = vadd.xlane.f32.xlu0 %v2322
        %v2324 = vpop.xlane.xlu0 %2323
        %v2325 = vadd.f32 %v2217, %v2218
        %v2326 = vadd.f32 %v2325, %v2219
        %2327 = vadd.xlane.f32.xlu0 %v2326
        %v2328 = vpop.xlane.xlu0 %2327
        %v2329 = vadd.f32 %v2220, %v2221
        %v2330 = vadd.f32 %v2329, %v2222
        %2331 = vadd.xlane.f32.xlu0 %v2330
        %v2332 = vpop.xlane.xlu0 %2331
        %v2333 = vadd.f32 %v2223, %v2224
        %v2334 = vadd.f32 %v2333, %v2225
        %2335 = vadd.xlane.f32.xlu0 %v2334
        %v2336 = vpop.xlane.xlu0 %2335
        %v2337 = vadd.f32 %v2226, %v2227
        %v2338 = vadd.f32 %v2337, %v2228
        %2339 = vadd.xlane.f32.xlu0 %v2338
        %v2340 = vpop.xlane.xlu0 %2339
        %v2341 = vadd.f32 %v2229, %v2230
        %v2342 = vadd.f32 %v2341, %v2231
        %2343 = vadd.xlane.f32.xlu0 %v2342
        %v2344 = vpop.xlane.xlu0 %2343
        %v2345 = vadd.f32 %v2232, %v2233
        %v2346 = vadd.f32 %v2345, %v2234
        %2347 = vadd.xlane.f32.xlu0 %v2346
        %v2348 = vpop.xlane.xlu0 %2347
        %v2349 = vadd.f32 %v2235, %v2236
        %v2350 = vadd.f32 %v2349, %v2237
        %2351 = vadd.xlane.f32.xlu0 %v2350
        %v2352 = vpop.xlane.xlu0 %2351
        %v2353 = vadd.f32 %v2238, %v2239
        %v2354 = vadd.f32 %v2353, %v2240
        %2355 = vadd.xlane.f32.xlu0 %v2354
        %v2356 = vpop.xlane.xlu0 %2355
        %v2357 = vadd.f32 %v2241, %v2242
        %v2358 = vadd.f32 %v2357, %v2243
        %2359 = vadd.xlane.f32.xlu0 %v2358
        %v2360 = vpop.xlane.xlu0 %2359
        %v2361 = vadd.f32 %v2244, %v2245
        %v2362 = vadd.f32 %v2361, %v2246
        %2363 = vadd.xlane.f32.xlu0 %v2362
        %v2364 = vpop.xlane.xlu0 %2363
        %v2365 = vadd.f32 %v2247, %v2248
        %v2366 = vadd.f32 %v2365, %v2249
        %2367 = vadd.xlane.f32.xlu0 %v2366
        %v2368 = vpop.xlane.xlu0 %2367
        %v2369 = vadd.f32 %v2250, %v2251
        %v2370 = vadd.f32 %v2369, %v2252
        %2371 = vadd.xlane.f32.xlu0 %v2370
        %v2372 = vpop.xlane.xlu0 %2371
        %v2373 = vadd.f32 %v2253, %v2254
        %v2374 = vadd.f32 %v2373, %v2255
        %2375 = vadd.xlane.f32.xlu0 %v2374
        %v2376 = vpop.xlane.xlu0 %2375
        %v2377 = vadd.f32 %v2256, %v2257
        %v2378 = vadd.f32 %v2377, %v2258
        %2379 = vadd.xlane.f32.xlu0 %v2378
        %v2380 = vpop.xlane.xlu0 %2379
        %v2381 = vadd.f32 %v2259, %v2260
        %v2382 = vadd.f32 %v2381, %v2261
        %2383 = vadd.xlane.f32.xlu0 %v2382
        %v2384 = vpop.xlane.xlu0 %2383
        %v2385 = vadd.f32 %v2262, %v2263
        %v2386 = vadd.f32 %v2385, %v2264
        %2387 = vadd.xlane.f32.xlu0 %v2386
        %v2388 = vpop.xlane.xlu0 %2387
        %v2389 = vadd.f32 %v2265, %v2266
        %v2390 = vadd.f32 %v2389, %v2267
        %2391 = vadd.xlane.f32.xlu0 %v2390
        %v2392 = vpop.xlane.xlu0 %2391
        %v2393 = vadd.f32 %v2268, %v2269
        %v2394 = vadd.f32 %v2393, %v2270
        %2395 = vadd.xlane.f32.xlu0 %v2394
        %v2396 = vpop.xlane.xlu0 %2395
        %v2397 = vadd.f32 %v2271, %v2272
        %v2398 = vadd.f32 %v2397, %v2273
        %2399 = vadd.xlane.f32.xlu0 %v2398
        %v2400 = vpop.xlane.xlu0 %2399
        %v2401 = vadd.f32 %v2274, %v2275
        %v2402 = vadd.f32 %v2401, %v2276
        %2403 = vadd.xlane.f32.xlu0 %v2402
        %v2404 = vpop.xlane.xlu0 %2403
        %vm2405 = vcmp.gt.f32.partialorder %v2280, %v935
        %vm2406 = vcmp.gt.f32.partialorder %v2280, %v939
        %vm2407 = vcmp.gt.f32.partialorder %v2280, %v943
        %vm2408 = vcmp.gt.f32.partialorder %v2284, %v935
        %vm2409 = vcmp.gt.f32.partialorder %v2284, %v939
        %vm2410 = vcmp.gt.f32.partialorder %v2284, %v943
        %vm2411 = vcmp.gt.f32.partialorder %v2288, %v935
        %vm2412 = vcmp.gt.f32.partialorder %v2288, %v939
        %vm2413 = vcmp.gt.f32.partialorder %v2288, %v943
        %vm2414 = vcmp.gt.f32.partialorder %v2292, %v935
        %vm2415 = vcmp.gt.f32.partialorder %v2292, %v939
        %vm2416 = vcmp.gt.f32.partialorder %v2292, %v943
        %vm2417 = vcmp.gt.f32.partialorder %v2296, %v935
        %vm2418 = vcmp.gt.f32.partialorder %v2296, %v939
        %vm2419 = vcmp.gt.f32.partialorder %v2296, %v943
        %vm2420 = vcmp.gt.f32.partialorder %v2300, %v935
        %vm2421 = vcmp.gt.f32.partialorder %v2300, %v939
        %vm2422 = vcmp.gt.f32.partialorder %v2300, %v943
        %vm2423 = vcmp.gt.f32.partialorder %v2304, %v935
        %vm2424 = vcmp.gt.f32.partialorder %v2304, %v939
        %vm2425 = vcmp.gt.f32.partialorder %v2304, %v943
        %vm2426 = vcmp.gt.f32.partialorder %v2308, %v935
        %vm2427 = vcmp.gt.f32.partialorder %v2308, %v939
        %vm2428 = vcmp.gt.f32.partialorder %v2308, %v943
        %vm2429 = vcmp.gt.f32.partialorder %v2312, %v935
        %vm2430 = vcmp.gt.f32.partialorder %v2312, %v939
        %vm2431 = vcmp.gt.f32.partialorder %v2312, %v943
        %vm2432 = vcmp.gt.f32.partialorder %v2316, %v935
        %vm2433 = vcmp.gt.f32.partialorder %v2316, %v939
        %vm2434 = vcmp.gt.f32.partialorder %v2316, %v943
        %vm2435 = vcmp.gt.f32.partialorder %v2320, %v935
        %vm2436 = vcmp.gt.f32.partialorder %v2320, %v939
        %vm2437 = vcmp.gt.f32.partialorder %v2320, %v943
        %vm2438 = vcmp.gt.f32.partialorder %v2324, %v935
        %vm2439 = vcmp.gt.f32.partialorder %v2324, %v939
        %vm2440 = vcmp.gt.f32.partialorder %v2324, %v943
        %vm2441 = vcmp.gt.f32.partialorder %v2328, %v935
        %vm2442 = vcmp.gt.f32.partialorder %v2328, %v939
        %vm2443 = vcmp.gt.f32.partialorder %v2328, %v943
        %vm2444 = vcmp.gt.f32.partialorder %v2332, %v935
        %vm2445 = vcmp.gt.f32.partialorder %v2332, %v939
        %vm2446 = vcmp.gt.f32.partialorder %v2332, %v943
        %vm2447 = vcmp.gt.f32.partialorder %v2336, %v935
        %vm2448 = vcmp.gt.f32.partialorder %v2336, %v939
        %vm2449 = vcmp.gt.f32.partialorder %v2336, %v943
        %vm2450 = vcmp.gt.f32.partialorder %v2340, %v935
        %vm2451 = vcmp.gt.f32.partialorder %v2340, %v939
        %vm2452 = vcmp.gt.f32.partialorder %v2340, %v943
        %vm2453 = vcmp.gt.f32.partialorder %v2344, %v935
        %vm2454 = vcmp.gt.f32.partialorder %v2344, %v939
        %vm2455 = vcmp.gt.f32.partialorder %v2344, %v943
        %vm2456 = vcmp.gt.f32.partialorder %v2348, %v935
        %vm2457 = vcmp.gt.f32.partialorder %v2348, %v939
        %vm2458 = vcmp.gt.f32.partialorder %v2348, %v943
        %vm2459 = vcmp.gt.f32.partialorder %v2352, %v935
        %vm2460 = vcmp.gt.f32.partialorder %v2352, %v939
        %vm2461 = vcmp.gt.f32.partialorder %v2352, %v943
        %vm2462 = vcmp.gt.f32.partialorder %v2356, %v935
        %vm2463 = vcmp.gt.f32.partialorder %v2356, %v939
        %vm2464 = vcmp.gt.f32.partialorder %v2356, %v943
        %vm2465 = vcmp.gt.f32.partialorder %v2360, %v935
        %vm2466 = vcmp.gt.f32.partialorder %v2360, %v939
        %vm2467 = vcmp.gt.f32.partialorder %v2360, %v943
        %vm2468 = vcmp.gt.f32.partialorder %v2364, %v935
        %vm2469 = vcmp.gt.f32.partialorder %v2364, %v939
        %vm2470 = vcmp.gt.f32.partialorder %v2364, %v943
        %vm2471 = vcmp.gt.f32.partialorder %v2368, %v935
        %vm2472 = vcmp.gt.f32.partialorder %v2368, %v939
        %vm2473 = vcmp.gt.f32.partialorder %v2368, %v943
        %vm2474 = vcmp.gt.f32.partialorder %v2372, %v935
        %vm2475 = vcmp.gt.f32.partialorder %v2372, %v939
        %vm2476 = vcmp.gt.f32.partialorder %v2372, %v943
        %vm2477 = vcmp.gt.f32.partialorder %v2376, %v935
        %vm2478 = vcmp.gt.f32.partialorder %v2376, %v939
        %vm2479 = vcmp.gt.f32.partialorder %v2376, %v943
        %vm2480 = vcmp.gt.f32.partialorder %v2380, %v935
        %vm2481 = vcmp.gt.f32.partialorder %v2380, %v939
        %vm2482 = vcmp.gt.f32.partialorder %v2380, %v943
        %vm2483 = vcmp.gt.f32.partialorder %v2384, %v935
        %vm2484 = vcmp.gt.f32.partialorder %v2384, %v939
        %vm2485 = vcmp.gt.f32.partialorder %v2384, %v943
        %vm2486 = vcmp.gt.f32.partialorder %v2388, %v935
        %vm2487 = vcmp.gt.f32.partialorder %v2388, %v939
        %vm2488 = vcmp.gt.f32.partialorder %v2388, %v943
        %vm2489 = vcmp.gt.f32.partialorder %v2392, %v935
        %vm2490 = vcmp.gt.f32.partialorder %v2392, %v939
        %vm2491 = vcmp.gt.f32.partialorder %v2392, %v943
        %vm2492 = vcmp.gt.f32.partialorder %v2396, %v935
        %vm2493 = vcmp.gt.f32.partialorder %v2396, %v939
        %vm2494 = vcmp.gt.f32.partialorder %v2396, %v943
        %vm2495 = vcmp.gt.f32.partialorder %v2400, %v935
        %vm2496 = vcmp.gt.f32.partialorder %v2400, %v939
        %vm2497 = vcmp.gt.f32.partialorder %v2400, %v943
        %vm2498 = vcmp.gt.f32.partialorder %v2404, %v935
        %vm2499 = vcmp.gt.f32.partialorder %v2404, %v939
        %vm2500 = vcmp.gt.f32.partialorder %v2404, %v943
        %vm2501 = vcmp.eq.f32.partialorder %v2280, %v935
        %vm2502 = vcmp.eq.f32.partialorder %v2280, %v939
        %vm2503 = vcmp.eq.f32.partialorder %v2280, %v943
        %vm2504 = vcmp.eq.f32.partialorder %v2284, %v935
        %vm2505 = vcmp.eq.f32.partialorder %v2284, %v939
        %vm2506 = vcmp.eq.f32.partialorder %v2284, %v943
        %vm2507 = vcmp.eq.f32.partialorder %v2288, %v935
        %vm2508 = vcmp.eq.f32.partialorder %v2288, %v939
        %vm2509 = vcmp.eq.f32.partialorder %v2288, %v943
        %vm2510 = vcmp.eq.f32.partialorder %v2292, %v935
        %vm2511 = vcmp.eq.f32.partialorder %v2292, %v939
        %vm2512 = vcmp.eq.f32.partialorder %v2292, %v943
        %vm2513 = vcmp.eq.f32.partialorder %v2296, %v935
        %vm2514 = vcmp.eq.f32.partialorder %v2296, %v939
        %vm2515 = vcmp.eq.f32.partialorder %v2296, %v943
        %vm2516 = vcmp.eq.f32.partialorder %v2300, %v935
        %vm2517 = vcmp.eq.f32.partialorder %v2300, %v939
        %vm2518 = vcmp.eq.f32.partialorder %v2300, %v943
        %vm2519 = vcmp.eq.f32.partialorder %v2304, %v935
        %vm2520 = vcmp.eq.f32.partialorder %v2304, %v939
        %vm2521 = vcmp.eq.f32.partialorder %v2304, %v943
        %vm2522 = vcmp.eq.f32.partialorder %v2308, %v935
        %vm2523 = vcmp.eq.f32.partialorder %v2308, %v939
        %vm2524 = vcmp.eq.f32.partialorder %v2308, %v943
        %vm2525 = vcmp.eq.f32.partialorder %v2312, %v935
        %vm2526 = vcmp.eq.f32.partialorder %v2312, %v939
        %vm2527 = vcmp.eq.f32.partialorder %v2312, %v943
        %vm2528 = vcmp.eq.f32.partialorder %v2316, %v935
        %vm2529 = vcmp.eq.f32.partialorder %v2316, %v939
        %vm2530 = vcmp.eq.f32.partialorder %v2316, %v943
        %vm2531 = vcmp.eq.f32.partialorder %v2320, %v935
        %vm2532 = vcmp.eq.f32.partialorder %v2320, %v939
        %vm2533 = vcmp.eq.f32.partialorder %v2320, %v943
        %vm2534 = vcmp.eq.f32.partialorder %v2324, %v935
        %vm2535 = vcmp.eq.f32.partialorder %v2324, %v939
        %vm2536 = vcmp.eq.f32.partialorder %v2324, %v943
        %vm2537 = vcmp.eq.f32.partialorder %v2328, %v935
        %vm2538 = vcmp.eq.f32.partialorder %v2328, %v939
        %vm2539 = vcmp.eq.f32.partialorder %v2328, %v943
        %vm2540 = vcmp.eq.f32.partialorder %v2332, %v935
        %vm2541 = vcmp.eq.f32.partialorder %v2332, %v939
        %vm2542 = vcmp.eq.f32.partialorder %v2332, %v943
        %vm2543 = vcmp.eq.f32.partialorder %v2336, %v935
        %vm2544 = vcmp.eq.f32.partialorder %v2336, %v939
        %vm2545 = vcmp.eq.f32.partialorder %v2336, %v943
        %vm2546 = vcmp.eq.f32.partialorder %v2340, %v935
        %vm2547 = vcmp.eq.f32.partialorder %v2340, %v939
        %vm2548 = vcmp.eq.f32.partialorder %v2340, %v943
        %vm2549 = vcmp.eq.f32.partialorder %v2344, %v935
        %vm2550 = vcmp.eq.f32.partialorder %v2344, %v939
        %vm2551 = vcmp.eq.f32.partialorder %v2344, %v943
        %vm2552 = vcmp.eq.f32.partialorder %v2348, %v935
        %vm2553 = vcmp.eq.f32.partialorder %v2348, %v939
        %vm2554 = vcmp.eq.f32.partialorder %v2348, %v943
        %vm2555 = vcmp.eq.f32.partialorder %v2352, %v935
        %vm2556 = vcmp.eq.f32.partialorder %v2352, %v939
        %vm2557 = vcmp.eq.f32.partialorder %v2352, %v943
        %vm2558 = vcmp.eq.f32.partialorder %v2356, %v935
        %vm2559 = vcmp.eq.f32.partialorder %v2356, %v939
        %vm2560 = vcmp.eq.f32.partialorder %v2356, %v943
        %vm2561 = vcmp.eq.f32.partialorder %v2360, %v935
        %vm2562 = vcmp.eq.f32.partialorder %v2360, %v939
        %vm2563 = vcmp.eq.f32.partialorder %v2360, %v943
        %vm2564 = vcmp.eq.f32.partialorder %v2364, %v935
        %vm2565 = vcmp.eq.f32.partialorder %v2364, %v939
        %vm2566 = vcmp.eq.f32.partialorder %v2364, %v943
        %vm2567 = vcmp.eq.f32.partialorder %v2368, %v935
        %vm2568 = vcmp.eq.f32.partialorder %v2368, %v939
        %vm2569 = vcmp.eq.f32.partialorder %v2368, %v943
        %vm2570 = vcmp.eq.f32.partialorder %v2372, %v935
        %vm2571 = vcmp.eq.f32.partialorder %v2372, %v939
        %vm2572 = vcmp.eq.f32.partialorder %v2372, %v943
        %vm2573 = vcmp.eq.f32.partialorder %v2376, %v935
        %vm2574 = vcmp.eq.f32.partialorder %v2376, %v939
        %vm2575 = vcmp.eq.f32.partialorder %v2376, %v943
        %vm2576 = vcmp.eq.f32.partialorder %v2380, %v935
        %vm2577 = vcmp.eq.f32.partialorder %v2380, %v939
        %vm2578 = vcmp.eq.f32.partialorder %v2380, %v943
        %vm2579 = vcmp.eq.f32.partialorder %v2384, %v935
        %vm2580 = vcmp.eq.f32.partialorder %v2384, %v939
        %vm2581 = vcmp.eq.f32.partialorder %v2384, %v943
        %vm2582 = vcmp.eq.f32.partialorder %v2388, %v935
        %vm2583 = vcmp.eq.f32.partialorder %v2388, %v939
        %vm2584 = vcmp.eq.f32.partialorder %v2388, %v943
        %vm2585 = vcmp.eq.f32.partialorder %v2392, %v935
        %vm2586 = vcmp.eq.f32.partialorder %v2392, %v939
        %vm2587 = vcmp.eq.f32.partialorder %v2392, %v943
        %vm2588 = vcmp.eq.f32.partialorder %v2396, %v935
        %vm2589 = vcmp.eq.f32.partialorder %v2396, %v939
        %vm2590 = vcmp.eq.f32.partialorder %v2396, %v943
        %vm2591 = vcmp.eq.f32.partialorder %v2400, %v935
        %vm2592 = vcmp.eq.f32.partialorder %v2400, %v939
        %vm2593 = vcmp.eq.f32.partialorder %v2400, %v943
        %vm2594 = vcmp.eq.f32.partialorder %v2404, %v935
        %vm2595 = vcmp.eq.f32.partialorder %v2404, %v939
        %vm2596 = vcmp.eq.f32.partialorder %v2404, %v943
        %vm2597 = vcmp.gt.s32.totalorder %v739, 256
        %vm2598 = vcmp.gt.s32.totalorder %v740, 256
        %vm2599 = vcmp.gt.s32.totalorder %v741, 256
        %vm2600 = vcmp.gt.s32.totalorder %v742, 256
        %vm2601 = vcmp.gt.s32.totalorder %v743, 256
        %vm2602 = vcmp.gt.s32.totalorder %v744, 256
        %vm2603 = vcmp.gt.s32.totalorder %v745, 256
        %vm2604 = vcmp.gt.s32.totalorder %v746, 256
        %vm2605 = vcmp.gt.s32.totalorder %v747, 256
        %vm2606 = vcmp.gt.s32.totalorder %v748, 256
        %vm2607 = vcmp.gt.s32.totalorder %v749, 256
        %vm2608 = vcmp.gt.s32.totalorder %v750, 256
        %vm2609 = vcmp.gt.s32.totalorder %v751, 256
        %vm2610 = vcmp.gt.s32.totalorder %v752, 256
        %vm2611 = vcmp.gt.s32.totalorder %v753, 256
        %vm2612 = vcmp.gt.s32.totalorder %v754, 256
        %vm2613 = vcmp.gt.s32.totalorder %v755, 256
        %vm2614 = vcmp.gt.s32.totalorder %v756, 256
        %vm2615 = vcmp.gt.s32.totalorder %v757, 256
        %vm2616 = vcmp.gt.s32.totalorder %v758, 256
        %vm2617 = vcmp.gt.s32.totalorder %v759, 256
        %vm2618 = vcmp.gt.s32.totalorder %v760, 256
        %vm2619 = vcmp.gt.s32.totalorder %v761, 256
        %vm2620 = vcmp.gt.s32.totalorder %v762, 256
        %vm2621 = vcmp.gt.s32.totalorder %v763, 256
        %vm2622 = vcmp.gt.s32.totalorder %v764, 256
        %vm2623 = vcmp.gt.s32.totalorder %v765, 256
        %vm2624 = vcmp.gt.s32.totalorder %v766, 256
        %vm2625 = vcmp.gt.s32.totalorder %v767, 256
        %vm2626 = vcmp.gt.s32.totalorder %v768, 256
        %vm2627 = vcmp.gt.s32.totalorder %v769, 256
        %vm2628 = vcmp.gt.s32.totalorder %v770, 256
        %vm2629 = vcmp.gt.s32.totalorder %v771, 256
        %vm2630 = vcmp.gt.s32.totalorder %v772, 256
        %vm2631 = vcmp.gt.s32.totalorder %v773, 256
        %vm2632 = vcmp.gt.s32.totalorder %v774, 256
        %vm2633 = vcmp.gt.s32.totalorder %v775, 256
        %vm2634 = vcmp.gt.s32.totalorder %v776, 256
        %vm2635 = vcmp.gt.s32.totalorder %v777, 256
        %vm2636 = vcmp.gt.s32.totalorder %v778, 256
        %vm2637 = vcmp.gt.s32.totalorder %v779, 256
        %vm2638 = vcmp.gt.s32.totalorder %v780, 256
        %vm2639 = vcmp.gt.s32.totalorder %v781, 256
        %vm2640 = vcmp.gt.s32.totalorder %v782, 256
        %vm2641 = vcmp.gt.s32.totalorder %v783, 256
        %vm2642 = vcmp.gt.s32.totalorder %v784, 256
        %vm2643 = vcmp.gt.s32.totalorder %v785, 256
        %vm2644 = vcmp.gt.s32.totalorder %v786, 256
        %vm2645 = vcmp.gt.s32.totalorder %v787, 256
        %vm2646 = vcmp.gt.s32.totalorder %v788, 256
        %vm2647 = vcmp.gt.s32.totalorder %v789, 256
        %vm2648 = vcmp.gt.s32.totalorder %v790, 256
        %vm2649 = vcmp.gt.s32.totalorder %v791, 256
        %vm2650 = vcmp.gt.s32.totalorder %v792, 256
        %vm2651 = vcmp.gt.s32.totalorder %v793, 256
        %vm2652 = vcmp.gt.s32.totalorder %v794, 256
        %vm2653 = vcmp.gt.s32.totalorder %v795, 256
        %vm2654 = vcmp.gt.s32.totalorder %v796, 256
        %vm2655 = vcmp.gt.s32.totalorder %v797, 256
        %vm2656 = vcmp.gt.s32.totalorder %v798, 256
        %vm2657 = vcmp.gt.s32.totalorder %v799, 256
        %vm2658 = vcmp.gt.s32.totalorder %v800, 256
        %vm2659 = vcmp.gt.s32.totalorder %v801, 256
        %vm2660 = vcmp.gt.s32.totalorder %v802, 256
        %vm2661 = vcmp.gt.s32.totalorder %v803, 256
        %vm2662 = vcmp.gt.s32.totalorder %v804, 256
        %vm2663 = vcmp.gt.s32.totalorder %v805, 256
        %vm2664 = vcmp.gt.s32.totalorder %v806, 256
        %vm2665 = vcmp.gt.s32.totalorder %v807, 256
        %vm2666 = vcmp.gt.s32.totalorder %v808, 256
        %vm2667 = vcmp.gt.s32.totalorder %v809, 256
        %vm2668 = vcmp.gt.s32.totalorder %v810, 256
        %vm2669 = vcmp.gt.s32.totalorder %v811, 256
        %vm2670 = vcmp.gt.s32.totalorder %v812, 256
        %vm2671 = vcmp.gt.s32.totalorder %v813, 256
        %vm2672 = vcmp.gt.s32.totalorder %v814, 256
        %vm2673 = vcmp.gt.s32.totalorder %v815, 256
        %vm2674 = vcmp.gt.s32.totalorder %v816, 256
        %vm2675 = vcmp.gt.s32.totalorder %v817, 256
        %vm2676 = vcmp.gt.s32.totalorder %v818, 256
        %vm2677 = vcmp.gt.s32.totalorder %v819, 256
        %vm2678 = vcmp.gt.s32.totalorder %v820, 256
        %vm2679 = vcmp.gt.s32.totalorder %v821, 256
        %vm2680 = vcmp.gt.s32.totalorder %v822, 256
        %vm2681 = vcmp.gt.s32.totalorder %v823, 256
        %vm2682 = vcmp.gt.s32.totalorder %v824, 256
        %vm2683 = vcmp.gt.s32.totalorder %v825, 256
        %vm2684 = vcmp.gt.s32.totalorder %v826, 256
        %vm2685 = vcmp.gt.s32.totalorder %v827, 256
        %vm2686 = vcmp.gt.s32.totalorder %v828, 256
        %vm2687 = vcmp.gt.s32.totalorder %v829, 256
        %vm2688 = vcmp.gt.s32.totalorder %v830, 256
        %vm2689 = vcmp.gt.s32.totalorder %v831, 256
        %vm2690 = vcmp.gt.s32.totalorder %v832, 256
        %vm2691 = vcmp.gt.s32.totalorder %v833, 256
        %vm2692 = vcmp.gt.s32.totalorder %v834, 256
        %vm2693 = vmand %vm2501, %vm2597
        %vm2694 = vmand %vm2502, %vm2598
        %vm2695 = vmand %vm2503, %vm2599
        %vm2696 = vmand %vm2504, %vm2600
        %vm2697 = vmand %vm2505, %vm2601
        %vm2698 = vmand %vm2506, %vm2602
        %vm2699 = vmand %vm2507, %vm2603
        %vm2700 = vmand %vm2508, %vm2604
        %vm2701 = vmand %vm2509, %vm2605
        %vm2702 = vmand %vm2510, %vm2606
        %vm2703 = vmand %vm2511, %vm2607
        %vm2704 = vmand %vm2512, %vm2608
        %vm2705 = vmand %vm2513, %vm2609
        %vm2706 = vmand %vm2514, %vm2610
        %vm2707 = vmand %vm2515, %vm2611
        %vm2708 = vmand %vm2516, %vm2612
        %vm2709 = vmand %vm2517, %vm2613
        %vm2710 = vmand %vm2518, %vm2614
        %vm2711 = vmand %vm2519, %vm2615
        %vm2712 = vmand %vm2520, %vm2616
        %vm2713 = vmand %vm2521, %vm2617
        %vm2714 = vmand %vm2522, %vm2618
        %vm2715 = vmand %vm2523, %vm2619
        %vm2716 = vmand %vm2524, %vm2620
        %vm2717 = vmand %vm2525, %vm2621
        %vm2718 = vmand %vm2526, %vm2622
        %vm2719 = vmand %vm2527, %vm2623
        %vm2720 = vmand %vm2528, %vm2624
        %vm2721 = vmand %vm2529, %vm2625
        %vm2722 = vmand %vm2530, %vm2626
        %vm2723 = vmand %vm2531, %vm2627
        %vm2724 = vmand %vm2532, %vm2628
        %vm2725 = vmand %vm2533, %vm2629
        %vm2726 = vmand %vm2534, %vm2630
        %vm2727 = vmand %vm2535, %vm2631
        %vm2728 = vmand %vm2536, %vm2632
        %vm2729 = vmand %vm2537, %vm2633
        %vm2730 = vmand %vm2538, %vm2634
        %vm2731 = vmand %vm2539, %vm2635
        %vm2732 = vmand %vm2540, %vm2636
        %vm2733 = vmand %vm2541, %vm2637
        %vm2734 = vmand %vm2542, %vm2638
        %vm2735 = vmand %vm2543, %vm2639
        %vm2736 = vmand %vm2544, %vm2640
        %vm2737 = vmand %vm2545, %vm2641
        %vm2738 = vmand %vm2546, %vm2642
        %vm2739 = vmand %vm2547, %vm2643
        %vm2740 = vmand %vm2548, %vm2644
        %vm2741 = vmand %vm2549, %vm2645
        %vm2742 = vmand %vm2550, %vm2646
        %vm2743 = vmand %vm2551, %vm2647
        %vm2744 = vmand %vm2552, %vm2648
        %vm2745 = vmand %vm2553, %vm2649
        %vm2746 = vmand %vm2554, %vm2650
        %vm2747 = vmand %vm2555, %vm2651
        %vm2748 = vmand %vm2556, %vm2652
        %vm2749 = vmand %vm2557, %vm2653
        %vm2750 = vmand %vm2558, %vm2654
        %vm2751 = vmand %vm2559, %vm2655
        %vm2752 = vmand %vm2560, %vm2656
        %vm2753 = vmand %vm2561, %vm2657
        %vm2754 = vmand %vm2562, %vm2658
        %vm2755 = vmand %vm2563, %vm2659
        %vm2756 = vmand %vm2564, %vm2660
        %vm2757 = vmand %vm2565, %vm2661
        %vm2758 = vmand %vm2566, %vm2662
        %vm2759 = vmand %vm2567, %vm2663
        %vm2760 = vmand %vm2568, %vm2664
        %vm2761 = vmand %vm2569, %vm2665
        %vm2762 = vmand %vm2570, %vm2666
        %vm2763 = vmand %vm2571, %vm2667
        %vm2764 = vmand %vm2572, %vm2668
        %vm2765 = vmand %vm2573, %vm2669
        %vm2766 = vmand %vm2574, %vm2670
        %vm2767 = vmand %vm2575, %vm2671
        %vm2768 = vmand %vm2576, %vm2672
        %vm2769 = vmand %vm2577, %vm2673
        %vm2770 = vmand %vm2578, %vm2674
        %vm2771 = vmand %vm2579, %vm2675
        %vm2772 = vmand %vm2580, %vm2676
        %vm2773 = vmand %vm2581, %vm2677
        %vm2774 = vmand %vm2582, %vm2678
        %vm2775 = vmand %vm2583, %vm2679
        %vm2776 = vmand %vm2584, %vm2680
        %vm2777 = vmand %vm2585, %vm2681
        %vm2778 = vmand %vm2586, %vm2682
        %vm2779 = vmand %vm2587, %vm2683
        %vm2780 = vmand %vm2588, %vm2684
        %vm2781 = vmand %vm2589, %vm2685
        %vm2782 = vmand %vm2590, %vm2686
        %vm2783 = vmand %vm2591, %vm2687
        %vm2784 = vmand %vm2592, %vm2688
        %vm2785 = vmand %vm2593, %vm2689
        %vm2786 = vmand %vm2594, %vm2690
        %vm2787 = vmand %vm2595, %vm2691
        %vm2788 = vmand %vm2596, %vm2692
        %vm2789 = vmor %vm2405, %vm2693
        %vm2790 = vmor %vm2406, %vm2694
        %vm2791 = vmor %vm2407, %vm2695
        %vm2792 = vmor %vm2408, %vm2696
        %vm2793 = vmor %vm2409, %vm2697
        %vm2794 = vmor %vm2410, %vm2698
        %vm2795 = vmor %vm2411, %vm2699
        %vm2796 = vmor %vm2412, %vm2700
        %vm2797 = vmor %vm2413, %vm2701
        %vm2798 = vmor %vm2414, %vm2702
        %vm2799 = vmor %vm2415, %vm2703
        %vm2800 = vmor %vm2416, %vm2704
        %vm2801 = vmor %vm2417, %vm2705
        %vm2802 = vmor %vm2418, %vm2706
        %vm2803 = vmor %vm2419, %vm2707
        %vm2804 = vmor %vm2420, %vm2708
        %vm2805 = vmor %vm2421, %vm2709
        %vm2806 = vmor %vm2422, %vm2710
        %vm2807 = vmor %vm2423, %vm2711
        %vm2808 = vmor %vm2424, %vm2712
        %vm2809 = vmor %vm2425, %vm2713
        %vm2810 = vmor %vm2426, %vm2714
        %vm2811 = vmor %vm2427, %vm2715
        %vm2812 = vmor %vm2428, %vm2716
        %vm2813 = vmor %vm2429, %vm2717
        %vm2814 = vmor %vm2430, %vm2718
        %vm2815 = vmor %vm2431, %vm2719
        %vm2816 = vmor %vm2432, %vm2720
        %vm2817 = vmor %vm2433, %vm2721
        %vm2818 = vmor %vm2434, %vm2722
        %vm2819 = vmor %vm2435, %vm2723
        %vm2820 = vmor %vm2436, %vm2724
        %vm2821 = vmor %vm2437, %vm2725
        %vm2822 = vmor %vm2438, %vm2726
        %vm2823 = vmor %vm2439, %vm2727
        %vm2824 = vmor %vm2440, %vm2728
        %vm2825 = vmor %vm2441, %vm2729
        %vm2826 = vmor %vm2442, %vm2730
        %vm2827 = vmor %vm2443, %vm2731
        %vm2828 = vmor %vm2444, %vm2732
        %vm2829 = vmor %vm2445, %vm2733
        %vm2830 = vmor %vm2446, %vm2734
        %vm2831 = vmor %vm2447, %vm2735
        %vm2832 = vmor %vm2448, %vm2736
        %vm2833 = vmor %vm2449, %vm2737
        %vm2834 = vmor %vm2450, %vm2738
        %vm2835 = vmor %vm2451, %vm2739
        %vm2836 = vmor %vm2452, %vm2740
        %vm2837 = vmor %vm2453, %vm2741
        %vm2838 = vmor %vm2454, %vm2742
        %vm2839 = vmor %vm2455, %vm2743
        %vm2840 = vmor %vm2456, %vm2744
        %vm2841 = vmor %vm2457, %vm2745
        %vm2842 = vmor %vm2458, %vm2746
        %vm2843 = vmor %vm2459, %vm2747
        %vm2844 = vmor %vm2460, %vm2748
        %vm2845 = vmor %vm2461, %vm2749
        %vm2846 = vmor %vm2462, %vm2750
        %vm2847 = vmor %vm2463, %vm2751
        %vm2848 = vmor %vm2464, %vm2752
        %vm2849 = vmor %vm2465, %vm2753
        %vm2850 = vmor %vm2466, %vm2754
        %vm2851 = vmor %vm2467, %vm2755
        %vm2852 = vmor %vm2468, %vm2756
        %vm2853 = vmor %vm2469, %vm2757
        %vm2854 = vmor %vm2470, %vm2758
        %vm2855 = vmor %vm2471, %vm2759
        %vm2856 = vmor %vm2472, %vm2760
        %vm2857 = vmor %vm2473, %vm2761
        %vm2858 = vmor %vm2474, %vm2762
        %vm2859 = vmor %vm2475, %vm2763
        %vm2860 = vmor %vm2476, %vm2764
        %vm2861 = vmor %vm2477, %vm2765
        %vm2862 = vmor %vm2478, %vm2766
        %vm2863 = vmor %vm2479, %vm2767
        %vm2864 = vmor %vm2480, %vm2768
        %vm2865 = vmor %vm2481, %vm2769
        %vm2866 = vmor %vm2482, %vm2770
        %vm2867 = vmor %vm2483, %vm2771
        %vm2868 = vmor %vm2484, %vm2772
        %vm2869 = vmor %vm2485, %vm2773
        %vm2870 = vmor %vm2486, %vm2774
        %vm2871 = vmor %vm2487, %vm2775
        %vm2872 = vmor %vm2488, %vm2776
        %vm2873 = vmor %vm2489, %vm2777
        %vm2874 = vmor %vm2490, %vm2778
        %vm2875 = vmor %vm2491, %vm2779
        %vm2876 = vmor %vm2492, %vm2780
        %vm2877 = vmor %vm2493, %vm2781
        %vm2878 = vmor %vm2494, %vm2782
        %vm2879 = vmor %vm2495, %vm2783
        %vm2880 = vmor %vm2496, %vm2784
        %vm2881 = vmor %vm2497, %vm2785
        %vm2882 = vmor %vm2498, %vm2786
        %vm2883 = vmor %vm2499, %vm2787
        %vm2884 = vmor %vm2500, %vm2788
        %vm2885 = vcmp.lt.s32.totalorder %v707, 128
        %vm2886 = vcmp.lt.s32.totalorder %v708, 128
        %vm2887 = vcmp.lt.s32.totalorder %v709, 128
        %vm2888 = vcmp.lt.s32.totalorder %v710, 128
        %vm2889 = vcmp.lt.s32.totalorder %v711, 128
        %vm2890 = vcmp.lt.s32.totalorder %v712, 128
        %vm2891 = vcmp.lt.s32.totalorder %v713, 128
        %vm2892 = vcmp.lt.s32.totalorder %v714, 128
        %vm2893 = vcmp.lt.s32.totalorder %v715, 128
        %vm2894 = vcmp.lt.s32.totalorder %v716, 128
        %vm2895 = vcmp.lt.s32.totalorder %v717, 128
        %vm2896 = vcmp.lt.s32.totalorder %v718, 128
        %vm2897 = vcmp.lt.s32.totalorder %v719, 128
        %vm2898 = vcmp.lt.s32.totalorder %v720, 128
        %vm2899 = vcmp.lt.s32.totalorder %v721, 128
        %vm2900 = vcmp.lt.s32.totalorder %v722, 128
        %vm2901 = vcmp.lt.s32.totalorder %v723, 128
        %vm2902 = vcmp.lt.s32.totalorder %v724, 128
        %vm2903 = vcmp.lt.s32.totalorder %v725, 128
        %vm2904 = vcmp.lt.s32.totalorder %v726, 128
        %vm2905 = vcmp.lt.s32.totalorder %v727, 128
        %vm2906 = vcmp.lt.s32.totalorder %v728, 128
        %vm2907 = vcmp.lt.s32.totalorder %v729, 128
        %vm2908 = vcmp.lt.s32.totalorder %v730, 128
        %vm2909 = vcmp.lt.s32.totalorder %v731, 128
        %vm2910 = vcmp.lt.s32.totalorder %v732, 128
        %vm2911 = vcmp.lt.s32.totalorder %v733, 128
        %vm2912 = vcmp.lt.s32.totalorder %v734, 128
        %vm2913 = vcmp.lt.s32.totalorder %v735, 128
        %vm2914 = vcmp.lt.s32.totalorder %v736, 128
        %vm2915 = vcmp.lt.s32.totalorder %v737, 128
        %vm2916 = vcmp.lt.s32.totalorder %v738, 128
        %vm2917 = vmand %vm2789, %vm2885
        %vm2918 = vmand %vm2790, %vm2885
        %vm2919 = vmand %vm2791, %vm2885
        %vm2920 = vmand %vm2792, %vm2886
        %vm2921 = vmand %vm2793, %vm2886
        %vm2922 = vmand %vm2794, %vm2886
        %vm2923 = vmand %vm2795, %vm2887
        %vm2924 = vmand %vm2796, %vm2887
        %vm2925 = vmand %vm2797, %vm2887
        %vm2926 = vmand %vm2798, %vm2888
        %vm2927 = vmand %vm2799, %vm2888
        %vm2928 = vmand %vm2800, %vm2888
        %vm2929 = vmand %vm2801, %vm2889
        %vm2930 = vmand %vm2802, %vm2889
        %vm2931 = vmand %vm2803, %vm2889
        %vm2932 = vmand %vm2804, %vm2890
        %vm2933 = vmand %vm2805, %vm2890
        %vm2934 = vmand %vm2806, %vm2890
        %vm2935 = vmand %vm2807, %vm2891
        %vm2936 = vmand %vm2808, %vm2891
        %vm2937 = vmand %vm2809, %vm2891
        %vm2938 = vmand %vm2810, %vm2892
        %vm2939 = vmand %vm2811, %vm2892
        %vm2940 = vmand %vm2812, %vm2892
        %vm2941 = vmand %vm2813, %vm2893
        %vm2942 = vmand %vm2814, %vm2893
        %vm2943 = vmand %vm2815, %vm2893
        %vm2944 = vmand %vm2816, %vm2894
        %vm2945 = vmand %vm2817, %vm2894
        %vm2946 = vmand %vm2818, %vm2894
        %vm2947 = vmand %vm2819, %vm2895
        %vm2948 = vmand %vm2820, %vm2895
        %vm2949 = vmand %vm2821, %vm2895
        %vm2950 = vmand %vm2822, %vm2896
        %vm2951 = vmand %vm2823, %vm2896
        %vm2952 = vmand %vm2824, %vm2896
        %vm2953 = vmand %vm2825, %vm2897
        %vm2954 = vmand %vm2826, %vm2897
        %vm2955 = vmand %vm2827, %vm2897
        %vm2956 = vmand %vm2828, %vm2898
        %vm2957 = vmand %vm2829, %vm2898
        %vm2958 = vmand %vm2830, %vm2898
        %vm2959 = vmand %vm2831, %vm2899
        %vm2960 = vmand %vm2832, %vm2899
        %vm2961 = vmand %vm2833, %vm2899
        %vm2962 = vmand %vm2834, %vm2900
        %vm2963 = vmand %vm2835, %vm2900
        %vm2964 = vmand %vm2836, %vm2900
        %vm2965 = vmand %vm2837, %vm2901
        %vm2966 = vmand %vm2838, %vm2901
        %vm2967 = vmand %vm2839, %vm2901
        %vm2968 = vmand %vm2840, %vm2902
        %vm2969 = vmand %vm2841, %vm2902
        %vm2970 = vmand %vm2842, %vm2902
        %vm2971 = vmand %vm2843, %vm2903
        %vm2972 = vmand %vm2844, %vm2903
        %vm2973 = vmand %vm2845, %vm2903
        %vm2974 = vmand %vm2846, %vm2904
        %vm2975 = vmand %vm2847, %vm2904
        %vm2976 = vmand %vm2848, %vm2904
        %vm2977 = vmand %vm2849, %vm2905
        %vm2978 = vmand %vm2850, %vm2905
        %vm2979 = vmand %vm2851, %vm2905
        %vm2980 = vmand %vm2852, %vm2906
        %vm2981 = vmand %vm2853, %vm2906
        %vm2982 = vmand %vm2854, %vm2906
        %vm2983 = vmand %vm2855, %vm2907
        %vm2984 = vmand %vm2856, %vm2907
        %vm2985 = vmand %vm2857, %vm2907
        %vm2986 = vmand %vm2858, %vm2908
        %vm2987 = vmand %vm2859, %vm2908
        %vm2988 = vmand %vm2860, %vm2908
        %vm2989 = vmand %vm2861, %vm2909
        %vm2990 = vmand %vm2862, %vm2909
        %vm2991 = vmand %vm2863, %vm2909
        %vm2992 = vmand %vm2864, %vm2910
        %vm2993 = vmand %vm2865, %vm2910
        %vm2994 = vmand %vm2866, %vm2910
        %vm2995 = vmand %vm2867, %vm2911
        %vm2996 = vmand %vm2868, %vm2911
        %vm2997 = vmand %vm2869, %vm2911
        %vm2998 = vmand %vm2870, %vm2912
        %vm2999 = vmand %vm2871, %vm2912
        %vm3000 = vmand %vm2872, %vm2912
        %vm3001 = vmand %vm2873, %vm2913
        %vm3002 = vmand %vm2874, %vm2913
        %vm3003 = vmand %vm2875, %vm2913
        %vm3004 = vmand %vm2876, %vm2914
        %vm3005 = vmand %vm2877, %vm2914
        %vm3006 = vmand %vm2878, %vm2914
        %vm3007 = vmand %vm2879, %vm2915
        %vm3008 = vmand %vm2880, %vm2915
        %vm3009 = vmand %vm2881, %vm2915
        %vm3010 = vmand %vm2882, %vm2916
        %vm3011 = vmand %vm2883, %vm2916
        %vm3012 = vmand %vm2884, %vm2916
        %v3013 = vsel %vm2917, 1, 0
        %v3014 = vsel %vm2918, 1, 0
        %v3015 = vsel %vm2919, 1, 0
        %v3016 = vsel %vm2920, 1, 0
        %v3017 = vsel %vm2921, 1, 0
        %v3018 = vsel %vm2922, 1, 0
        %v3019 = vsel %vm2923, 1, 0
        %v3020 = vsel %vm2924, 1, 0
        %v3021 = vsel %vm2925, 1, 0
        %v3022 = vsel %vm2926, 1, 0
        %v3023 = vsel %vm2927, 1, 0
        %v3024 = vsel %vm2928, 1, 0
        %v3025 = vsel %vm2929, 1, 0
        %v3026 = vsel %vm2930, 1, 0
        %v3027 = vsel %vm2931, 1, 0
        %v3028 = vsel %vm2932, 1, 0
        %v3029 = vsel %vm2933, 1, 0
        %v3030 = vsel %vm2934, 1, 0
        %v3031 = vsel %vm2935, 1, 0
        %v3032 = vsel %vm2936, 1, 0
        %v3033 = vsel %vm2937, 1, 0
        %v3034 = vsel %vm2938, 1, 0
        %v3035 = vsel %vm2939, 1, 0
        %v3036 = vsel %vm2940, 1, 0
        %v3037 = vsel %vm2941, 1, 0
        %v3038 = vsel %vm2942, 1, 0
        %v3039 = vsel %vm2943, 1, 0
        %v3040 = vsel %vm2944, 1, 0
        %v3041 = vsel %vm2945, 1, 0
        %v3042 = vsel %vm2946, 1, 0
        %v3043 = vsel %vm2947, 1, 0
        %v3044 = vsel %vm2948, 1, 0
        %v3045 = vsel %vm2949, 1, 0
        %v3046 = vsel %vm2950, 1, 0
        %v3047 = vsel %vm2951, 1, 0
        %v3048 = vsel %vm2952, 1, 0
        %v3049 = vsel %vm2953, 1, 0
        %v3050 = vsel %vm2954, 1, 0
        %v3051 = vsel %vm2955, 1, 0
        %v3052 = vsel %vm2956, 1, 0
        %v3053 = vsel %vm2957, 1, 0
        %v3054 = vsel %vm2958, 1, 0
        %v3055 = vsel %vm2959, 1, 0
        %v3056 = vsel %vm2960, 1, 0
        %v3057 = vsel %vm2961, 1, 0
        %v3058 = vsel %vm2962, 1, 0
        %v3059 = vsel %vm2963, 1, 0
        %v3060 = vsel %vm2964, 1, 0
        %v3061 = vsel %vm2965, 1, 0
        %v3062 = vsel %vm2966, 1, 0
        %v3063 = vsel %vm2967, 1, 0
        %v3064 = vsel %vm2968, 1, 0
        %v3065 = vsel %vm2969, 1, 0
        %v3066 = vsel %vm2970, 1, 0
        %v3067 = vsel %vm2971, 1, 0
        %v3068 = vsel %vm2972, 1, 0
        %v3069 = vsel %vm2973, 1, 0
        %v3070 = vsel %vm2974, 1, 0
        %v3071 = vsel %vm2975, 1, 0
        %v3072 = vsel %vm2976, 1, 0
        %v3073 = vsel %vm2977, 1, 0
        %v3074 = vsel %vm2978, 1, 0
        %v3075 = vsel %vm2979, 1, 0
        %v3076 = vsel %vm2980, 1, 0
        %v3077 = vsel %vm2981, 1, 0
        %v3078 = vsel %vm2982, 1, 0
        %v3079 = vsel %vm2983, 1, 0
        %v3080 = vsel %vm2984, 1, 0
        %v3081 = vsel %vm2985, 1, 0
        %v3082 = vsel %vm2986, 1, 0
        %v3083 = vsel %vm2987, 1, 0
        %v3084 = vsel %vm2988, 1, 0
        %v3085 = vsel %vm2989, 1, 0
        %v3086 = vsel %vm2990, 1, 0
        %v3087 = vsel %vm2991, 1, 0
        %v3088 = vsel %vm2992, 1, 0
        %v3089 = vsel %vm2993, 1, 0
        %v3090 = vsel %vm2994, 1, 0
        %v3091 = vsel %vm2995, 1, 0
        %v3092 = vsel %vm2996, 1, 0
        %v3093 = vsel %vm2997, 1, 0
        %v3094 = vsel %vm2998, 1, 0
        %v3095 = vsel %vm2999, 1, 0
        %v3096 = vsel %vm3000, 1, 0
        %v3097 = vsel %vm3001, 1, 0
        %v3098 = vsel %vm3002, 1, 0
        %v3099 = vsel %vm3003, 1, 0
        %v3100 = vsel %vm3004, 1, 0
        %v3101 = vsel %vm3005, 1, 0
        %v3102 = vsel %vm3006, 1, 0
        %v3103 = vsel %vm3007, 1, 0
        %v3104 = vsel %vm3008, 1, 0
        %v3105 = vsel %vm3009, 1, 0
        %v3106 = vsel %vm3010, 1, 0
        %v3107 = vsel %vm3011, 1, 0
        %v3108 = vsel %vm3012, 1, 0
        %v3109 = vcvt.s32.f32 %v3013
        %v3110 = vcvt.s32.f32 %v3014
        %v3111 = vcvt.s32.f32 %v3015
        %v3112 = vcvt.s32.f32 %v3016
        %v3113 = vcvt.s32.f32 %v3017
        %v3114 = vcvt.s32.f32 %v3018
        %v3115 = vcvt.s32.f32 %v3019
        %v3116 = vcvt.s32.f32 %v3020
        %v3117 = vcvt.s32.f32 %v3021
        %v3118 = vcvt.s32.f32 %v3022
        %v3119 = vcvt.s32.f32 %v3023
        %v3120 = vcvt.s32.f32 %v3024
        %v3121 = vcvt.s32.f32 %v3025
        %v3122 = vcvt.s32.f32 %v3026
        %v3123 = vcvt.s32.f32 %v3027
        %v3124 = vcvt.s32.f32 %v3028
        %v3125 = vcvt.s32.f32 %v3029
        %v3126 = vcvt.s32.f32 %v3030
        %v3127 = vcvt.s32.f32 %v3031
        %v3128 = vcvt.s32.f32 %v3032
        %v3129 = vcvt.s32.f32 %v3033
        %v3130 = vcvt.s32.f32 %v3034
        %v3131 = vcvt.s32.f32 %v3035
        %v3132 = vcvt.s32.f32 %v3036
        %v3133 = vcvt.s32.f32 %v3037
        %v3134 = vcvt.s32.f32 %v3038
        %v3135 = vcvt.s32.f32 %v3039
        %v3136 = vcvt.s32.f32 %v3040
        %v3137 = vcvt.s32.f32 %v3041
        %v3138 = vcvt.s32.f32 %v3042
        %v3139 = vcvt.s32.f32 %v3043
        %v3140 = vcvt.s32.f32 %v3044
        %v3141 = vcvt.s32.f32 %v3045
        %v3142 = vcvt.s32.f32 %v3046
        %v3143 = vcvt.s32.f32 %v3047
        %v3144 = vcvt.s32.f32 %v3048
        %v3145 = vcvt.s32.f32 %v3049
        %v3146 = vcvt.s32.f32 %v3050
        %v3147 = vcvt.s32.f32 %v3051
        %v3148 = vcvt.s32.f32 %v3052
        %v3149 = vcvt.s32.f32 %v3053
        %v3150 = vcvt.s32.f32 %v3054
        %v3151 = vcvt.s32.f32 %v3055
        %v3152 = vcvt.s32.f32 %v3056
        %v3153 = vcvt.s32.f32 %v3057
        %v3154 = vcvt.s32.f32 %v3058
        %v3155 = vcvt.s32.f32 %v3059
        %v3156 = vcvt.s32.f32 %v3060
        %v3157 = vcvt.s32.f32 %v3061
        %v3158 = vcvt.s32.f32 %v3062
        %v3159 = vcvt.s32.f32 %v3063
        %v3160 = vcvt.s32.f32 %v3064
        %v3161 = vcvt.s32.f32 %v3065
        %v3162 = vcvt.s32.f32 %v3066
        %v3163 = vcvt.s32.f32 %v3067
        %v3164 = vcvt.s32.f32 %v3068
        %v3165 = vcvt.s32.f32 %v3069
        %v3166 = vcvt.s32.f32 %v3070
        %v3167 = vcvt.s32.f32 %v3071
        %v3168 = vcvt.s32.f32 %v3072
        %v3169 = vcvt.s32.f32 %v3073
        %v3170 = vcvt.s32.f32 %v3074
        %v3171 = vcvt.s32.f32 %v3075
        %v3172 = vcvt.s32.f32 %v3076
        %v3173 = vcvt.s32.f32 %v3077
        %v3174 = vcvt.s32.f32 %v3078
        %v3175 = vcvt.s32.f32 %v3079
        %v3176 = vcvt.s32.f32 %v3080
        %v3177 = vcvt.s32.f32 %v3081
        %v3178 = vcvt.s32.f32 %v3082
        %v3179 = vcvt.s32.f32 %v3083
        %v3180 = vcvt.s32.f32 %v3084
        %v3181 = vcvt.s32.f32 %v3085
        %v3182 = vcvt.s32.f32 %v3086
        %v3183 = vcvt.s32.f32 %v3087
        %v3184 = vcvt.s32.f32 %v3088
        %v3185 = vcvt.s32.f32 %v3089
        %v3186 = vcvt.s32.f32 %v3090
        %v3187 = vcvt.s32.f32 %v3091
        %v3188 = vcvt.s32.f32 %v3092
        %v3189 = vcvt.s32.f32 %v3093
        %v3190 = vcvt.s32.f32 %v3094
        %v3191 = vcvt.s32.f32 %v3095
        %v3192 = vcvt.s32.f32 %v3096
        %v3193 = vcvt.s32.f32 %v3097
        %v3194 = vcvt.s32.f32 %v3098
        %v3195 = vcvt.s32.f32 %v3099
        %v3196 = vcvt.s32.f32 %v3100
        %v3197 = vcvt.s32.f32 %v3101
        %v3198 = vcvt.s32.f32 %v3102
        %v3199 = vcvt.s32.f32 %v3103
        %v3200 = vcvt.s32.f32 %v3104
        %v3201 = vcvt.s32.f32 %v3105
        %v3202 = vcvt.s32.f32 %v3106
        %v3203 = vcvt.s32.f32 %v3107
        %v3204 = vcvt.s32.f32 %v3108
        %v3205 = vadd.f32 %v3109, %v3112
        %v3206 = vadd.f32 %v3205, %v3115
        %v3207 = vadd.f32 %v3206, %v3118
        %v3208 = vadd.f32 %v3207, %v3121
        %v3209 = vadd.f32 %v3208, %v3124
        %v3210 = vadd.f32 %v3209, %v3127
        %v3211 = vadd.f32 %v3210, %v3130
        %v3212 = vadd.f32 %v3211, %v3133
        %v3213 = vadd.f32 %v3212, %v3136
        %v3214 = vadd.f32 %v3213, %v3139
        %v3215 = vadd.f32 %v3214, %v3142
        %v3216 = vadd.f32 %v3215, %v3145
        %v3217 = vadd.f32 %v3216, %v3148
        %v3218 = vadd.f32 %v3217, %v3151
        %v3219 = vadd.f32 %v3218, %v3154
        %v3220 = vadd.f32 %v3219, %v3157
        %v3221 = vadd.f32 %v3220, %v3160
        %v3222 = vadd.f32 %v3221, %v3163
        %v3223 = vadd.f32 %v3222, %v3166
        %v3224 = vadd.f32 %v3223, %v3169
        %v3225 = vadd.f32 %v3224, %v3172
        %v3226 = vadd.f32 %v3225, %v3175
        %v3227 = vadd.f32 %v3226, %v3178
        %v3228 = vadd.f32 %v3227, %v3181
        %v3229 = vadd.f32 %v3228, %v3184
        %v3230 = vadd.f32 %v3229, %v3187
        %v3231 = vadd.f32 %v3230, %v3190
        %v3232 = vadd.f32 %v3231, %v3193
        %v3233 = vadd.f32 %v3232, %v3196
        %v3234 = vadd.f32 %v3233, %v3199
        %v3235 = vadd.f32 %v3234, %v3202
        %v3236 = vrot.slane %v3235, 4
        %v3237 = vadd.f32 %v3235, %v3236
        %v3238 = vrot.slane %v3237, 2
        %v3239 = vadd.f32 %v3237, %v3238
        %v3240 = vrot.slane %v3239, 1
        %v3241 = vadd.f32 %v3239, %v3240
        %v3242 = vadd.f32 %v3110, %v3113
        %v3243 = vadd.f32 %v3242, %v3116
        %v3244 = vadd.f32 %v3243, %v3119
        %v3245 = vadd.f32 %v3244, %v3122
        %v3246 = vadd.f32 %v3245, %v3125
        %v3247 = vadd.f32 %v3246, %v3128
        %v3248 = vadd.f32 %v3247, %v3131
        %v3249 = vadd.f32 %v3248, %v3134
        %v3250 = vadd.f32 %v3249, %v3137
        %v3251 = vadd.f32 %v3250, %v3140
        %v3252 = vadd.f32 %v3251, %v3143
        %v3253 = vadd.f32 %v3252, %v3146
        %v3254 = vadd.f32 %v3253, %v3149
        %v3255 = vadd.f32 %v3254, %v3152
        %v3256 = vadd.f32 %v3255, %v3155
        %v3257 = vadd.f32 %v3256, %v3158
        %v3258 = vadd.f32 %v3257, %v3161
        %v3259 = vadd.f32 %v3258, %v3164
        %v3260 = vadd.f32 %v3259, %v3167
        %v3261 = vadd.f32 %v3260, %v3170
        %v3262 = vadd.f32 %v3261, %v3173
        %v3263 = vadd.f32 %v3262, %v3176
        %v3264 = vadd.f32 %v3263, %v3179
        %v3265 = vadd.f32 %v3264, %v3182
        %v3266 = vadd.f32 %v3265, %v3185
        %v3267 = vadd.f32 %v3266, %v3188
        %v3268 = vadd.f32 %v3267, %v3191
        %v3269 = vadd.f32 %v3268, %v3194
        %v3270 = vadd.f32 %v3269, %v3197
        %v3271 = vadd.f32 %v3270, %v3200
        %v3272 = vadd.f32 %v3271, %v3203
        %v3273 = vrot.slane %v3272, 4
        %v3274 = vadd.f32 %v3272, %v3273
        %v3275 = vrot.slane %v3274, 2
        %v3276 = vadd.f32 %v3274, %v3275
        %v3277 = vrot.slane %v3276, 1
        %v3278 = vadd.f32 %v3276, %v3277
        %v3279 = vadd.f32 %v3111, %v3114
        %v3280 = vadd.f32 %v3279, %v3117
        %v3281 = vadd.f32 %v3280, %v3120
        %v3282 = vadd.f32 %v3281, %v3123
        %v3283 = vadd.f32 %v3282, %v3126
        %v3284 = vadd.f32 %v3283, %v3129
        %v3285 = vadd.f32 %v3284, %v3132
        %v3286 = vadd.f32 %v3285, %v3135
        %v3287 = vadd.f32 %v3286, %v3138
        %v3288 = vadd.f32 %v3287, %v3141
        %v3289 = vadd.f32 %v3288, %v3144
        %v3290 = vadd.f32 %v3289, %v3147
        %v3291 = vadd.f32 %v3290, %v3150
        %v3292 = vadd.f32 %v3291, %v3153
        %v3293 = vadd.f32 %v3292, %v3156
        %v3294 = vadd.f32 %v3293, %v3159
        %v3295 = vadd.f32 %v3294, %v3162
        %v3296 = vadd.f32 %v3295, %v3165
        %v3297 = vadd.f32 %v3296, %v3168
        %v3298 = vadd.f32 %v3297, %v3171
        %v3299 = vadd.f32 %v3298, %v3174
        %v3300 = vadd.f32 %v3299, %v3177
        %v3301 = vadd.f32 %v3300, %v3180
        %v3302 = vadd.f32 %v3301, %v3183
        %v3303 = vadd.f32 %v3302, %v3186
        %v3304 = vadd.f32 %v3303, %v3189
        %v3305 = vadd.f32 %v3304, %v3192
        %v3306 = vadd.f32 %v3305, %v3195
        %v3307 = vadd.f32 %v3306, %v3198
        %v3308 = vadd.f32 %v3307, %v3201
        %v3309 = vadd.f32 %v3308, %v3204
        %v3310 = vrot.slane %v3309, 4
        %v3311 = vadd.f32 %v3309, %v3310
        %v3312 = vrot.slane %v3311, 2
        %v3313 = vadd.f32 %v3311, %v3312
        %v3314 = vrot.slane %v3313, 1
        %v3315 = vadd.f32 %v3313, %v3314
        %v3316 = vadd.f32 %v2082, %v3241
        %v3317 = vadd.f32 %v2083, %v3278
        %v3318 = vadd.f32 %v2084, %v3315
        %v3319 = vstv %s673
        %vm3320 = vcmp.lt.f32.partialorder %v3316, %v3319
        %vm3321 = vcmp.lt.f32.partialorder %v3317, %v3319
        %vm3322 = vcmp.lt.f32.partialorder %v3318, %v3319
        %v3323 = vsel %vm3320, 1, 0
        %v3324 = vsel %vm3321, 1, 0
        %v3325 = vsel %vm3322, 1, 0
        %v3326 = vcombine.low %v3323, %v3324
        %v3328 = vunpack.c.l.s4 1966171168
        %v3329 = vunpack.c.0.s8 %v3328
        %v3330 = vlaneseq
        %v3331 = vshrl.u32 %v3330, 7
        %v3332 = vsub.s32 %v3329, %v3331
        %v3333 = vrot.slane %v3326, %v3332
        %v3335 = vunpack.c.l.s4 1966171168
        %v3336 = vunpack.c.0.s8 %v3335
        %v3337 = vlaneseq
        %v3338 = vshrl.u32 %v3337, 7
        %v3339 = vsub.s32 %v3336, %v3338
        %v3340 = vrot.slane %v3325, %v3339
        %v3341 = vcombine.low %v3333, %v3340
        %v3343 = vunpack.c.l.s4 1966171168
        %v3344 = vunpack.c.0.s8 %v3343
        %v3345 = vlaneseq
        %v3346 = vshrl.u32 %v3345, 7
        %v3347 = vsub.s32 %v3344, %v3346
        %v3348 = vrot.slane %v3341, %v3347
        %vm3349 = vcmp.ne.s32.totalorder %v3348, 0
        %vm3350 = vmor %vm603, %vm3349
        %v3351 = vlaneseq
        %v3352 = vshrl.u32 %v3351, 7
        %v3353 = vsub.s32 0, %v3352
        %v3354 = vrot.slane %v539, %v3353
        %v3355 = vlaneseq
        %v3356 = vshrl.u32 %v3355, 7
        %v3357 = vsub.s32 1, %v3356
        %v3358 = vrot.slane %v539, %v3357
        %v3359 = vlaneseq
        %v3360 = vshrl.u32 %v3359, 7
        %v3361 = vsub.s32 2, %v3360
        %v3362 = vrot.slane %v539, %v3361
        %vm3363 = vcmp.eq.s32.totalorder %v707, %v3354
        %vm3364 = vcmp.eq.s32.totalorder %v707, %v3358
        %vm3365 = vcmp.eq.s32.totalorder %v707, %v3362
        %v3366 = vsel %vm3363, %v536, 0.0
        %v3367 = vsel %vm3364, %v537, 0.0
        %v3368 = vsel %vm3365, %v538, 0.0
        %v3369 = vrot.slane %v3366, 4
        %v3370 = vadd.f32 %v3366, %v3369
        %v3371 = vrot.slane %v3370, 2
        %v3372 = vadd.f32 %v3370, %v3371
        %v3373 = vrot.slane %v3372, 1
        %v3374 = vadd.f32 %v3372, %v3373
        %v3375 = vrot.slane %v3367, 4
        %v3376 = vadd.f32 %v3367, %v3375
        %v3377 = vrot.slane %v3376, 2
        %v3378 = vadd.f32 %v3376, %v3377
        %v3379 = vrot.slane %v3378, 1
        %v3380 = vadd.f32 %v3378, %v3379
        %v3381 = vrot.slane %v3368, 4
        %v3382 = vadd.f32 %v3368, %v3381
        %v3383 = vrot.slane %v3382, 2
        %v3384 = vadd.f32 %v3382, %v3383
        %v3385 = vrot.slane %v3384, 1
        %v3386 = vadd.f32 %v3384, %v3385
        %v3387 = vsub.f32 %v597, %v3374
        %v3388 = vsub.f32 %v598, %v3380
        %v3389 = vsub.f32 %v599, %v3386
        %v3393 = vcombine.low %v3387, %v3388
        %v3395 = vunpack.c.l.s4 1966171168
        %v3396 = vunpack.c.0.s8 %v3395
        %v3397 = vlaneseq
        %v3398 = vshrl.u32 %v3397, 7
        %v3399 = vsub.s32 %v3396, %v3398
        %v3400 = vrot.slane %v3393, %v3399
        %v3402 = vunpack.c.l.s4 1966171168
        %v3403 = vunpack.c.0.s8 %v3402
        %v3404 = vlaneseq
        %v3405 = vshrl.u32 %v3404, 7
        %v3406 = vsub.s32 %v3403, %v3405
        %v3407 = vrot.slane %v3389, %v3406
        %v3408 = vcombine.low %v3400, %v3407
        %v3410 = vunpack.c.l.s4 1966171168
        %v3411 = vunpack.c.0.s8 %v3410
        %v3412 = vlaneseq
        %v3413 = vshrl.u32 %v3412, 7
        %v3414 = vsub.s32 %v3411, %v3413
        %v3415 = vrot.slane %v3408, %v3414
        %v3417 = vsel %vm3350, %v3415, 0.0
        %v3419 = vlaneseq
        %v3420 = vshrl.u32 %v3419, 7
        %v3421 = vsub.s32 0, %v3420
        %v3422 = vrot.slane %v3417, %v3421
        %v3423 = vlaneseq
        %v3424 = vshrl.u32 %v3423, 7
        %v3425 = vsub.s32 1, %v3424
        %v3426 = vrot.slane %v3417, %v3425
        %v3427 = vlaneseq
        %v3428 = vshrl.u32 %v3427, 7
        %v3429 = vsub.s32 2, %v3428
        %v3430 = vrot.slane %v3417, %v3429
        %v3434 = vsel %vm623, %v3422, 0.0
        %v3435 = vsel %vm623, %v3426, 0.0
        %v3436 = vadd.f32 %v3434, %v3435
        %v3437 = vsel %vm623, %v3430, 0.0
        %v3438 = vadd.f32 %v3436, %v3437
        %3439 = vadd.xlane.f32.xlu0 %v3438
        %v3440 = vpop.xlane.xlu0 %3439
        %v3441 = vrot.slane %v3440, 4
        %v3442 = vadd.f32 %v3440, %v3441
        %v3443 = vrot.slane %v3442, 2
        %v3444 = vadd.f32 %v3442, %v3443
        %v3445 = vrot.slane %v3444, 1
        %v3446 = vadd.f32 %v3444, %v3445
        %s3447 = vtos %v3446
        %v3448 = vsub.f32 %v542, %v544
        %v3449 = vsub.f32 %v543, %v545
        %v3450 = vand.u32 2147483647, %v3448
        %v3451 = vand.u32 2147483647, %v3449
        %vm3452 = vcmp.lt.f32.partialorder %v3450, 1.0
        %vm3453 = vcmp.lt.f32.partialorder %v3451, 1.0
        %v3454 = vmul.f32 %v3448, 0.5
        %v3455 = vmul.f32 %v3449, 0.5
        %v3456 = vmul.f32 %v3454, %v3448
        %v3457 = vmul.f32 %v3455, %v3449
        %v3458 = vsub.f32 %v3450, 0.5
        %v3459 = vsub.f32 %v3451, 0.5
        %v3460 = vsel %vm3452, %v3456, %v3458
        %v3461 = vsel %vm3453, %v3457, %v3459
        %v3463 = vcombine.high %v3460, %v3460
        %vm3465 = vcmask 1043456
        %v3466 = vsel %vm3465, %v3460, 0.0
        %v3467 = vrot.slane %v3466, 4
        %v3468 = vadd.f32 %v3466, %v3467
        %v3469 = vrot.slane %v3468, 2
        %v3470 = vadd.f32 %v3468, %v3469
        %v3471 = vrot.slane %v3470, 1
        %v3472 = vadd.f32 %v3470, %v3471
        %v3473 = vsel %vm3465, %v3463, 0.0
        %v3474 = vrot.slane %v3473, 4
        %v3475 = vadd.f32 %v3473, %v3474
        %v3476 = vrot.slane %v3475, 2
        %v3477 = vadd.f32 %v3475, %v3476
        %v3478 = vrot.slane %v3477, 1
        %v3479 = vadd.f32 %v3477, %v3478
        %v3480 = vsel %vm3465, %v3461, 0.0
        %v3481 = vrot.slane %v3480, 4
        %v3482 = vadd.f32 %v3480, %v3481
        %v3483 = vrot.slane %v3482, 2
        %v3484 = vadd.f32 %v3482, %v3483
        %v3485 = vrot.slane %v3484, 1
        %v3486 = vadd.f32 %v3484, %v3485
        %v3490 = vcombine.low %v3472, %v3479
        %v3492 = vunpack.c.l.s4 1966171168
        %v3493 = vunpack.c.0.s8 %v3492
        %v3494 = vlaneseq
        %v3495 = vshrl.u32 %v3494, 7
        %v3496 = vsub.s32 %v3493, %v3495
        %v3497 = vrot.slane %v3490, %v3496
        %v3499 = vunpack.c.l.s4 1966171168
        %v3500 = vunpack.c.0.s8 %v3499
        %v3501 = vlaneseq
        %v3502 = vshrl.u32 %v3501, 7
        %v3503 = vsub.s32 %v3500, %v3502
        %v3504 = vrot.slane %v3486, %v3503
        %v3505 = vcombine.low %v3497, %v3504
        %v3507 = vunpack.c.l.s4 1966171168
        %v3508 = vunpack.c.0.s8 %v3507
        %v3509 = vlaneseq
        %v3510 = vshrl.u32 %v3509, 7
        %v3511 = vsub.s32 %v3508, %v3510
        %v3512 = vrot.slane %v3505, %v3511
        %v3514 = vsel %vm603, %v3512, 0.0
        %v3516 = vlaneseq
        %v3517 = vshrl.u32 %v3516, 7
        %v3518 = vsub.s32 0, %v3517
        %v3519 = vrot.slane %v3514, %v3518
        %v3520 = vlaneseq
        %v3521 = vshrl.u32 %v3520, 7
        %v3522 = vsub.s32 1, %v3521
        %v3523 = vrot.slane %v3514, %v3522
        %v3524 = vlaneseq
        %v3525 = vshrl.u32 %v3524, 7
        %v3526 = vsub.s32 2, %v3525
        %v3527 = vrot.slane %v3514, %v3526
        %v3531 = vsel %vm623, %v3519, 0.0
        %v3532 = vsel %vm623, %v3523, 0.0
        %v3533 = vadd.f32 %v3531, %v3532
        %v3534 = vsel %vm623, %v3527, 0.0
        %v3535 = vadd.f32 %v3533, %v3534
        %3536 = vadd.xlane.f32.xlu0 %v3535
        %v3537 = vpop.xlane.xlu0 %3536
        %v3538 = vrot.slane %v3537, 4
        %v3539 = vadd.f32 %v3537, %v3538
        %v3540 = vrot.slane %v3539, 2
        %v3541 = vadd.f32 %v3539, %v3540
        %v3542 = vrot.slane %v3541, 1
        %v3543 = vadd.f32 %v3541, %v3542
        %s3544 = vtos %v3543
        %v3545 = vsel %vm603, 1, 0
        %v3546 = vcvt.s32.f32 %v3545
        %v3548 = vlaneseq
        %v3549 = vshrl.u32 %v3548, 7
        %v3550 = vsub.s32 0, %v3549
        %v3551 = vrot.slane %v3546, %v3550
        %v3552 = vlaneseq
        %v3553 = vshrl.u32 %v3552, 7
        %v3554 = vsub.s32 1, %v3553
        %v3555 = vrot.slane %v3546, %v3554
        %v3556 = vlaneseq
        %v3557 = vshrl.u32 %v3556, 7
        %v3558 = vsub.s32 2, %v3557
        %v3559 = vrot.slane %v3546, %v3558
        %v3563 = vsel %vm623, %v3551, 0.0
        %v3564 = vsel %vm623, %v3555, 0.0
        %v3565 = vadd.f32 %v3563, %v3564
        %v3566 = vsel %vm623, %v3559, 0.0
        %v3567 = vadd.f32 %v3565, %v3566
        %3568 = vadd.xlane.f32.xlu0 %v3567
        %v3569 = vpop.xlane.xlu0 %3568
        %v3570 = vrot.slane %v3569, 4
        %v3571 = vadd.f32 %v3569, %v3570
        %v3572 = vrot.slane %v3571, 2
        %v3573 = vadd.f32 %v3571, %v3572
        %v3574 = vrot.slane %v3573, 1
        %v3575 = vadd.f32 %v3573, %v3574
        %s3576 = vtos %v3575
        %v3577 = vsel %vm3350, 1, 0
        %v3578 = vcvt.s32.f32 %v3577
        %v3580 = vlaneseq
        %v3581 = vshrl.u32 %v3580, 7
        %v3582 = vsub.s32 0, %v3581
        %v3583 = vrot.slane %v3578, %v3582
        %v3584 = vlaneseq
        %v3585 = vshrl.u32 %v3584, 7
        %v3586 = vsub.s32 1, %v3585
        %v3587 = vrot.slane %v3578, %v3586
        %v3588 = vlaneseq
        %v3589 = vshrl.u32 %v3588, 7
        %v3590 = vsub.s32 2, %v3589
        %v3591 = vrot.slane %v3578, %v3590
        %v3595 = vsel %vm623, %v3583, 0.0
        %v3596 = vsel %vm623, %v3587, 0.0
        %v3597 = vadd.f32 %v3595, %v3596
        %v3598 = vsel %vm623, %v3591, 0.0
        %v3599 = vadd.f32 %v3597, %v3598
        %3600 = vadd.xlane.f32.xlu0 %v3599
        %v3601 = vpop.xlane.xlu0 %3600
        %v3602 = vrot.slane %v3601, 4
        %v3603 = vadd.f32 %v3601, %v3602
        %v3604 = vrot.slane %v3603, 2
        %v3605 = vadd.f32 %v3603, %v3604
        %v3606 = vrot.slane %v3605, 1
        %v3607 = vadd.f32 %v3605, %v3606
        %s3608 = vtos %v3607
        %v3609 = vstv %s3544
        %3610 = vst [vmem:[%s513] sm:$0x1] %v3609
        %v3611 = vstv %s3447
        %3612 = vst [vmem:[%s519] sm:$0x1] %v3611
        %v3613 = vstv %s3576
        %3614 = vst [vmem:[%s525] sm:$0x1] %v3613
        %v3615 = vstv %s3608
        %3616 = vst [vmem:[%s531] sm:$0x1] %v3615
        %s3617 = sand.u32 %s203, 1
        %s3618 = scalar_lea.sflag [#allocation4], %s3617
        %s3619 = sand.u32 %s203, 1
        %s3620 = scalar_lea.vmem [#allocation11], %s3619
        %s3621 = sand.u32 %s39, 1
        %s3622 = scalar_lea.sflag [#allocation13], %s3621
        %s3623 = sand.u32 %s229, 1
        %s3624 = scalar_lea.vmem [#allocation12], %s3623
        %s3625 = sand.u32 %s39, 1
        %s3626 = scalar_lea.sflag [#allocation13], %s3625
        %s3627 = sand.u32 %s255, 1
        %s3628 = scalar_lea.vmem [#allocation14], %s3627
        %s3629 = sand.u32 %s281, 1
        %s3630 = scalar_lea.sflag [#allocation16], %s3629
        %s3631 = sand.u32 %s281, 1
        %s3632 = scalar_lea.vmem [#allocation15], %s3631
        // Predicated region
        $region65: #{tpu_custom_call.1} parent=43 // pred_check
          %p3633 = pneg %p213
        $region66: #{tpu_custom_call.1} parent=43 // pred_check_branch
          %3635 = sbr.rel (%p3633) target = $region68
        $region67: #{tpu_custom_call.1} parent=43 // pred_region
          %s3637 = ssub.s32 16, 16
          %3638 = vsyncadd %s3618, %s3637
          %s3639 = smul.addr %s39, 16
          %s3640 = scalar_lea.hbm %s6, %s3639
          %s3642 = sshll.u32 %s3620, 4
          %s3643 = int_to_ptr.vmem [resolvable:$true] %s3642
          %3645 = dma.vmem_to_hbm [thread:$0]  %s3643, 16, %s3640, %s3618
        $region68: #{tpu_custom_call.1} parent=43 // pred_fallthru
          _
        // Predicated region
        $region69: #{tpu_custom_call.1} parent=43 // pred_check
          %p3646 = pneg %p239
        $region70: #{tpu_custom_call.1} parent=43 // pred_check_branch
          %3648 = sbr.rel (%p3646) target = $region72
        $region71: #{tpu_custom_call.1} parent=43 // pred_region
          %s3650 = ssub.s32 16, 16
          %3651 = vsyncadd %s3622, %s3650
          %s3652 = smul.addr %s39, 16
          %s3653 = scalar_lea.hbm %s7, %s3652
          %s3655 = sshll.u32 %s3624, 4
          %s3656 = int_to_ptr.vmem [resolvable:$true] %s3655
          %3658 = dma.vmem_to_hbm [thread:$0]  %s3656, 16, %s3653, %s3622
        $region72: #{tpu_custom_call.1} parent=43 // pred_fallthru
          _
        // Predicated region
        $region73: #{tpu_custom_call.1} parent=43 // pred_check
          %p3659 = pneg %p265
        $region74: #{tpu_custom_call.1} parent=43 // pred_check_branch
          %3661 = sbr.rel (%p3659) target = $region76
        $region75: #{tpu_custom_call.1} parent=43 // pred_region
          %s3663 = ssub.s32 16, 16
          %3664 = vsyncadd %s3626, %s3663
          %s3665 = smul.addr %s39, 16
          %s3666 = scalar_lea.hbm %s8, %s3665
          %s3668 = sshll.u32 %s3628, 4
          %s3669 = int_to_ptr.vmem [resolvable:$true] %s3668
          %3671 = dma.vmem_to_hbm [thread:$0]  %s3669, 16, %s3666, %s3626
        $region76: #{tpu_custom_call.1} parent=43 // pred_fallthru
          _
        // Predicated region
        $region77: #{tpu_custom_call.1} parent=43 // pred_check
          %p3672 = pneg %p291
        $region78: #{tpu_custom_call.1} parent=43 // pred_check_branch
          %3674 = sbr.rel (%p3672) target = $region80
        $region79: #{tpu_custom_call.1} parent=43 // pred_region
          %s3676 = ssub.s32 16, 16
          %3677 = vsyncadd %s3630, %s3676
          %s3678 = smul.addr %s39, 16
          %s3679 = scalar_lea.hbm %s9, %s3678
          %s3681 = sshll.u32 %s3632, 4
          %s3682 = int_to_ptr.vmem [resolvable:$true] %s3681
          %3684 = dma.vmem_to_hbm [thread:$0]  %s3682, 16, %s3679, %s3630
        $region80: #{tpu_custom_call.1} parent=43 // pred_fallthru
          _
      $region44: #{tpu_custom_call.1} parent=5 // pred_fallthru
        _
      %p3685 = scmp.le.s32.totalorder 2, %s34
      // Predicated region
      $region81: #{tpu_custom_call.1} parent=5 // pred_check
        %p3686 = pneg %p3685
      $region82: #{tpu_custom_call.1} parent=5 // pred_check_branch
        %3688 = sbr.rel (%p3686) target = $region84
      $region83: #{tpu_custom_call.1} parent=5 // pred_region
        %s3689 = ssub.s32 %s34, 2
        // Predicated region
        $region85: #{tpu_custom_call.1} parent=83 // pred_check
          %p3690 = pneg %p219
        $region86: #{tpu_custom_call.1} parent=83 // pred_check_branch
          %3692 = sbr.rel (%p3690) target = $region88
        $region87: #{tpu_custom_call.1} parent=83 // pred_region
          %s3693 = sand.u32 %s204, 1
          %s3694 = scalar_lea.sflag [#allocation4], %s3693
          %s3695 = sand.u32 %s204, 1
          %s3696 = scalar_lea.vmem [#allocation11], %s3695
          %3697 = dma.done %s3694, 16
        $region88: #{tpu_custom_call.1} parent=83 // pred_fallthru
          _
        // Predicated region
        $region89: #{tpu_custom_call.1} parent=83 // pred_check
          %p3698 = pneg %p245
        $region90: #{tpu_custom_call.1} parent=83 // pred_check_branch
          %3700 = sbr.rel (%p3698) target = $region92
        $region91: #{tpu_custom_call.1} parent=83 // pred_region
          %s3701 = sand.u32 %s40, 1
          %s3702 = scalar_lea.sflag [#allocation13], %s3701
          %s3703 = sand.u32 %s230, 1
          %s3704 = scalar_lea.vmem [#allocation12], %s3703
          %3705 = dma.done %s3702, 16
        $region92: #{tpu_custom_call.1} parent=83 // pred_fallthru
          _
        // Predicated region
        $region93: #{tpu_custom_call.1} parent=83 // pred_check
          %p3706 = pneg %p271
        $region94: #{tpu_custom_call.1} parent=83 // pred_check_branch
          %3708 = sbr.rel (%p3706) target = $region96
        $region95: #{tpu_custom_call.1} parent=83 // pred_region
          %s3709 = sand.u32 %s40, 1
          %s3710 = scalar_lea.sflag [#allocation13], %s3709
          %s3711 = sand.u32 %s256, 1
          %s3712 = scalar_lea.vmem [#allocation14], %s3711
          %3713 = dma.done %s3710, 16
        $region96: #{tpu_custom_call.1} parent=83 // pred_fallthru
          _
        // Predicated region
        $region97: #{tpu_custom_call.1} parent=83 // pred_check
          %p3714 = pneg %p297
        $region98: #{tpu_custom_call.1} parent=83 // pred_check_branch
          %3716 = sbr.rel (%p3714) target = $region100
        $region99: #{tpu_custom_call.1} parent=83 // pred_region
          %s3717 = sand.u32 %s282, 1
          %s3718 = scalar_lea.sflag [#allocation16], %s3717
          %s3719 = sand.u32 %s282, 1
          %s3720 = scalar_lea.vmem [#allocation15], %s3719
          %3721 = dma.done %s3718, 16
        $region100: #{tpu_custom_call.1} parent=83 // pred_fallthru
          _
      $region84: #{tpu_custom_call.1} parent=5 // pred_fallthru
        _
    $region6: #{tpu_custom_call.1} parent=1 // loop_footer
      %s38 = sadd.s32 1, %s34
    $region7: #{tpu_custom_call.1} parent=1 // loop_footer_branch
      %33 = sbr.rel target = $region3
    $region8: #{tpu_custom_call.1} parent=1 // loop_exit
      _
    %3722 = vsyncpa [#allocation3], 1
    %s3723 = scalar_lea.sflag [#allocation3], 1
    %3724 = vsyncpa %s3723, 1
    %3725 = vsyncpa [#allocation6], 1
    %s3726 = scalar_lea.sflag [#allocation6], 1
    %3727 = vsyncpa %s3726, 1
    %3728 = vsyncpa [#allocation9], 1
    %s3729 = scalar_lea.sflag [#allocation9], 1
    %3730 = vsyncpa %s3729, 1
    %3731 = vsyncpa [#allocation4], 1
    %s3732 = scalar_lea.sflag [#allocation4], 1
    %3733 = vsyncpa %s3732, 1
    %3734 = vsyncpa [#allocation13], 1
    %s3735 = scalar_lea.sflag [#allocation13], 1
    %3736 = vsyncpa %s3735, 1
    %3737 = vsyncpa [#allocation16], 1
    %s3738 = scalar_lea.sflag [#allocation16], 1
    %3739 = vsyncpa %s3738, 1

</llo_original>
